<compile_context>
chip_gen: v7x
topology: tpu7x:2x2x1
jax: 0.10.0
libtpu: 0.0.40
codegen_flags: <defaults>
</compile_context>

<pallas_src>
import functools

import jax
import jax.numpy as jnp
from jax.experimental import pallas as pl
from jax.experimental.pallas import tpu as pltpu


def _round_up(x, m=128):
    return (x + m - 1) // m * m


def _layer_norm(x, gamma, beta, feat_mask, inv_n, eps=1e-5):
    """LayerNorm over the last axis, aware of zero-padded feature columns.

    x: (M, Lp) f32 whose padded columns are guaranteed zero.
    gamma/beta: (1, Lp) f32, zero in padded columns.
    feat_mask: (1, Lp) f32 {1,0}, or None when there is no padding.
    inv_n: 1 / real_feature_count (static python float).
    """
    mean = jnp.sum(x, axis=-1, keepdims=True) * inv_n
    xc = x - mean
    if feat_mask is not None:
        xc = xc * feat_mask
    var = jnp.sum(xc * xc, axis=-1, keepdims=True) * inv_n
    inv = jax.lax.rsqrt(var + eps)
    return xc * inv * gamma + beta


def transformer_kernel(
    latent_ref, data_ref,
    wq_ref, bq_ref, wkv_ref, bkv_ref,
    wo_ref, bo_ref, g1_ref, be1_ref,
    w1_ref, b1_ref, w2_ref, b2_ref, g2_ref, be2_ref,
    out_ref,
    *, num_heads, head_dim, head_dim_p, latent_dim, nk_real, hidden_chunk,
):
    bf16 = jnp.bfloat16
    Bb, Nq, Lp = latent_ref.shape
    _, Nkp, Dp = data_ref.shape
    m_rows = Bb * Nq
    inner_p = num_heads * head_dim_p
    scale = head_dim ** (-0.5)

    latent = latent_ref[...].reshape(m_rows, Lp)          # f32 (residual path)
    lat_bf = latent.astype(bf16)
    dat_bf = data_ref[...].reshape(Bb * Nkp, Dp)          # already bf16

    # ---- projections: bf16 MXU inputs, f32 accumulation. K and V are fused
    # into a single 2*inner_p-wide matmul (one MXU push, N fills the 2x256
    # MXU on v6e/v7x), then split at a 128-aligned lane boundary. ----
    q = jnp.dot(lat_bf, wq_ref[...], preferred_element_type=jnp.float32) + bq_ref[...]
    kv = jnp.dot(dat_bf, wkv_ref[...], preferred_element_type=jnp.float32) + bkv_ref[...]
    k = kv[:, :inner_p]
    v = kv[:, inner_p:]

    q3 = q.reshape(Bb, Nq, inner_p).astype(bf16)
    k3 = k.reshape(Bb, Nkp, inner_p).astype(bf16)
    v3 = v.reshape(Bb, Nkp, inner_p).astype(bf16)

    # Additive key mask for padded Nk columns (padded key rows are bias-only).
    if Nkp > nk_real:
        kcol = jax.lax.broadcasted_iota(jnp.int32, (1, 1, Nkp), 2)
        key_bias = jnp.where(kcol < nk_real, 0.0, -1e30).astype(jnp.float32)
    else:
        key_bias = None

    # Heads occupy contiguous, 128-aligned lane chunks (head-major padded
    # layout built by the wrapper), so every per-head slice is a
    # lane-tile-aligned view and every per-head MXU push contracts a full
    # K = head_dim_p.  With num_heads == 1 this is a single straight-line
    # batched dot_general (no loop).  The output projection is fused per
    # head (sum_h ctx_h @ wo[rows of h]) so no lane-axis concatenate exists.
    proj = None
    for h in range(num_heads):
        lo, hi = h * head_dim_p, (h + 1) * head_dim_p
        qh = q3[:, :, lo:hi]
        kh = k3[:, :, lo:hi]
        vh = v3[:, :, lo:hi]
        logits = jax.lax.dot_general(
            qh, kh, (((2,), (2,)), ((0,), (0,))),
            preferred_element_type=jnp.float32) * scale
        if key_bias is not None:
            logits = logits + key_bias
        logits = logits - jnp.max(logits, axis=-1, keepdims=True)
        e = jnp.exp(logits)
        att = e * pl.reciprocal(jnp.sum(e, axis=-1, keepdims=True), approx=True)
        ctx = jax.lax.dot_general(
            att.astype(bf16), vh, (((2,), (1,)), ((0,), (0,))),
            preferred_element_type=jnp.float32)            # (Bb, Nq, head_dim_p)
        ctx2 = ctx.reshape(m_rows, head_dim_p).astype(bf16)
        part = jnp.dot(ctx2, wo_ref[lo:hi, :], preferred_element_type=jnp.float32)
        proj = part if proj is None else proj + part
    proj = proj + bo_ref[...]

    # Padding-aware LayerNorm setup (padded feature columns are exactly zero
    # by construction of the padded weights/biases).
    if Lp > latent_dim:
        col = jax.lax.broadcasted_iota(jnp.int32, (1, Lp), 1)
        feat_mask = (col < latent_dim).astype(jnp.float32)
    else:
        feat_mask = None
    inv_n = 1.0 / float(latent_dim)

    # ---- residual + norm1 ----
    x = _layer_norm(proj + latent, g1_ref[...], be1_ref[...], feat_mask, inv_n)
    x_bf = x.astype(bf16)

    # ---- MLP (hidden dim chunked to bound the live h1 slab) + residual ----
    Hp = w1_ref.shape[1]
    h2 = None
    for c0 in range(0, Hp, hidden_chunk):
        c1 = min(c0 + hidden_chunk, Hp)
        h1c = jnp.dot(x_bf, w1_ref[:, c0:c1],
                      preferred_element_type=jnp.float32) + b1_ref[:, c0:c1]
        h1c = jnp.maximum(h1c, 0.0).astype(bf16)
        part = jnp.dot(h1c, w2_ref[c0:c1, :], preferred_element_type=jnp.float32)
        h2 = part if h2 is None else h2 + part
    h2 = h2 + b2_ref[...]

    y = _layer_norm(h2 + x, g2_ref[...], be2_ref[...], feat_mask, inv_n)
    out_ref[...] = y.reshape(Bb, Nq, Lp).astype(out_ref.dtype)


def _pad_heads_cols(w, num_heads, head_dim, head_dim_p):
    """(fan_in, H*head_dim) -> (fan_in, H*head_dim_p), head-major 128-aligned."""
    if head_dim_p == head_dim:
        return w
    fan_in = w.shape[0]
    w = w.reshape(fan_in, num_heads, head_dim)
    w = jnp.pad(w, ((0, 0), (0, 0), (0, head_dim_p - head_dim)))
    return w.reshape(fan_in, num_heads * head_dim_p)


def _pad_heads_rows(w, num_heads, head_dim, head_dim_p):
    """(H*head_dim, fan_out) -> (H*head_dim_p, fan_out), head-major 128-aligned."""
    if head_dim_p == head_dim:
        return w
    fan_out = w.shape[1]
    w = w.reshape(num_heads, head_dim, fan_out)
    w = jnp.pad(w, ((0, 0), (0, head_dim_p - head_dim), (0, 0)))
    return w.reshape(num_heads * head_dim_p, fan_out)


def transformer_forward(latent, data, params, *, num_heads, head_dim,
                        block_b=None):
    B, Nq, L = latent.shape
    _, Nk, D = data.shape
    hidden = params["w1"].shape[1]

    f32, bf16 = jnp.float32, jnp.bfloat16

    # Lane-dense padding of feature axes and the key-sequence axis.
    Lp, Dp, Hp = _round_up(L), _round_up(D), _round_up(hidden)
    hd_p = _round_up(head_dim)
    inner_p = num_heads * hd_p
    Nk_p = _round_up(Nk)

    def pad_to(a, shape):
        cfg = [(0, t - s) for s, t in zip(a.shape, shape)]
        return jnp.pad(a, cfg) if any(p for _, p in cfg) else a

    latent_p = pad_to(latent.astype(f32), (B, Nq, Lp))
    # data only feeds bf16 matmuls -> cast at the wrapper (half the DMA bytes).
    data_p = pad_to(data, (B, Nk_p, Dp)).astype(bf16)

    # Head-major, 128-aligned per-head weight layout; K|V fused along columns.
    wq = pad_to(_pad_heads_cols(params["wq"], num_heads, head_dim, hd_p), (Lp, inner_p))
    bq = _pad_heads_cols(params["bq"], num_heads, head_dim, hd_p)
    wk = pad_to(_pad_heads_cols(params["wk"], num_heads, head_dim, hd_p), (Dp, inner_p))
    bk = _pad_heads_cols(params["bk"], num_heads, head_dim, hd_p)
    wv = pad_to(_pad_heads_cols(params["wv"], num_heads, head_dim, hd_p), (Dp, inner_p))
    bv = _pad_heads_cols(params["bv"], num_heads, head_dim, hd_p)
    wkv = jnp.concatenate([wk, wv], axis=1)
    bkv = jnp.concatenate([bk, bv], axis=1)
    wo = pad_to(_pad_heads_rows(params["wo"], num_heads, head_dim, hd_p), (inner_p, Lp))

    weight_args = (
        wq.astype(bf16), bq.astype(f32),
        wkv.astype(bf16), bkv.astype(f32),
        wo.astype(bf16), pad_to(params["bo"], (1, Lp)).astype(f32),
        pad_to(params["g1"], (1, Lp)).astype(f32),
        pad_to(params["be1"], (1, Lp)).astype(f32),
        pad_to(params["w1"], (Lp, Hp)).astype(bf16),
        pad_to(params["b1"], (1, Hp)).astype(f32),
        pad_to(params["w2"], (Hp, Lp)).astype(bf16),
        pad_to(params["b2"], (1, Lp)).astype(f32),
        pad_to(params["g2"], (1, Lp)).astype(f32),
        pad_to(params["be2"], (1, Lp)).astype(f32),
    )

    # Batch block: fill the MXU M first (target >=256 rows/step where the
    # batch allows), keep multiple grid steps only when the fill target is
    # still met, and collapse small problems to a single step.
    if block_b is None:
        divisors = [d for d in range(1, B + 1) if B % d == 0]
        target_rows, max_rows = 256, 1024
        cands = [d for d in divisors if target_rows <= d * Nq <= max_rows]
        if cands:
            block_b = min(cands)          # most grid steps meeting the target
        else:
            fit = [d for d in divisors if d * Nq <= max_rows]
            block_b = max(fit) if fit else 1
    grid_b = B // block_b

    # Per-generation VMEM budget (~85% of capacity, capped).
    try:
        info = pltpu.get_tpu_info()
        vmem_cap = int(getattr(info, "vmem_capacity_bytes", 64 * 1024 * 1024))
    except Exception:
        vmem_cap = 64 * 1024 * 1024
    vmem_limit = min(int(vmem_cap * 0.85), 112 * 1024 * 1024)

    kernel = functools.partial(
        transformer_kernel,
        num_heads=num_heads, head_dim=head_dim, head_dim_p=hd_p,
        latent_dim=L, nk_real=Nk, hidden_chunk=512)

    # Advisory cost estimate so XLA can schedule/overlap around the call.
    m = B * Nq
    flops = 2 * (
        m * Lp * inner_p                               # Q projection
        + B * Nk_p * Dp * (2 * inner_p)                # fused K/V projection
        + 2 * B * num_heads * Nq * Nk_p * hd_p         # QK^T and att@V
        + m * inner_p * Lp                             # output projection
        + m * Lp * Hp + m * Hp * Lp)                   # MLP
    bytes_accessed = int(
        latent_p.size * latent_p.dtype.itemsize
        + data_p.size * data_p.dtype.itemsize
        + B * Nq * Lp * 4
        + sum(int(w.size) * w.dtype.itemsize for w in weight_args))
    cost = pl.CostEstimate(flops=int(flops),
                           transcendentals=int(B * num_heads * Nq * Nk_p),
                           bytes_accessed=bytes_accessed)

    def call(single_buffer_weights):
        in_specs = [
            pl.BlockSpec((block_b, Nq, Lp), lambda b: (b, 0, 0)),
            pl.BlockSpec((block_b, Nk_p, Dp), lambda b: (b, 0, 0)),
        ]
        for w in weight_args:
            if single_buffer_weights:
                # Grid-invariant block -> no need to double-buffer in VMEM.
                spec = pl.BlockSpec(w.shape, lambda b: (0, 0),
                                    pipeline_mode=pl.Buffered(1))
            else:
                spec = pl.BlockSpec(w.shape, lambda b: (0, 0))
            in_specs.append(spec)

        return pl.pallas_call(
            kernel,
            out_shape=jax.ShapeDtypeStruct((B, Nq, Lp), latent.dtype),
            grid_spec=pltpu.PrefetchScalarGridSpec(
                num_scalar_prefetch=0,
                grid=(grid_b,),
                in_specs=in_specs,
                out_specs=pl.BlockSpec((block_b, Nq, Lp), lambda b: (b, 0, 0)),
            ),
            compiler_params=pltpu.CompilerParams(
                dimension_semantics=("parallel",),
                vmem_limit_bytes=vmem_limit,
            ),
            cost_estimate=cost,
        )(latent_p, data_p, *weight_args)

    try:
        out_p = call(True)
    except Exception:
        # pl.Buffered(1) not supported by this jax build; fall back to the
        # default (double-buffered) weight pipeline.
        out_p = call(False)

    return out_p[..., :L]


def init_params(key, latent_dim, data_dim, num_heads, head_dim, mult):
    inner = num_heads * head_dim
    hidden = latent_dim * mult
    ks = jax.random.split(key, 8)
    s = 0.02

    def lin(k, fan_in, fan_out):
        kw, kb = jax.random.split(k)
        w = jax.random.normal(kw, (fan_in, fan_out), jnp.float32) * s
        b = jax.random.normal(kb, (1, fan_out), jnp.float32) * s
        return w, b

    wq, bq = lin(ks[0], latent_dim, inner)
    wk, bk = lin(ks[1], data_dim, inner)
    wv, bv = lin(ks[2], data_dim, inner)
    wo, bo = lin(ks[3], inner, latent_dim)
    w1, b1 = lin(ks[4], latent_dim, hidden)
    w2, b2 = lin(ks[5], hidden, latent_dim)
    g1 = jnp.ones((1, latent_dim), jnp.float32)
    be1 = jnp.zeros((1, latent_dim), jnp.float32)
    g2 = jnp.ones((1, latent_dim), jnp.float32)
    be2 = jnp.zeros((1, latent_dim), jnp.float32)
    return dict(wq=wq, bq=bq, wk=wk, bk=bk, wv=wv, bv=bv, wo=wo, bo=bo,
                g1=g1, be1=be1, w1=w1, b1=b1, w2=w2, b2=b2, g2=g2, be2=be2)


def reference_forward(latent, data, p, *, num_heads, head_dim):
    # Pure-JAX f32 reference for sanity checking.
    scale = head_dim ** (-0.5)
    B, Nq, L = latent.shape
    q = latent @ p["wq"] + p["bq"]
    k = data @ p["wk"] + p["bk"]
    v = data @ p["wv"] + p["bv"]

    def split(t):
        b, n, _ = t.shape
        return t.reshape(b, n, num_heads, head_dim).transpose(0, 2, 1, 3)

    qh, kh, vh = split(q), split(k), split(v)
    logits = jnp.einsum("bhik,bhjk->bhij", qh, kh) * scale
    att = jax.nn.softmax(logits, axis=-1)
    o = jnp.einsum("bhij,bhjd->bhid", att, vh)
    o = o.transpose(0, 2, 1, 3).reshape(B, Nq, num_heads * head_dim)
    o = o @ p["wo"] + p["bo"]
    x = o + latent

    def ln(x, g, b, eps=1e-5):
        m = x.mean(-1, keepdims=True)
        var = ((x - m) ** 2).mean(-1, keepdims=True)
        return (x - m) / jnp.sqrt(var + eps) * g + b

    x = ln(x, p["g1"], p["be1"])
    h = jnp.maximum(x @ p["w1"] + p["b1"], 0.0)
    y = h @ p["w2"] + p["b2"] + x
    return ln(y, p["g2"], p["be2"])


if __name__ == "__main__":
    B, Nq, Nk = 2, 8, 16
    latent_dim, data_dim = 32, 16
    num_heads, head_dim, mult = 1, 32, 4

    key = jax.random.PRNGKey(0)
    k1, k2, k3 = jax.random.split(key, 3)
    latent = jax.random.normal(k1, (B, Nq, latent_dim), jnp.float32)
    data = jax.random.normal(k2, (B, Nk, data_dim), jnp.float32)
    params = init_params(k3, latent_dim, data_dim, num_heads, head_dim, mult)

    out = transformer_forward(latent, data, params,
                              num_heads=num_heads, head_dim=head_dim)
    out = jax.block_until_ready(out)

    ref = reference_forward(latent, data, params,
                            num_heads=num_heads, head_dim=head_dim)
    assert out.shape == (B, Nq, latent_dim)
    # bf16 MXU inputs + approx reciprocal loosen the tolerance vs. pure f32.
    assert jnp.allclose(out, ref, atol=2e-2, rtol=2e-2), (
        float(jnp.max(jnp.abs(out - ref))))

    print("KERNEL_OK")
</pallas_src>

<mosaic_0001>
module attributes {stable_mosaic.version = 11 : i64} {
  func.func @transformer_kernel(%arg0: i32, %arg1: memref<2x8x128xf32, #tpu.memory_space<vmem>>, %arg2: memref<2x128x128xbf16, #tpu.memory_space<vmem>>, %arg3: memref<128x128xbf16, #tpu.memory_space<vmem>>, %arg4: memref<1x128xf32, #tpu.memory_space<vmem>>, %arg5: memref<128x256xbf16, #tpu.memory_space<vmem>>, %arg6: memref<1x256xf32, #tpu.memory_space<vmem>>, %arg7: memref<128x128xbf16, #tpu.memory_space<vmem>>, %arg8: memref<1x128xf32, #tpu.memory_space<vmem>>, %arg9: memref<1x128xf32, #tpu.memory_space<vmem>>, %arg10: memref<1x128xf32, #tpu.memory_space<vmem>>, %arg11: memref<128x128xbf16, #tpu.memory_space<vmem>>, %arg12: memref<1x128xf32, #tpu.memory_space<vmem>>, %arg13: memref<128x128xbf16, #tpu.memory_space<vmem>>, %arg14: memref<1x128xf32, #tpu.memory_space<vmem>>, %arg15: memref<1x128xf32, #tpu.memory_space<vmem>>, %arg16: memref<1x128xf32, #tpu.memory_space<vmem>>, %arg17: memref<2x8x128xf32, #tpu.memory_space<vmem>>) attributes {dimension_semantics = [#tpu.dimension_semantics<parallel>], iteration_bounds = array<i64: 1>, scalar_prefetch = 0 : i64, scratch_operands = 0 : i64, tpu.core_type = #tpu.core_type<tc>, window_params = [{transform_indices = @transform_0, window_bounds = array<i64: 2, 8, 128>}, {transform_indices = @transform_1, window_bounds = array<i64: 2, 128, 128>}, {pipeline_mode = #tpu.pipeline_mode<synchronous>, transform_indices = @transform_2, window_bounds = array<i64: 128, 128>}, {pipeline_mode = #tpu.pipeline_mode<synchronous>, transform_indices = @transform_3, window_bounds = array<i64: 1, 128>}, {pipeline_mode = #tpu.pipeline_mode<synchronous>, transform_indices = @transform_4, window_bounds = array<i64: 128, 256>}, {pipeline_mode = #tpu.pipeline_mode<synchronous>, transform_indices = @transform_5, window_bounds = array<i64: 1, 256>}, {pipeline_mode = #tpu.pipeline_mode<synchronous>, transform_indices = @transform_6, window_bounds = array<i64: 128, 128>}, {pipeline_mode = #tpu.pipeline_mode<synchronous>, transform_indices = @transform_7, window_bounds = array<i64: 1, 128>}, {pipeline_mode = #tpu.pipeline_mode<synchronous>, transform_indices = @transform_8, window_bounds = array<i64: 1, 128>}, {pipeline_mode = #tpu.pipeline_mode<synchronous>, transform_indices = @transform_9, window_bounds = array<i64: 1, 128>}, {pipeline_mode = #tpu.pipeline_mode<synchronous>, transform_indices = @transform_10, window_bounds = array<i64: 128, 128>}, {pipeline_mode = #tpu.pipeline_mode<synchronous>, transform_indices = @transform_11, window_bounds = array<i64: 1, 128>}, {pipeline_mode = #tpu.pipeline_mode<synchronous>, transform_indices = @transform_12, window_bounds = array<i64: 128, 128>}, {pipeline_mode = #tpu.pipeline_mode<synchronous>, transform_indices = @transform_13, window_bounds = array<i64: 1, 128>}, {pipeline_mode = #tpu.pipeline_mode<synchronous>, transform_indices = @transform_14, window_bounds = array<i64: 1, 128>}, {pipeline_mode = #tpu.pipeline_mode<synchronous>, transform_indices = @transform_15, window_bounds = array<i64: 1, 128>}, {transform_indices = @transform_16, window_bounds = array<i64: 2, 8, 128>}]} {
    %c0 = arith.constant 0 : index
    %c0_0 = arith.constant 0 : index
    %c0_1 = arith.constant 0 : index
    %0 = vector.load %arg1[%c0, %c0_0, %c0_1] : memref<2x8x128xf32, #tpu.memory_space<vmem>>, vector<2x8x128xf32>
    %1 = vector.shape_cast %0 : vector<2x8x128xf32> to vector<16x128xf32>
    %2 = arith.truncf %1 : vector<16x128xf32> to vector<16x128xbf16>
    %c0_2 = arith.constant 0 : index
    %c0_3 = arith.constant 0 : index
    %c0_4 = arith.constant 0 : index
    %3 = vector.load %arg2[%c0_2, %c0_3, %c0_4] : memref<2x128x128xbf16, #tpu.memory_space<vmem>>, vector<2x128x128xbf16>
    %4 = vector.shape_cast %3 : vector<2x128x128xbf16> to vector<256x128xbf16>
    %c0_5 = arith.constant 0 : index
    %c0_6 = arith.constant 0 : index
    %5 = vector.load %arg3[%c0_5, %c0_6] : memref<128x128xbf16, #tpu.memory_space<vmem>>, vector<128x128xbf16>
    %cst = arith.constant dense<0.000000e+00> : vector<16x128xf32>
    %6 = tpu.matmul %2, %5, %cst {dimension_numbers = #tpu.dot_dimension_numbers<[1], [0], [0], [1], [0, 0, 1, 1], [], []>} : vector<16x128xbf16>, vector<128x128xbf16>, vector<16x128xf32> -> vector<16x128xf32>
    %c0_7 = arith.constant 0 : index
    %c0_8 = arith.constant 0 : index
    %7 = vector.load %arg4[%c0_7, %c0_8] : memref<1x128xf32, #tpu.memory_space<vmem>>, vector<1x128xf32>
    %8 = vector.broadcast %7 : vector<1x128xf32> to vector<16x128xf32>
    %9 = arith.addf %6, %8 : vector<16x128xf32>
    %c0_9 = arith.constant 0 : index
    %c0_10 = arith.constant 0 : index
    %10 = vector.load %arg5[%c0_9, %c0_10] : memref<128x256xbf16, #tpu.memory_space<vmem>>, vector<128x256xbf16>
    %cst_11 = arith.constant dense<0.000000e+00> : vector<256x256xf32>
    %11 = tpu.matmul %4, %10, %cst_11 {dimension_numbers = #tpu.dot_dimension_numbers<[1], [0], [0], [1], [0, 0, 1, 1], [], []>} : vector<256x128xbf16>, vector<128x256xbf16>, vector<256x256xf32> -> vector<256x256xf32>
    %c0_12 = arith.constant 0 : index
    %c0_13 = arith.constant 0 : index
    %12 = vector.load %arg6[%c0_12, %c0_13] : memref<1x256xf32, #tpu.memory_space<vmem>>, vector<1x256xf32>
    %13 = vector.broadcast %12 : vector<1x256xf32> to vector<256x256xf32>
    %14 = arith.addf %11, %13 : vector<256x256xf32>
    %15 = vector.extract_strided_slice %14 {offsets = [0, 0], sizes = [256, 128], strides = [1, 1]} : vector<256x256xf32> to vector<256x128xf32>
    %16 = vector.extract_strided_slice %14 {offsets = [0, 128], sizes = [256, 128], strides = [1, 1]} : vector<256x256xf32> to vector<256x128xf32>
    %17 = vector.shape_cast %9 : vector<16x128xf32> to vector<2x8x128xf32>
    %18 = arith.truncf %17 : vector<2x8x128xf32> to vector<2x8x128xbf16>
    %19 = vector.shape_cast %15 : vector<256x128xf32> to vector<2x128x128xf32>
    %20 = arith.truncf %19 : vector<2x128x128xf32> to vector<2x128x128xbf16>
    %21 = vector.shape_cast %16 : vector<256x128xf32> to vector<2x128x128xf32>
    %22 = arith.truncf %21 : vector<2x128x128xf32> to vector<2x128x128xbf16>
    %23 = tpu.iota {dimensions = array<i32: 2>} : vector<1x1x128xi32>
    %c16_i32 = arith.constant 16 : i32
    %24 = vector.broadcast %c16_i32 : i32 to vector<1x1x128xi32>
    %25 = arith.cmpi slt, %23, %24 : vector<1x1x128xi32>
    %cst_14 = arith.constant 0.000000e+00 : f32
    %cst_15 = arith.constant -1.000000e+30 : f32
    %26 = vector.broadcast %cst_14 : f32 to vector<1x1x128xf32>
    %27 = vector.broadcast %cst_15 : f32 to vector<1x1x128xf32>
    %28 = arith.select %25, %26, %27 : vector<1x1x128xi1>, vector<1x1x128xf32>
    %cst_16 = arith.constant dense<0.000000e+00> : vector<2x8x128xf32>
    %29 = tpu.matmul %18, %20, %cst_16 {dimension_numbers = #tpu.dot_dimension_numbers<[2], [2], [1], [1], [0, 0, 0, 1, 1, 1], [0], [0]>} : vector<2x8x128xbf16>, vector<2x128x128xbf16>, vector<2x8x128xf32> -> vector<2x8x128xf32>
    %cst_17 = arith.constant 0.176776692 : f32
    %30 = vector.broadcast %cst_17 : f32 to vector<2x8x128xf32>
    %31 = arith.mulf %29, %30 : vector<2x8x128xf32>
    %32 = vector.broadcast %28 : vector<1x1x128xf32> to vector<2x8x128xf32>
    %33 = arith.addf %31, %32 : vector<2x8x128xf32>
    %cst_18 = arith.constant dense<0xFF800000> : vector<2x8xf32>
    %34 = vector.multi_reduction <maximumf>, %33, %cst_18 [2] : vector<2x8x128xf32> to vector<2x8xf32>
    %35 = vector.shape_cast %34 : vector<2x8xf32> to vector<2x8x1xf32>
    %36 = vector.broadcast %35 : vector<2x8x1xf32> to vector<2x8x128xf32>
    %37 = arith.subf %33, %36 : vector<2x8x128xf32>
    %38 = math.exp %37 : vector<2x8x128xf32>
    %cst_19 = arith.constant dense<0.000000e+00> : vector<2x8xf32>
    %39 = vector.multi_reduction <add>, %38, %cst_19 [2] : vector<2x8x128xf32> to vector<2x8xf32>
    %40 = vector.shape_cast %39 : vector<2x8xf32> to vector<2x8x1xf32>
    %41 = tpu.reciprocal %40 {approx = true} : vector<2x8x1xf32> -> vector<2x8x1xf32>
    %42 = vector.broadcast %41 : vector<2x8x1xf32> to vector<2x8x128xf32>
    %43 = arith.mulf %38, %42 : vector<2x8x128xf32>
    %44 = arith.truncf %43 : vector<2x8x128xf32> to vector<2x8x128xbf16>
    %cst_20 = arith.constant dense<0.000000e+00> : vector<2x8x128xf32>
    %45 = tpu.matmul %44, %22, %cst_20 {dimension_numbers = #tpu.dot_dimension_numbers<[2], [1], [1], [2], [0, 0, 0, 1, 1, 2], [0], [0]>} : vector<2x8x128xbf16>, vector<2x128x128xbf16>, vector<2x8x128xf32> -> vector<2x8x128xf32>
    %46 = vector.shape_cast %45 : vector<2x8x128xf32> to vector<16x128xf32>
    %47 = arith.truncf %46 : vector<16x128xf32> to vector<16x128xbf16>
    %c0_21 = arith.constant 0 : index
    %c0_22 = arith.constant 0 : index
    %48 = vector.load %arg7[%c0_21, %c0_22] : memref<128x128xbf16, #tpu.memory_space<vmem>>, vector<128x128xbf16>
    %cst_23 = arith.constant dense<0.000000e+00> : vector<16x128xf32>
    %49 = tpu.matmul %47, %48, %cst_23 {dimension_numbers = #tpu.dot_dimension_numbers<[1], [0], [0], [1], [0, 0, 1, 1], [], []>} : vector<16x128xbf16>, vector<128x128xbf16>, vector<16x128xf32> -> vector<16x128xf32>
    %c0_24 = arith.constant 0 : index
    %c0_25 = arith.constant 0 : index
    %50 = vector.load %arg8[%c0_24, %c0_25] : memref<1x128xf32, #tpu.memory_space<vmem>>, vector<1x128xf32>
    %51 = vector.broadcast %50 : vector<1x128xf32> to vector<16x128xf32>
    %52 = arith.addf %49, %51 : vector<16x128xf32>
    %53 = tpu.iota {dimensions = array<i32: 1>} : vector<1x128xi32>
    %c32_i32 = arith.constant 32 : i32
    %54 = vector.broadcast %c32_i32 : i32 to vector<1x128xi32>
    %55 = arith.cmpi slt, %53, %54 : vector<1x128xi32>
    %56 = arith.extui %55 : vector<1x128xi1> to vector<1x128xi32>
    %57 = arith.sitofp %56 : vector<1x128xi32> to vector<1x128xf32>
    %58 = arith.addf %52, %1 : vector<16x128xf32>
    %c0_26 = arith.constant 0 : index
    %c0_27 = arith.constant 0 : index
    %59 = vector.load %arg9[%c0_26, %c0_27] : memref<1x128xf32, #tpu.memory_space<vmem>>, vector<1x128xf32>
    %c0_28 = arith.constant 0 : index
    %c0_29 = arith.constant 0 : index
    %60 = vector.load %arg10[%c0_28, %c0_29] : memref<1x128xf32, #tpu.memory_space<vmem>>, vector<1x128xf32>
    %cst_30 = arith.constant dense<0.000000e+00> : vector<16xf32>
    %61 = vector.multi_reduction <add>, %58, %cst_30 [1] : vector<16x128xf32> to vector<16xf32>
    %62 = vector.shape_cast %61 : vector<16xf32> to vector<16x1xf32>
    %cst_31 = arith.constant 3.125000e-02 : f32
    %63 = vector.broadcast %cst_31 : f32 to vector<16x1xf32>
    %64 = arith.mulf %62, %63 : vector<16x1xf32>
    %65 = vector.broadcast %64 : vector<16x1xf32> to vector<16x128xf32>
    %66 = arith.subf %58, %65 : vector<16x128xf32>
    %67 = vector.broadcast %57 : vector<1x128xf32> to vector<16x128xf32>
    %68 = arith.mulf %66, %67 : vector<16x128xf32>
    %69 = arith.mulf %68, %68 : vector<16x128xf32>
    %cst_32 = arith.constant dense<0.000000e+00> : vector<16xf32>
    %70 = vector.multi_reduction <add>, %69, %cst_32 [1] : vector<16x128xf32> to vector<16xf32>
    %71 = vector.shape_cast %70 : vector<16xf32> to vector<16x1xf32>
    %cst_33 = arith.constant 3.125000e-02 : f32
    %72 = vector.broadcast %cst_33 : f32 to vector<16x1xf32>
    %73 = arith.mulf %71, %72 : vector<16x1xf32>
    %cst_34 = arith.constant 9.99999974E-6 : f32
    %74 = vector.broadcast %cst_34 : f32 to vector<16x1xf32>
    %75 = arith.addf %73, %74 : vector<16x1xf32>
    %76 = math.rsqrt %75 : vector<16x1xf32>
    %77 = vector.broadcast %76 : vector<16x1xf32> to vector<16x128xf32>
    %78 = arith.mulf %68, %77 : vector<16x128xf32>
    %79 = vector.broadcast %59 : vector<1x128xf32> to vector<16x128xf32>
    %80 = arith.mulf %78, %79 : vector<16x128xf32>
    %81 = vector.broadcast %60 : vector<1x128xf32> to vector<16x128xf32>
    %82 = arith.addf %80, %81 : vector<16x128xf32>
    %83 = arith.truncf %82 : vector<16x128xf32> to vector<16x128xbf16>
    %c0_35 = arith.constant 0 : index
    %c0_36 = arith.constant 0 : index
    %84 = vector.load %arg11[%c0_35, %c0_36] : memref<128x128xbf16, #tpu.memory_space<vmem>>, vector<128x128xbf16>
    %cst_37 = arith.constant dense<0.000000e+00> : vector<16x128xf32>
    %85 = tpu.matmul %83, %84, %cst_37 {dimension_numbers = #tpu.dot_dimension_numbers<[1], [0], [0], [1], [0, 0, 1, 1], [], []>} : vector<16x128xbf16>, vector<128x128xbf16>, vector<16x128xf32> -> vector<16x128xf32>
    %c0_38 = arith.constant 0 : index
    %c0_39 = arith.constant 0 : index
    %86 = vector.load %arg12[%c0_38, %c0_39] : memref<1x128xf32, #tpu.memory_space<vmem>>, vector<1x128xf32>
    %87 = vector.broadcast %86 : vector<1x128xf32> to vector<16x128xf32>
    %88 = arith.addf %85, %87 : vector<16x128xf32>
    %cst_40 = arith.constant 0.000000e+00 : f32
    %89 = vector.broadcast %cst_40 : f32 to vector<16x128xf32>
    %90 = arith.maximumf %88, %89 : vector<16x128xf32>
    %91 = arith.truncf %90 : vector<16x128xf32> to vector<16x128xbf16>
    %c0_41 = arith.constant 0 : index
    %c0_42 = arith.constant 0 : index
    %92 = vector.load %arg13[%c0_41, %c0_42] : memref<128x128xbf16, #tpu.memory_space<vmem>>, vector<128x128xbf16>
    %cst_43 = arith.constant dense<0.000000e+00> : vector<16x128xf32>
    %93 = tpu.matmul %91, %92, %cst_43 {dimension_numbers = #tpu.dot_dimension_numbers<[1], [0], [0], [1], [0, 0, 1, 1], [], []>} : vector<16x128xbf16>, vector<128x128xbf16>, vector<16x128xf32> -> vector<16x128xf32>
    %c0_44 = arith.constant 0 : index
    %c0_45 = arith.constant 0 : index
    %94 = vector.load %arg14[%c0_44, %c0_45] : memref<1x128xf32, #tpu.memory_space<vmem>>, vector<1x128xf32>
    %95 = vector.broadcast %94 : vector<1x128xf32> to vector<16x128xf32>
    %96 = arith.addf %93, %95 : vector<16x128xf32>
    %97 = arith.addf %96, %82 : vector<16x128xf32>
    %c0_46 = arith.constant 0 : index
    %c0_47 = arith.constant 0 : index
    %98 = vector.load %arg15[%c0_46, %c0_47] : memref<1x128xf32, #tpu.memory_space<vmem>>, vector<1x128xf32>
    %c0_48 = arith.constant 0 : index
    %c0_49 = arith.constant 0 : index
    %99 = vector.load %arg16[%c0_48, %c0_49] : memref<1x128xf32, #tpu.memory_space<vmem>>, vector<1x128xf32>
    %cst_50 = arith.constant dense<0.000000e+00> : vector<16xf32>
    %100 = vector.multi_reduction <add>, %97, %cst_50 [1] : vector<16x128xf32> to vector<16xf32>
    %101 = vector.shape_cast %100 : vector<16xf32> to vector<16x1xf32>
    %cst_51 = arith.constant 3.125000e-02 : f32
    %102 = vector.broadcast %cst_51 : f32 to vector<16x1xf32>
    %103 = arith.mulf %101, %102 : vector<16x1xf32>
    %104 = vector.broadcast %103 : vector<16x1xf32> to vector<16x128xf32>
    %105 = arith.subf %97, %104 : vector<16x128xf32>
    %106 = vector.broadcast %57 : vector<1x128xf32> to vector<16x128xf32>
    %107 = arith.mulf %105, %106 : vector<16x128xf32>
    %108 = arith.mulf %107, %107 : vector<16x128xf32>
    %cst_52 = arith.constant dense<0.000000e+00> : vector<16xf32>
    %109 = vector.multi_reduction <add>, %108, %cst_52 [1] : vector<16x128xf32> to vector<16xf32>
    %110 = vector.shape_cast %109 : vector<16xf32> to vector<16x1xf32>
    %cst_53 = arith.constant 3.125000e-02 : f32
    %111 = vector.broadcast %cst_53 : f32 to vector<16x1xf32>
    %112 = arith.mulf %110, %111 : vector<16x1xf32>
    %cst_54 = arith.constant 9.99999974E-6 : f32
    %113 = vector.broadcast %cst_54 : f32 to vector<16x1xf32>
    %114 = arith.addf %112, %113 : vector<16x1xf32>
    %115 = math.rsqrt %114 : vector<16x1xf32>
    %116 = vector.broadcast %115 : vector<16x1xf32> to vector<16x128xf32>
    %117 = arith.mulf %107, %116 : vector<16x128xf32>
    %118 = vector.broadcast %98 : vector<1x128xf32> to vector<16x128xf32>
    %119 = arith.mulf %117, %118 : vector<16x128xf32>
    %120 = vector.broadcast %99 : vector<1x128xf32> to vector<16x128xf32>
    %121 = arith.addf %119, %120 : vector<16x128xf32>
    %122 = vector.shape_cast %121 : vector<16x128xf32> to vector<2x8x128xf32>
    %c0_55 = arith.constant 0 : index
    %c0_56 = arith.constant 0 : index
    %c0_57 = arith.constant 0 : index
    %123 = vector.load %arg17[%c0_55, %c0_56, %c0_57] : memref<2x8x128xf32, #tpu.memory_space<vmem>>, vector<2x8x128xf32>
    tpu.vector_store %arg17[%c0_55, %c0_56, %c0_57], %122 {strides = array<i32>} : memref<2x8x128xf32, #tpu.memory_space<vmem>>, vector<2x8x128xf32>,
    return
  }
  func.func @transform_0(%arg0: i32) -> (i32, i32, i32) {
    %c0_i32 = arith.constant 0 : i32
    %c0_i32_0 = arith.constant 0 : i32
    %c0_i32_1 = arith.constant 0 : i32
    return %arg0, %c0_i32, %c0_i32_0 : i32, i32, i32
  }
  func.func @transform_1(%arg0: i32) -> (i32, i32, i32) {
    %c0_i32 = arith.constant 0 : i32
    %c0_i32_0 = arith.constant 0 : i32
    %c0_i32_1 = arith.constant 0 : i32
    return %arg0, %c0_i32, %c0_i32_0 : i32, i32, i32
  }
  func.func @transform_2(%arg0: i32) -> (i32, i32) {
    %c0_i32 = arith.constant 0 : i32
    %c0_i32_0 = arith.constant 0 : i32
    %c0_i32_1 = arith.constant 0 : i32
    return %c0_i32, %c0_i32_0 : i32, i32
  }
  func.func @transform_3(%arg0: i32) -> (i32, i32) {
    %c0_i32 = arith.constant 0 : i32
    %c0_i32_0 = arith.constant 0 : i32
    %c0_i32_1 = arith.constant 0 : i32
    return %c0_i32, %c0_i32_0 : i32, i32
  }
  func.func @transform_4(%arg0: i32) -> (i32, i32) {
    %c0_i32 = arith.constant 0 : i32
    %c0_i32_0 = arith.constant 0 : i32
    %c0_i32_1 = arith.constant 0 : i32
    return %c0_i32, %c0_i32_0 : i32, i32
  }
  func.func @transform_5(%arg0: i32) -> (i32, i32) {
    %c0_i32 = arith.constant 0 : i32
    %c0_i32_0 = arith.constant 0 : i32
    %c0_i32_1 = arith.constant 0 : i32
    return %c0_i32, %c0_i32_0 : i32, i32
  }
  func.func @transform_6(%arg0: i32) -> (i32, i32) {
    %c0_i32 = arith.constant 0 : i32
    %c0_i32_0 = arith.constant 0 : i32
    %c0_i32_1 = arith.constant 0 : i32
    return %c0_i32, %c0_i32_0 : i32, i32
  }
  func.func @transform_7(%arg0: i32) -> (i32, i32) {
    %c0_i32 = arith.constant 0 : i32
    %c0_i32_0 = arith.constant 0 : i32
    %c0_i32_1 = arith.constant 0 : i32
    return %c0_i32, %c0_i32_0 : i32, i32
  }
  func.func @transform_8(%arg0: i32) -> (i32, i32) {
    %c0_i32 = arith.constant 0 : i32
    %c0_i32_0 = arith.constant 0 : i32
    %c0_i32_1 = arith.constant 0 : i32
    return %c0_i32, %c0_i32_0 : i32, i32
  }
  func.func @transform_9(%arg0: i32) -> (i32, i32) {
    %c0_i32 = arith.constant 0 : i32
    %c0_i32_0 = arith.constant 0 : i32
    %c0_i32_1 = arith.constant 0 : i32
    return %c0_i32, %c0_i32_0 : i32, i32
  }
  func.func @transform_10(%arg0: i32) -> (i32, i32) {
    %c0_i32 = arith.constant 0 : i32
    %c0_i32_0 = arith.constant 0 : i32
    %c0_i32_1 = arith.constant 0 : i32
    return %c0_i32, %c0_i32_0 : i32, i32
  }
  func.func @transform_11(%arg0: i32) -> (i32, i32) {
    %c0_i32 = arith.constant 0 : i32
    %c0_i32_0 = arith.constant 0 : i32
    %c0_i32_1 = arith.constant 0 : i32
    return %c0_i32, %c0_i32_0 : i32, i32
  }
  func.func @transform_12(%arg0: i32) -> (i32, i32) {
    %c0_i32 = arith.constant 0 : i32
    %c0_i32_0 = arith.constant 0 : i32
    %c0_i32_1 = arith.constant 0 : i32
    return %c0_i32, %c0_i32_0 : i32, i32
  }
  func.func @transform_13(%arg0: i32) -> (i32, i32) {
    %c0_i32 = arith.constant 0 : i32
    %c0_i32_0 = arith.constant 0 : i32
    %c0_i32_1 = arith.constant 0 : i32
    return %c0_i32, %c0_i32_0 : i32, i32
  }
  func.func @transform_14(%arg0: i32) -> (i32, i32) {
    %c0_i32 = arith.constant 0 : i32
    %c0_i32_0 = arith.constant 0 : i32
    %c0_i32_1 = arith.constant 0 : i32
    return %c0_i32, %c0_i32_0 : i32, i32
  }
  func.func @transform_15(%arg0: i32) -> (i32, i32) {
    %c0_i32 = arith.constant 0 : i32
    %c0_i32_0 = arith.constant 0 : i32
    %c0_i32_1 = arith.constant 0 : i32
    return %c0_i32, %c0_i32_0 : i32, i32
  }
  func.func @transform_16(%arg0: i32) -> (i32, i32, i32) {
    %c0_i32 = arith.constant 0 : i32
    %c0_i32_0 = arith.constant 0 : i32
    %c0_i32_1 = arith.constant 0 : i32
    return %arg0, %c0_i32, %c0_i32_0 : i32, i32, i32
  }
}

module attributes {stable_mosaic.version = 11 : i64} {
  func.func @transformer_kernel(%arg0: i32, %arg1: memref<2x8x128xf32, #tpu.memory_space<vmem>>, %arg2: memref<2x128x128xbf16, #tpu.memory_space<vmem>>, %arg3: memref<128x128xbf16, #tpu.memory_space<vmem>>, %arg4: memref<1x128xf32, #tpu.memory_space<vmem>>, %arg5: memref<128x256xbf16, #tpu.memory_space<vmem>>, %arg6: memref<1x256xf32, #tpu.memory_space<vmem>>, %arg7: memref<128x128xbf16, #tpu.memory_space<vmem>>, %arg8: memref<1x128xf32, #tpu.memory_space<vmem>>, %arg9: memref<1x128xf32, #tpu.memory_space<vmem>>, %arg10: memref<1x128xf32, #tpu.memory_space<vmem>>, %arg11: memref<128x128xbf16, #tpu.memory_space<vmem>>, %arg12: memref<1x128xf32, #tpu.memory_space<vmem>>, %arg13: memref<128x128xbf16, #tpu.memory_space<vmem>>, %arg14: memref<1x128xf32, #tpu.memory_space<vmem>>, %arg15: memref<1x128xf32, #tpu.memory_space<vmem>>, %arg16: memref<1x128xf32, #tpu.memory_space<vmem>>, %arg17: memref<2x8x128xf32, #tpu.memory_space<vmem>>) attributes {dimension_semantics = [#tpu.dimension_semantics<parallel>], iteration_bounds = array<i64: 1>, scalar_prefetch = 0 : i64, scratch_operands = 0 : i64, tpu.core_type = #tpu.core_type<tc>, window_params = [{transform_indices = @transform_0, window_bounds = array<i64: 2, 8, 128>}, {transform_indices = @transform_1, window_bounds = array<i64: 2, 128, 128>}, {pipeline_mode = #tpu.pipeline_mode<synchronous>, transform_indices = @transform_2, window_bounds = array<i64: 128, 128>}, {pipeline_mode = #tpu.pipeline_mode<synchronous>, transform_indices = @transform_3, window_bounds = array<i64: 1, 128>}, {pipeline_mode = #tpu.pipeline_mode<synchronous>, transform_indices = @transform_4, window_bounds = array<i64: 128, 256>}, {pipeline_mode = #tpu.pipeline_mode<synchronous>, transform_indices = @transform_5, window_bounds = array<i64: 1, 256>}, {pipeline_mode = #tpu.pipeline_mode<synchronous>, transform_indices = @transform_6, window_bounds = array<i64: 128, 128>}, {pipeline_mode = #tpu.pipeline_mode<synchronous>, transform_indices = @transform_7, window_bounds = array<i64: 1, 128>}, {pipeline_mode = #tpu.pipeline_mode<synchronous>, transform_indices = @transform_8, window_bounds = array<i64: 1, 128>}, {pipeline_mode = #tpu.pipeline_mode<synchronous>, transform_indices = @transform_9, window_bounds = array<i64: 1, 128>}, {pipeline_mode = #tpu.pipeline_mode<synchronous>, transform_indices = @transform_10, window_bounds = array<i64: 128, 128>}, {pipeline_mode = #tpu.pipeline_mode<synchronous>, transform_indices = @transform_11, window_bounds = array<i64: 1, 128>}, {pipeline_mode = #tpu.pipeline_mode<synchronous>, transform_indices = @transform_12, window_bounds = array<i64: 128, 128>}, {pipeline_mode = #tpu.pipeline_mode<synchronous>, transform_indices = @transform_13, window_bounds = array<i64: 1, 128>}, {pipeline_mode = #tpu.pipeline_mode<synchronous>, transform_indices = @transform_14, window_bounds = array<i64: 1, 128>}, {pipeline_mode = #tpu.pipeline_mode<synchronous>, transform_indices = @transform_15, window_bounds = array<i64: 1, 128>}, {transform_indices = @transform_16, window_bounds = array<i64: 2, 8, 128>}]} {
    %c0 = arith.constant 0 : index
    %c0_0 = arith.constant 0 : index
    %c0_1 = arith.constant 0 : index
    %0 = vector.load %arg1[%c0, %c0_0, %c0_1] : memref<2x8x128xf32, #tpu.memory_space<vmem>>, vector<2x8x128xf32>
    %1 = vector.shape_cast %0 : vector<2x8x128xf32> to vector<16x128xf32>
    %2 = arith.truncf %1 : vector<16x128xf32> to vector<16x128xbf16>
    %c0_2 = arith.constant 0 : index
    %c0_3 = arith.constant 0 : index
    %c0_4 = arith.constant 0 : index
    %3 = vector.load %arg2[%c0_2, %c0_3, %c0_4] : memref<2x128x128xbf16, #tpu.memory_space<vmem>>, vector<2x128x128xbf16>
    %4 = vector.shape_cast %3 : vector<2x128x128xbf16> to vector<256x128xbf16>
    %c0_5 = arith.constant 0 : index
    %c0_6 = arith.constant 0 : index
    %5 = vector.load %arg3[%c0_5, %c0_6] : memref<128x128xbf16, #tpu.memory_space<vmem>>, vector<128x128xbf16>
    %cst = arith.constant dense<0.000000e+00> : vector<16x128xf32>
    %6 = tpu.matmul %2, %5, %cst {dimension_numbers = #tpu.dot_dimension_numbers<[1], [0], [0], [1], [0, 0, 1, 1], [], []>} : vector<16x128xbf16>, vector<128x128xbf16>, vector<16x128xf32> -> vector<16x128xf32>
    %c0_7 = arith.constant 0 : index
    %c0_8 = arith.constant 0 : index
    %7 = vector.load %arg4[%c0_7, %c0_8] : memref<1x128xf32, #tpu.memory_space<vmem>>, vector<1x128xf32>
    %8 = vector.broadcast %7 : vector<1x128xf32> to vector<16x128xf32>
    %9 = arith.addf %6, %8 : vector<16x128xf32>
    %c0_9 = arith.constant 0 : index
    %c0_10 = arith.constant 0 : index
    %10 = vector.load %arg5[%c0_9, %c0_10] : memref<128x256xbf16, #tpu.memory_space<vmem>>, vector<128x256xbf16>
    %cst_11 = arith.constant dense<0.000000e+00> : vector<256x256xf32>
    %11 = tpu.matmul %4, %10, %cst_11 {dimension_numbers = #tpu.dot_dimension_numbers<[1], [0], [0], [1], [0, 0, 1, 1], [], []>} : vector<256x128xbf16>, vector<128x256xbf16>, vector<256x256xf32> -> vector<256x256xf32>
    %c0_12 = arith.constant 0 : index
    %c0_13 = arith.constant 0 : index
    %12 = vector.load %arg6[%c0_12, %c0_13] : memref<1x256xf32, #tpu.memory_space<vmem>>, vector<1x256xf32>
    %13 = vector.broadcast %12 : vector<1x256xf32> to vector<256x256xf32>
    %14 = arith.addf %11, %13 : vector<256x256xf32>
    %15 = vector.extract_strided_slice %14 {offsets = [0, 0], sizes = [256, 128], strides = [1, 1]} : vector<256x256xf32> to vector<256x128xf32>
    %16 = vector.extract_strided_slice %14 {offsets = [0, 128], sizes = [256, 128], strides = [1, 1]} : vector<256x256xf32> to vector<256x128xf32>
    %17 = vector.shape_cast %9 : vector<16x128xf32> to vector<2x8x128xf32>
    %18 = arith.truncf %17 : vector<2x8x128xf32> to vector<2x8x128xbf16>
    %19 = vector.shape_cast %15 : vector<256x128xf32> to vector<2x128x128xf32>
    %20 = arith.truncf %19 : vector<2x128x128xf32> to vector<2x128x128xbf16>
    %21 = vector.shape_cast %16 : vector<256x128xf32> to vector<2x128x128xf32>
    %22 = arith.truncf %21 : vector<2x128x128xf32> to vector<2x128x128xbf16>
    %23 = tpu.iota {dimensions = array<i32: 2>} : vector<1x1x128xi32>
    %c16_i32 = arith.constant 16 : i32
    %24 = vector.broadcast %c16_i32 : i32 to vector<1x1x128xi32>
    %25 = arith.cmpi slt, %23, %24 : vector<1x1x128xi32>
    %cst_14 = arith.constant 0.000000e+00 : f32
    %cst_15 = arith.constant -1.000000e+30 : f32
    %26 = vector.broadcast %cst_14 : f32 to vector<1x1x128xf32>
    %27 = vector.broadcast %cst_15 : f32 to vector<1x1x128xf32>
    %28 = arith.select %25, %26, %27 : vector<1x1x128xi1>, vector<1x1x128xf32>
    %cst_16 = arith.constant dense<0.000000e+00> : vector<2x8x128xf32>
    %29 = tpu.matmul %18, %20, %cst_16 {dimension_numbers = #tpu.dot_dimension_numbers<[2], [2], [1], [1], [0, 0, 0, 1, 1, 1], [0], [0]>} : vector<2x8x128xbf16>, vector<2x128x128xbf16>, vector<2x8x128xf32> -> vector<2x8x128xf32>
    %cst_17 = arith.constant 0.176776692 : f32
    %30 = vector.broadcast %cst_17 : f32 to vector<2x8x128xf32>
    %31 = arith.mulf %29, %30 : vector<2x8x128xf32>
    %32 = vector.broadcast %28 : vector<1x1x128xf32> to vector<2x8x128xf32>
    %33 = arith.addf %31, %32 : vector<2x8x128xf32>
    %cst_18 = arith.constant dense<0xFF800000> : vector<2x8xf32>
    %34 = vector.multi_reduction <maximumf>, %33, %cst_18 [2] : vector<2x8x128xf32> to vector<2x8xf32>
    %35 = vector.shape_cast %34 : vector<2x8xf32> to vector<2x8x1xf32>
    %36 = vector.broadcast %35 : vector<2x8x1xf32> to vector<2x8x128xf32>
    %37 = arith.subf %33, %36 : vector<2x8x128xf32>
    %38 = math.exp %37 : vector<2x8x128xf32>
    %cst_19 = arith.constant dense<0.000000e+00> : vector<2x8xf32>
    %39 = vector.multi_reduction <add>, %38, %cst_19 [2] : vector<2x8x128xf32> to vector<2x8xf32>
    %40 = vector.shape_cast %39 : vector<2x8xf32> to vector<2x8x1xf32>
    %41 = tpu.reciprocal %40 {approx = true} : vector<2x8x1xf32> -> vector<2x8x1xf32>
    %42 = vector.broadcast %41 : vector<2x8x1xf32> to vector<2x8x128xf32>
    %43 = arith.mulf %38, %42 : vector<2x8x128xf32>
    %44 = arith.truncf %43 : vector<2x8x128xf32> to vector<2x8x128xbf16>
    %cst_20 = arith.constant dense<0.000000e+00> : vector<2x8x128xf32>
    %45 = tpu.matmul %44, %22, %cst_20 {dimension_numbers = #tpu.dot_dimension_numbers<[2], [1], [1], [2], [0, 0, 0, 1, 1, 2], [0], [0]>} : vector<2x8x128xbf16>, vector<2x128x128xbf16>, vector<2x8x128xf32> -> vector<2x8x128xf32>
    %46 = vector.shape_cast %45 : vector<2x8x128xf32> to vector<16x128xf32>
    %47 = arith.truncf %46 : vector<16x128xf32> to vector<16x128xbf16>
    %c0_21 = arith.constant 0 : index
    %c0_22 = arith.constant 0 : index
    %48 = vector.load %arg7[%c0_21, %c0_22] : memref<128x128xbf16, #tpu.memory_space<vmem>>, vector<128x128xbf16>
    %cst_23 = arith.constant dense<0.000000e+00> : vector<16x128xf32>
    %49 = tpu.matmul %47, %48, %cst_23 {dimension_numbers = #tpu.dot_dimension_numbers<[1], [0], [0], [1], [0, 0, 1, 1], [], []>} : vector<16x128xbf16>, vector<128x128xbf16>, vector<16x128xf32> -> vector<16x128xf32>
    %c0_24 = arith.constant 0 : index
    %c0_25 = arith.constant 0 : index
    %50 = vector.load %arg8[%c0_24, %c0_25] : memref<1x128xf32, #tpu.memory_space<vmem>>, vector<1x128xf32>
    %51 = vector.broadcast %50 : vector<1x128xf32> to vector<16x128xf32>
    %52 = arith.addf %49, %51 : vector<16x128xf32>
    %53 = tpu.iota {dimensions = array<i32: 1>} : vector<1x128xi32>
    %c32_i32 = arith.constant 32 : i32
    %54 = vector.broadcast %c32_i32 : i32 to vector<1x128xi32>
    %55 = arith.cmpi slt, %53, %54 : vector<1x128xi32>
    %56 = arith.extui %55 : vector<1x128xi1> to vector<1x128xi32>
    %57 = arith.sitofp %56 : vector<1x128xi32> to vector<1x128xf32>
    %58 = arith.addf %52, %1 : vector<16x128xf32>
    %c0_26 = arith.constant 0 : index
    %c0_27 = arith.constant 0 : index
    %59 = vector.load %arg9[%c0_26, %c0_27] : memref<1x128xf32, #tpu.memory_space<vmem>>, vector<1x128xf32>
    %c0_28 = arith.constant 0 : index
    %c0_29 = arith.constant 0 : index
    %60 = vector.load %arg10[%c0_28, %c0_29] : memref<1x128xf32, #tpu.memory_space<vmem>>, vector<1x128xf32>
    %cst_30 = arith.constant dense<0.000000e+00> : vector<16xf32>
    %61 = vector.multi_reduction <add>, %58, %cst_30 [1] : vector<16x128xf32> to vector<16xf32>
    %62 = vector.shape_cast %61 : vector<16xf32> to vector<16x1xf32>
    %cst_31 = arith.constant 3.125000e-02 : f32
    %63 = vector.broadcast %cst_31 : f32 to vector<16x1xf32>
    %64 = arith.mulf %62, %63 : vector<16x1xf32>
    %65 = vector.broadcast %64 : vector<16x1xf32> to vector<16x128xf32>
    %66 = arith.subf %58, %65 : vector<16x128xf32>
    %67 = vector.broadcast %57 : vector<1x128xf32> to vector<16x128xf32>
    %68 = arith.mulf %66, %67 : vector<16x128xf32>
    %69 = arith.mulf %68, %68 : vector<16x128xf32>
    %cst_32 = arith.constant dense<0.000000e+00> : vector<16xf32>
    %70 = vector.multi_reduction <add>, %69, %cst_32 [1] : vector<16x128xf32> to vector<16xf32>
    %71 = vector.shape_cast %70 : vector<16xf32> to vector<16x1xf32>
    %cst_33 = arith.constant 3.125000e-02 : f32
    %72 = vector.broadcast %cst_33 : f32 to vector<16x1xf32>
    %73 = arith.mulf %71, %72 : vector<16x1xf32>
    %cst_34 = arith.constant 9.99999974E-6 : f32
    %74 = vector.broadcast %cst_34 : f32 to vector<16x1xf32>
    %75 = arith.addf %73, %74 : vector<16x1xf32>
    %76 = math.rsqrt %75 : vector<16x1xf32>
    %77 = vector.broadcast %76 : vector<16x1xf32> to vector<16x128xf32>
    %78 = arith.mulf %68, %77 : vector<16x128xf32>
    %79 = vector.broadcast %59 : vector<1x128xf32> to vector<16x128xf32>
    %80 = arith.mulf %78, %79 : vector<16x128xf32>
    %81 = vector.broadcast %60 : vector<1x128xf32> to vector<16x128xf32>
    %82 = arith.addf %80, %81 : vector<16x128xf32>
    %83 = arith.truncf %82 : vector<16x128xf32> to vector<16x128xbf16>
    %c0_35 = arith.constant 0 : index
    %c0_36 = arith.constant 0 : index
    %84 = vector.load %arg11[%c0_35, %c0_36] : memref<128x128xbf16, #tpu.memory_space<vmem>>, vector<128x128xbf16>
    %cst_37 = arith.constant dense<0.000000e+00> : vector<16x128xf32>
    %85 = tpu.matmul %83, %84, %cst_37 {dimension_numbers = #tpu.dot_dimension_numbers<[1], [0], [0], [1], [0, 0, 1, 1], [], []>} : vector<16x128xbf16>, vector<128x128xbf16>, vector<16x128xf32> -> vector<16x128xf32>
    %c0_38 = arith.constant 0 : index
    %c0_39 = arith.constant 0 : index
    %86 = vector.load %arg12[%c0_38, %c0_39] : memref<1x128xf32, #tpu.memory_space<vmem>>, vector<1x128xf32>
    %87 = vector.broadcast %86 : vector<1x128xf32> to vector<16x128xf32>
    %88 = arith.addf %85, %87 : vector<16x128xf32>
    %cst_40 = arith.constant 0.000000e+00 : f32
    %89 = vector.broadcast %cst_40 : f32 to vector<16x128xf32>
    %90 = arith.maximumf %88, %89 : vector<16x128xf32>
    %91 = arith.truncf %90 : vector<16x128xf32> to vector<16x128xbf16>
    %c0_41 = arith.constant 0 : index
    %c0_42 = arith.constant 0 : index
    %92 = vector.load %arg13[%c0_41, %c0_42] : memref<128x128xbf16, #tpu.memory_space<vmem>>, vector<128x128xbf16>
    %cst_43 = arith.constant dense<0.000000e+00> : vector<16x128xf32>
    %93 = tpu.matmul %91, %92, %cst_43 {dimension_numbers = #tpu.dot_dimension_numbers<[1], [0], [0], [1], [0, 0, 1, 1], [], []>} : vector<16x128xbf16>, vector<128x128xbf16>, vector<16x128xf32> -> vector<16x128xf32>
    %c0_44 = arith.constant 0 : index
    %c0_45 = arith.constant 0 : index
    %94 = vector.load %arg14[%c0_44, %c0_45] : memref<1x128xf32, #tpu.memory_space<vmem>>, vector<1x128xf32>
    %95 = vector.broadcast %94 : vector<1x128xf32> to vector<16x128xf32>
    %96 = arith.addf %93, %95 : vector<16x128xf32>
    %97 = arith.addf %96, %82 : vector<16x128xf32>
    %c0_46 = arith.constant 0 : index
    %c0_47 = arith.constant 0 : index
    %98 = vector.load %arg15[%c0_46, %c0_47] : memref<1x128xf32, #tpu.memory_space<vmem>>, vector<1x128xf32>
    %c0_48 = arith.constant 0 : index
    %c0_49 = arith.constant 0 : index
    %99 = vector.load %arg16[%c0_48, %c0_49] : memref<1x128xf32, #tpu.memory_space<vmem>>, vector<1x128xf32>
    %cst_50 = arith.constant dense<0.000000e+00> : vector<16xf32>
    %100 = vector.multi_reduction <add>, %97, %cst_50 [1] : vector<16x128xf32> to vector<16xf32>
    %101 = vector.shape_cast %100 : vector<16xf32> to vector<16x1xf32>
    %cst_51 = arith.constant 3.125000e-02 : f32
    %102 = vector.broadcast %cst_51 : f32 to vector<16x1xf32>
    %103 = arith.mulf %101, %102 : vector<16x1xf32>
    %104 = vector.broadcast %103 : vector<16x1xf32> to vector<16x128xf32>
    %105 = arith.subf %97, %104 : vector<16x128xf32>
    %106 = vector.broadcast %57 : vector<1x128xf32> to vector<16x128xf32>
    %107 = arith.mulf %105, %106 : vector<16x128xf32>
    %108 = arith.mulf %107, %107 : vector<16x128xf32>
    %cst_52 = arith.constant dense<0.000000e+00> : vector<16xf32>
    %109 = vector.multi_reduction <add>, %108, %cst_52 [1] : vector<16x128xf32> to vector<16xf32>
    %110 = vector.shape_cast %109 : vector<16xf32> to vector<16x1xf32>
    %cst_53 = arith.constant 3.125000e-02 : f32
    %111 = vector.broadcast %cst_53 : f32 to vector<16x1xf32>
    %112 = arith.mulf %110, %111 : vector<16x1xf32>
    %cst_54 = arith.constant 9.99999974E-6 : f32
    %113 = vector.broadcast %cst_54 : f32 to vector<16x1xf32>
    %114 = arith.addf %112, %113 : vector<16x1xf32>
    %115 = math.rsqrt %114 : vector<16x1xf32>
    %116 = vector.broadcast %115 : vector<16x1xf32> to vector<16x128xf32>
    %117 = arith.mulf %107, %116 : vector<16x128xf32>
    %118 = vector.broadcast %98 : vector<1x128xf32> to vector<16x128xf32>
    %119 = arith.mulf %117, %118 : vector<16x128xf32>
    %120 = vector.broadcast %99 : vector<1x128xf32> to vector<16x128xf32>
    %121 = arith.addf %119, %120 : vector<16x128xf32>
    %122 = vector.shape_cast %121 : vector<16x128xf32> to vector<2x8x128xf32>
    %c0_55 = arith.constant 0 : index
    %c0_56 = arith.constant 0 : index
    %c0_57 = arith.constant 0 : index
    %123 = vector.load %arg17[%c0_55, %c0_56, %c0_57] : memref<2x8x128xf32, #tpu.memory_space<vmem>>, vector<2x8x128xf32>
    tpu.vector_store %arg17[%c0_55, %c0_56, %c0_57], %122 {strides = array<i32>} : memref<2x8x128xf32, #tpu.memory_space<vmem>>, vector<2x8x128xf32>,
    return
  }
  func.func @transform_0(%arg0: i32) -> (i32, i32, i32) {
    %c0_i32 = arith.constant 0 : i32
    %c0_i32_0 = arith.constant 0 : i32
    %c0_i32_1 = arith.constant 0 : i32
    return %arg0, %c0_i32, %c0_i32_0 : i32, i32, i32
  }
  func.func @transform_1(%arg0: i32) -> (i32, i32, i32) {
    %c0_i32 = arith.constant 0 : i32
    %c0_i32_0 = arith.constant 0 : i32
    %c0_i32_1 = arith.constant 0 : i32
    return %arg0, %c0_i32, %c0_i32_0 : i32, i32, i32
  }
  func.func @transform_2(%arg0: i32) -> (i32, i32) {
    %c0_i32 = arith.constant 0 : i32
    %c0_i32_0 = arith.constant 0 : i32
    %c0_i32_1 = arith.constant 0 : i32
    return %c0_i32, %c0_i32_0 : i32, i32
  }
  func.func @transform_3(%arg0: i32) -> (i32, i32) {
    %c0_i32 = arith.constant 0 : i32
    %c0_i32_0 = arith.constant 0 : i32
    %c0_i32_1 = arith.constant 0 : i32
    return %c0_i32, %c0_i32_0 : i32, i32
  }
  func.func @transform_4(%arg0: i32) -> (i32, i32) {
    %c0_i32 = arith.constant 0 : i32
    %c0_i32_0 = arith.constant 0 : i32
    %c0_i32_1 = arith.constant 0 : i32
    return %c0_i32, %c0_i32_0 : i32, i32
  }
  func.func @transform_5(%arg0: i32) -> (i32, i32) {
    %c0_i32 = arith.constant 0 : i32
    %c0_i32_0 = arith.constant 0 : i32
    %c0_i32_1 = arith.constant 0 : i32
    return %c0_i32, %c0_i32_0 : i32, i32
  }
  func.func @transform_6(%arg0: i32) -> (i32, i32) {
    %c0_i32 = arith.constant 0 : i32
    %c0_i32_0 = arith.constant 0 : i32
    %c0_i32_1 = arith.constant 0 : i32
    return %c0_i32, %c0_i32_0 : i32, i32
  }
  func.func @transform_7(%arg0: i32) -> (i32, i32) {
    %c0_i32 = arith.constant 0 : i32
    %c0_i32_0 = arith.constant 0 : i32
    %c0_i32_1 = arith.constant 0 : i32
    return %c0_i32, %c0_i32_0 : i32, i32
  }
  func.func @transform_8(%arg0: i32) -> (i32, i32) {
    %c0_i32 = arith.constant 0 : i32
    %c0_i32_0 = arith.constant 0 : i32
    %c0_i32_1 = arith.constant 0 : i32
    return %c0_i32, %c0_i32_0 : i32, i32
  }
  func.func @transform_9(%arg0: i32) -> (i32, i32) {
    %c0_i32 = arith.constant 0 : i32
    %c0_i32_0 = arith.constant 0 : i32
    %c0_i32_1 = arith.constant 0 : i32
    return %c0_i32, %c0_i32_0 : i32, i32
  }
  func.func @transform_10(%arg0: i32) -> (i32, i32) {
    %c0_i32 = arith.constant 0 : i32
    %c0_i32_0 = arith.constant 0 : i32
    %c0_i32_1 = arith.constant 0 : i32
    return %c0_i32, %c0_i32_0 : i32, i32
  }
  func.func @transform_11(%arg0: i32) -> (i32, i32) {
    %c0_i32 = arith.constant 0 : i32
    %c0_i32_0 = arith.constant 0 : i32
    %c0_i32_1 = arith.constant 0 : i32
    return %c0_i32, %c0_i32_0 : i32, i32
  }
  func.func @transform_12(%arg0: i32) -> (i32, i32) {
    %c0_i32 = arith.constant 0 : i32
    %c0_i32_0 = arith.constant 0 : i32
    %c0_i32_1 = arith.constant 0 : i32
    return %c0_i32, %c0_i32_0 : i32, i32
  }
  func.func @transform_13(%arg0: i32) -> (i32, i32) {
    %c0_i32 = arith.constant 0 : i32
    %c0_i32_0 = arith.constant 0 : i32
    %c0_i32_1 = arith.constant 0 : i32
    return %c0_i32, %c0_i32_0 : i32, i32
  }
  func.func @transform_14(%arg0: i32) -> (i32, i32) {
    %c0_i32 = arith.constant 0 : i32
    %c0_i32_0 = arith.constant 0 : i32
    %c0_i32_1 = arith.constant 0 : i32
    return %c0_i32, %c0_i32_0 : i32, i32
  }
  func.func @transform_15(%arg0: i32) -> (i32, i32) {
    %c0_i32 = arith.constant 0 : i32
    %c0_i32_0 = arith.constant 0 : i32
    %c0_i32_1 = arith.constant 0 : i32
    return %c0_i32, %c0_i32_0 : i32, i32
  }
  func.func @transform_16(%arg0: i32) -> (i32, i32, i32) {
    %c0_i32 = arith.constant 0 : i32
    %c0_i32_0 = arith.constant 0 : i32
    %c0_i32_1 = arith.constant 0 : i32
    return %arg0, %c0_i32, %c0_i32_0 : i32, i32, i32
  }
}

</mosaic_0001>

<llo_original>
// kernel: tpu_custom_call.1
$region0: #{tpu_custom_call.1}
  #allocation0 [shape = 'u32[]', space=smem, size = 0x4, offset = 0x4, fixed_abs, tag = 'smem constant byte address 0x4 - core index']
  #allocation1 [shape = 'u32[144,128]{1,0:T(1,128)}', space=vmem, size = 0x12000, scoped, tag = 'internal scratch']
  %s0 = inlined_call_operand.hbm [shape: f32[2,8,128], index: 0, kind: input, shape index: {}]
  %s1 = inlined_call_operand.hbm [shape: bf16[2,128,128], index: 1, kind: input, shape index: {}]
  %s2 = inlined_call_operand.hbm [shape: bf16[128,128], index: 2, kind: input, shape index: {}]
  %s3 = inlined_call_operand.vmem [shape: f32[1,128], index: 3, kind: input, shape index: {}]
  %s4 = inlined_call_operand.hbm [shape: bf16[128,256], index: 4, kind: input, shape index: {}]
  %s5 = inlined_call_operand.vmem [shape: f32[1,256], index: 5, kind: input, shape index: {}]
  %s6 = inlined_call_operand.hbm [shape: bf16[128,128], index: 6, kind: input, shape index: {}]
  %s7 = inlined_call_operand.vmem [shape: f32[1,128], index: 7, kind: input, shape index: {}]
  %s8 = inlined_call_operand.vmem [shape: f32[1,128], index: 8, kind: input, shape index: {}]
  %s9 = inlined_call_operand.vmem [shape: f32[1,128], index: 9, kind: input, shape index: {}]
  %s10 = inlined_call_operand.hbm [shape: bf16[128,128], index: 10, kind: input, shape index: {}]
  %s11 = inlined_call_operand.vmem [shape: f32[1,128], index: 11, kind: input, shape index: {}]
  %s12 = inlined_call_operand.hbm [shape: bf16[128,128], index: 12, kind: input, shape index: {}]
  %s13 = inlined_call_operand.vmem [shape: f32[1,128], index: 13, kind: input, shape index: {}]
  %s14 = inlined_call_operand.vmem [shape: f32[1,128], index: 14, kind: input, shape index: {}]
  %s15 = inlined_call_operand.vmem [shape: f32[1,128], index: 15, kind: input, shape index: {}]
  %s16 = inlined_call_operand.hbm [shape: f32[2,8,128], index: 16, kind: output, shape index: {}]
  %s17 = sld [smem:[#allocation0]]
  $region102: #{tpu_custom_call.1} parent=0
    _
  %s19 = ssub.s32 1, %s17
  %s20 = scalar_select 0, %s19, %s17
  $region1: #{tpu_custom_call.1} parent=0
    #allocation2 [shape = 'u8[8192]{0}', space=vmem, size = 0x2000, scoped, tag = 'input window, operand 0, single buffered']
    #allocation3 [shape = 's32[1]{0}', space=sflag, size = 0x4, scoped, tag = 'scoped memory for tpu_custom_call.1']
    #allocation4 [shape = 's32[1]{0}', space=sflag, size = 0x4, scoped, tag = 'scoped memory for tpu_custom_call.1']
    #allocation5 [shape = 'u8[65536]{0}', space=vmem, size = 0x10000, scoped, tag = 'input window, operand 1, single buffered']
    #allocation6 [shape = 's32[1]{0}', space=sflag, size = 0x4, scoped, tag = 'scoped memory for tpu_custom_call.1']
    #allocation7 [shape = 'u8[32768]{0}', space=vmem, size = 0x8000, scoped, tag = 'input window, operand 2, single buffered']
    #allocation8 [shape = 'u8[65536]{0}', space=vmem, size = 0x10000, scoped, tag = 'input window, operand 4, single buffered']
    #allocation9 [shape = 's32[1]{0}', space=sflag, size = 0x4, scoped, tag = 'scoped memory for tpu_custom_call.1']
    #allocation10 [shape = 'u8[32768]{0}', space=vmem, size = 0x8000, scoped, tag = 'input window, operand 6, single buffered']
    #allocation11 [shape = 'u8[32768]{0}', space=vmem, size = 0x8000, scoped, tag = 'input window, operand 10, single buffered']
    #allocation12 [shape = 's32[1]{0}', space=sflag, size = 0x4, scoped, tag = 'scoped memory for tpu_custom_call.1']
    #allocation13 [shape = 'u8[32768]{0}', space=vmem, size = 0x8000, scoped, tag = 'input window, operand 12, single buffered']
    #allocation14 [shape = 'u8[8192]{0}', space=vmem, size = 0x2000, scoped, tag = 'output window, operand 0, single buffered']
    %21 = vsyncpa [#allocation3], 0
    %22 = vsyncpa [#allocation6], 0
    %23 = vsyncpa [#allocation9], 0
    %24 = vsyncpa [#allocation12], 0
    %25 = vsyncpa [#allocation4], 0
    // Predicated region
    $region2: #{tpu_custom_call.1} parent=1 // pred_check
      _
    $region3: #{tpu_custom_call.1} parent=1 // pred_check_branch
      %27 = sbr.rel (0) target = $region5
    $region4: #{tpu_custom_call.1} parent=1 // pred_region
      %s29 = ssub.s32 256, 256
      %30 = vsyncadd [#allocation3], %s29
      %s31 = sshll.u32 [#allocation2], 4
      %s32 = int_to_ptr.vmem [resolvable:$true] %s31
      %37 = dma.hbm_to_vmem [thread:$0]  %s0, 256, %s32, [#allocation3], 128, 128, 8
    $region5: #{tpu_custom_call.1} parent=1 // pred_fallthru
      _
    // Predicated region
    $region6: #{tpu_custom_call.1} parent=1 // pred_check
      _
    $region7: #{tpu_custom_call.1} parent=1 // pred_check_branch
      %39 = sbr.rel (0) target = $region9
    $region8: #{tpu_custom_call.1} parent=1 // pred_region
      %s41 = ssub.s32 2048, 2048
      %42 = vsyncadd [#allocation6], %s41
      %s43 = sshll.u32 [#allocation5], 4
      %s44 = int_to_ptr.vmem [resolvable:$true] %s43
      %49 = dma.hbm_to_vmem [thread:$0]  %s1, 2048, %s44, [#allocation6], 64, 64, 4
    $region9: #{tpu_custom_call.1} parent=1 // pred_fallthru
      _
    // Predicated region
    $region10: #{tpu_custom_call.1} parent=1 // pred_check
      _
    $region11: #{tpu_custom_call.1} parent=1 // pred_check_branch
      %51 = sbr.rel (0) target = $region13
    $region12: #{tpu_custom_call.1} parent=1 // pred_region
      %s53 = ssub.s32 1024, 1024
      %54 = vsyncadd [#allocation6], %s53
      %s55 = sshll.u32 [#allocation7], 4
      %s56 = int_to_ptr.vmem [resolvable:$true] %s55
      %61 = dma.hbm_to_vmem [thread:$0]  %s2, 1024, %s56, [#allocation6], 64, 64, 4
    $region13: #{tpu_custom_call.1} parent=1 // pred_fallthru
      _
    // Predicated region
    $region14: #{tpu_custom_call.1} parent=1 // pred_check
      _
    $region15: #{tpu_custom_call.1} parent=1 // pred_check_branch
      %63 = sbr.rel (0) target = $region17
    $region16: #{tpu_custom_call.1} parent=1 // pred_region
      _
    $region17: #{tpu_custom_call.1} parent=1 // pred_fallthru
      _
    // Predicated region
    $region18: #{tpu_custom_call.1} parent=1 // pred_check
      _
    $region19: #{tpu_custom_call.1} parent=1 // pred_check_branch
      %65 = sbr.rel (0) target = $region21
    $region20: #{tpu_custom_call.1} parent=1 // pred_region
      %s67 = ssub.s32 2048, 2048
      %68 = vsyncadd [#allocation9], %s67
      %s69 = sshll.u32 [#allocation8], 4
      %s70 = int_to_ptr.vmem [resolvable:$true] %s69
      %75 = dma.hbm_to_vmem [thread:$0]  %s4, 2048, %s70, [#allocation9], 128, 128, 8
    $region21: #{tpu_custom_call.1} parent=1 // pred_fallthru
      _
    // Predicated region
    $region22: #{tpu_custom_call.1} parent=1 // pred_check
      _
    $region23: #{tpu_custom_call.1} parent=1 // pred_check_branch
      %77 = sbr.rel (0) target = $region25
    $region24: #{tpu_custom_call.1} parent=1 // pred_region
      _
    $region25: #{tpu_custom_call.1} parent=1 // pred_fallthru
      _
    // Predicated region
    $region26: #{tpu_custom_call.1} parent=1 // pred_check
      _
    $region27: #{tpu_custom_call.1} parent=1 // pred_check_branch
      %79 = sbr.rel (0) target = $region29
    $region28: #{tpu_custom_call.1} parent=1 // pred_region
      %s81 = ssub.s32 1024, 1024
      %82 = vsyncadd [#allocation9], %s81
      %s83 = sshll.u32 [#allocation10], 4
      %s84 = int_to_ptr.vmem [resolvable:$true] %s83
      %89 = dma.hbm_to_vmem [thread:$0]  %s6, 1024, %s84, [#allocation9], 64, 64, 4
    $region29: #{tpu_custom_call.1} parent=1 // pred_fallthru
      _
    // Predicated region
    $region30: #{tpu_custom_call.1} parent=1 // pred_check
      _
    $region31: #{tpu_custom_call.1} parent=1 // pred_check_branch
      %91 = sbr.rel (0) target = $region33
    $region32: #{tpu_custom_call.1} parent=1 // pred_region
      _
    $region33: #{tpu_custom_call.1} parent=1 // pred_fallthru
      _
    // Predicated region
    $region34: #{tpu_custom_call.1} parent=1 // pred_check
      _
    $region35: #{tpu_custom_call.1} parent=1 // pred_check_branch
      %93 = sbr.rel (0) target = $region37
    $region36: #{tpu_custom_call.1} parent=1 // pred_region
      _
    $region37: #{tpu_custom_call.1} parent=1 // pred_fallthru
      _
    // Predicated region
    $region38: #{tpu_custom_call.1} parent=1 // pred_check
      _
    $region39: #{tpu_custom_call.1} parent=1 // pred_check_branch
      %95 = sbr.rel (0) target = $region41
    $region40: #{tpu_custom_call.1} parent=1 // pred_region
      _
    $region41: #{tpu_custom_call.1} parent=1 // pred_fallthru
      _
    // Predicated region
    $region42: #{tpu_custom_call.1} parent=1 // pred_check
      _
    $region43: #{tpu_custom_call.1} parent=1 // pred_check_branch
      %97 = sbr.rel (0) target = $region45
    $region44: #{tpu_custom_call.1} parent=1 // pred_region
      %s99 = ssub.s32 1024, 1024
      %100 = vsyncadd [#allocation12], %s99
      %s101 = sshll.u32 [#allocation11], 4
      %s102 = int_to_ptr.vmem [resolvable:$true] %s101
      %107 = dma.hbm_to_vmem [thread:$0]  %s10, 1024, %s102, [#allocation12], 64, 64, 4
    $region45: #{tpu_custom_call.1} parent=1 // pred_fallthru
      _
    // Predicated region
    $region46: #{tpu_custom_call.1} parent=1 // pred_check
      _
    $region47: #{tpu_custom_call.1} parent=1 // pred_check_branch
      %109 = sbr.rel (0) target = $region49
    $region48: #{tpu_custom_call.1} parent=1 // pred_region
      _
    $region49: #{tpu_custom_call.1} parent=1 // pred_fallthru
      _
    // Predicated region
    $region50: #{tpu_custom_call.1} parent=1 // pred_check
      _
    $region51: #{tpu_custom_call.1} parent=1 // pred_check_branch
      %111 = sbr.rel (0) target = $region53
    $region52: #{tpu_custom_call.1} parent=1 // pred_region
      %s113 = ssub.s32 1024, 1024
      %114 = vsyncadd [#allocation12], %s113
      %s115 = sshll.u32 [#allocation13], 4
      %s116 = int_to_ptr.vmem [resolvable:$true] %s115
      %121 = dma.hbm_to_vmem [thread:$0]  %s12, 1024, %s116, [#allocation12], 64, 64, 4
    $region53: #{tpu_custom_call.1} parent=1 // pred_fallthru
      _
    // Predicated region
    $region54: #{tpu_custom_call.1} parent=1 // pred_check
      _
    $region55: #{tpu_custom_call.1} parent=1 // pred_check_branch
      %123 = sbr.rel (0) target = $region57
    $region56: #{tpu_custom_call.1} parent=1 // pred_region
      _
    $region57: #{tpu_custom_call.1} parent=1 // pred_fallthru
      _
    // Predicated region
    $region58: #{tpu_custom_call.1} parent=1 // pred_check
      _
    $region59: #{tpu_custom_call.1} parent=1 // pred_check_branch
      %125 = sbr.rel (0) target = $region61
    $region60: #{tpu_custom_call.1} parent=1 // pred_region
      _
    $region61: #{tpu_custom_call.1} parent=1 // pred_fallthru
      _
    // Predicated region
    $region62: #{tpu_custom_call.1} parent=1 // pred_check
      _
    $region63: #{tpu_custom_call.1} parent=1 // pred_check_branch
      %127 = sbr.rel (0) target = $region65
    $region64: #{tpu_custom_call.1} parent=1 // pred_region
      _
    $region65: #{tpu_custom_call.1} parent=1 // pred_fallthru
      _
    // Predicated region
    $region66: #{tpu_custom_call.1} parent=1 // pred_check
      _
    $region67: #{tpu_custom_call.1} parent=1 // pred_check_branch
      %129 = sbr.rel (0) target = $region69
    $region68: #{tpu_custom_call.1} parent=1 // pred_region
      %130 = dma.done [#allocation3], 256
    $region69: #{tpu_custom_call.1} parent=1 // pred_fallthru
      _
    // Predicated region
    $region70: #{tpu_custom_call.1} parent=1 // pred_check
      _
    $region71: #{tpu_custom_call.1} parent=1 // pred_check_branch
      %132 = sbr.rel (0) target = $region73
    $region72: #{tpu_custom_call.1} parent=1 // pred_region
      %133 = dma.done [#allocation6], 2048
    $region73: #{tpu_custom_call.1} parent=1 // pred_fallthru
      _
    // Predicated region
    $region74: #{tpu_custom_call.1} parent=1 // pred_check
      _
    $region75: #{tpu_custom_call.1} parent=1 // pred_check_branch
      %135 = sbr.rel (0) target = $region77
    $region76: #{tpu_custom_call.1} parent=1 // pred_region
      %136 = dma.done [#allocation6], 1024
    $region77: #{tpu_custom_call.1} parent=1 // pred_fallthru
      _
    // Predicated region
    $region78: #{tpu_custom_call.1} parent=1 // pred_check
      _
    $region79: #{tpu_custom_call.1} parent=1 // pred_check_branch
      %138 = sbr.rel (0) target = $region81
    $region80: #{tpu_custom_call.1} parent=1 // pred_region
      %139 = dma.done [#allocation9], 2048
    $region81: #{tpu_custom_call.1} parent=1 // pred_fallthru
      _
    // Predicated region
    $region82: #{tpu_custom_call.1} parent=1 // pred_check
      _
    $region83: #{tpu_custom_call.1} parent=1 // pred_check_branch
      %141 = sbr.rel (0) target = $region85
    $region84: #{tpu_custom_call.1} parent=1 // pred_region
      %142 = dma.done [#allocation9], 1024
    $region85: #{tpu_custom_call.1} parent=1 // pred_fallthru
      _
    // Predicated region
    $region86: #{tpu_custom_call.1} parent=1 // pred_check
      _
    $region87: #{tpu_custom_call.1} parent=1 // pred_check_branch
      %144 = sbr.rel (0) target = $region89
    $region88: #{tpu_custom_call.1} parent=1 // pred_region
      %145 = dma.done [#allocation12], 1024
    $region89: #{tpu_custom_call.1} parent=1 // pred_fallthru
      _
    // Predicated region
    $region90: #{tpu_custom_call.1} parent=1 // pred_check
      _
    $region91: #{tpu_custom_call.1} parent=1 // pred_check_branch
      %147 = sbr.rel (0) target = $region93
    $region92: #{tpu_custom_call.1} parent=1 // pred_region
      %148 = dma.done [#allocation12], 1024
    $region93: #{tpu_custom_call.1} parent=1 // pred_fallthru
      _
    %v150 = vld [vmem:[#allocation2] sm:$0xff]
    %v151 = vld [vmem:[#allocation2 + $0x8] sm:$0xff]
    %v152 = vpack.c.bf16 %v151, %v150
    %v153 = vld [vmem:[#allocation5] sm:$0xf]
    %v154 = vld [vmem:[#allocation5 + $0x4] sm:$0xf]
    %v155 = vld [vmem:[#allocation5 + $0x8] sm:$0xf]
    %v156 = vld [vmem:[#allocation5 + $0xc] sm:$0xf]
    %v157 = vld [vmem:[#allocation5 + $0x10] sm:$0xf]
    %v158 = vld [vmem:[#allocation5 + $0x14] sm:$0xf]
    %v159 = vld [vmem:[#allocation5 + $0x18] sm:$0xf]
    %v160 = vld [vmem:[#allocation5 + $0x1c] sm:$0xf]
    %v161 = vld [vmem:[#allocation5 + $0x20] sm:$0xf]
    %v162 = vld [vmem:[#allocation5 + $0x24] sm:$0xf]
    %v163 = vld [vmem:[#allocation5 + $0x28] sm:$0xf]
    %v164 = vld [vmem:[#allocation5 + $0x2c] sm:$0xf]
    %v165 = vld [vmem:[#allocation5 + $0x30] sm:$0xf]
    %v166 = vld [vmem:[#allocation5 + $0x34] sm:$0xf]
    %v167 = vld [vmem:[#allocation5 + $0x38] sm:$0xf]
    %v168 = vld [vmem:[#allocation5 + $0x3c] sm:$0xf]
    %v169 = vld [vmem:[#allocation5 + $0x40] sm:$0xf]
    %v170 = vld [vmem:[#allocation5 + $0x44] sm:$0xf]
    %v171 = vld [vmem:[#allocation5 + $0x48] sm:$0xf]
    %v172 = vld [vmem:[#allocation5 + $0x4c] sm:$0xf]
    %v173 = vld [vmem:[#allocation5 + $0x50] sm:$0xf]
    %v174 = vld [vmem:[#allocation5 + $0x54] sm:$0xf]
    %v175 = vld [vmem:[#allocation5 + $0x58] sm:$0xf]
    %v176 = vld [vmem:[#allocation5 + $0x5c] sm:$0xf]
    %v177 = vld [vmem:[#allocation5 + $0x60] sm:$0xf]
    %v178 = vld [vmem:[#allocation5 + $0x64] sm:$0xf]
    %v179 = vld [vmem:[#allocation5 + $0x68] sm:$0xf]
    %v180 = vld [vmem:[#allocation5 + $0x6c] sm:$0xf]
    %v181 = vld [vmem:[#allocation5 + $0x70] sm:$0xf]
    %v182 = vld [vmem:[#allocation5 + $0x74] sm:$0xf]
    %v183 = vld [vmem:[#allocation5 + $0x78] sm:$0xf]
    %v184 = vld [vmem:[#allocation5 + $0x7c] sm:$0xf]
    %v185 = vld [vmem:[#allocation7] sm:$0xf]
    %v186 = vld [vmem:[#allocation7 + $0x4] sm:$0xf]
    %v187 = vld [vmem:[#allocation7 + $0x8] sm:$0xf]
    %v188 = vld [vmem:[#allocation7 + $0xc] sm:$0xf]
    %v189 = vld [vmem:[#allocation7 + $0x10] sm:$0xf]
    %v190 = vld [vmem:[#allocation7 + $0x14] sm:$0xf]
    %v191 = vld [vmem:[#allocation7 + $0x18] sm:$0xf]
    %v192 = vld [vmem:[#allocation7 + $0x1c] sm:$0xf]
    %v193 = vld [vmem:[#allocation7 + $0x20] sm:$0xf]
    %v194 = vld [vmem:[#allocation7 + $0x24] sm:$0xf]
    %v195 = vld [vmem:[#allocation7 + $0x28] sm:$0xf]
    %v196 = vld [vmem:[#allocation7 + $0x2c] sm:$0xf]
    %v197 = vld [vmem:[#allocation7 + $0x30] sm:$0xf]
    %v198 = vld [vmem:[#allocation7 + $0x34] sm:$0xf]
    %v199 = vld [vmem:[#allocation7 + $0x38] sm:$0xf]
    %v200 = vld [vmem:[#allocation7 + $0x3c] sm:$0xf]
    %v201 = vld [vmem:[%s3] sm:$0x1]
    %v203 = vlaneseq
    %v204 = vshrl.u32 %v203, 7
    %v205 = vsub.s32 0, %v204
    %v206 = vrot.slane %v201, %v205
    %v224 = vunpack.c.l.b16 %v185
    %v225 = vunpack.c.l.b16 %v186
    %v226 = vunpack.c.l.b16 %v187
    %v227 = vunpack.c.l.b16 %v188
    %v228 = vunpack.c.l.b16 %v189
    %v229 = vunpack.c.l.b16 %v190
    %v230 = vunpack.c.l.b16 %v191
    %v231 = vunpack.c.l.b16 %v192
    %v232 = vunpack.c.l.b16 %v193
    %v233 = vunpack.c.l.b16 %v194
    %v234 = vunpack.c.l.b16 %v195
    %v235 = vunpack.c.l.b16 %v196
    %v236 = vunpack.c.l.b16 %v197
    %v237 = vunpack.c.l.b16 %v198
    %v238 = vunpack.c.l.b16 %v199
    %v239 = vunpack.c.l.b16 %v200
    %v240 = vpack.c.b16 %v225, %v224
    %v241 = vpack.c.b16 %v227, %v226
    %v242 = vpack.c.b16 %v229, %v228
    %v243 = vpack.c.b16 %v231, %v230
    %v244 = vpack.c.b16 %v233, %v232
    %v245 = vpack.c.b16 %v235, %v234
    %v246 = vpack.c.b16 %v237, %v236
    %v247 = vpack.c.b16 %v239, %v238
    %256 = vmatprep.subr.bf16.mxu0 0
    %257 = vmatpush1.bf16.msra.mxu0 %v240
    %258 = vmatprep.subr.bf16.mxu0 0
    %259 = vmatpush1.bf16.msra.mxu0 %v241
    %260 = vmatprep.subr.bf16.mxu0 0
    %261 = vmatpush1.bf16.msra.mxu0 %v242
    %262 = vmatprep.subr.bf16.mxu0 0
    %263 = vmatpush1.bf16.msra.mxu0 %v243
    %264 = vmatprep.subr.bf16.mxu0 0
    %265 = vmatpush1.bf16.msra.mxu0 %v244
    %266 = vmatprep.subr.bf16.mxu0 0
    %267 = vmatpush1.bf16.msra.mxu0 %v245
    %268 = vmatprep.subr.bf16.mxu0 0
    %269 = vmatpush1.bf16.msra.mxu0 %v246
    %270 = vmatprep.subr.bf16.mxu0 0
    %271 = vmatpush1.bf16.msra.mxu0 %v247
    %272 = vmatprep.subr.bf16.mxu0 0
    %273 = vmatpush1.bf16.msra.mxu0 0
    %274 = vmatprep.subr.bf16.mxu0 0
    %275 = vmatpush1.bf16.msra.mxu0 0
    %276 = vmatprep.subr.bf16.mxu0 0
    %277 = vmatpush1.bf16.msra.mxu0 0
    %278 = vmatprep.subr.bf16.mxu0 0
    %279 = vmatpush1.bf16.msra.mxu0 0
    %280 = vmatprep.subr.bf16.mxu0 0
    %281 = vmatpush1.bf16.msra.mxu0 0
    %282 = vmatprep.subr.bf16.mxu0 0
    %283 = vmatpush1.bf16.msra.mxu0 0
    %284 = vmatprep.subr.bf16.mxu0 0
    %285 = vmatpush1.bf16.msra.mxu0 0
    %286 = vmatprep.subr.bf16.mxu0 0
    %287 = vmatpush1.bf16.msra.mxu0 0
    %288 = vmatprep.mubr.bf16.mxu0 0
    %289 = vmatmul.mubr.bf16.gmra.mrb[0].mxu0 %v152
    %v290 = vpop.f32.mrb[0].mxu0
    %v291 = vadd.f32 %v206, %v290
    %v292 = vpop.f32.mrb[0].mxu0
    %v293 = vpop.f32.mrb[0].mxu0
    %v294 = vadd.f32 %v206, %v293
    %v295 = vpop.f32.mrb[0].mxu0
    %296 = vdwg.mxu0
    %v297 = vld [vmem:[#allocation8] sm:$0xff]
    %v298 = vld [vmem:[#allocation8 + $0x8] sm:$0xff]
    %v299 = vld [vmem:[#allocation8 + $0x10] sm:$0xff]
    %v300 = vld [vmem:[#allocation8 + $0x18] sm:$0xff]
    %v301 = vld [vmem:[#allocation8 + $0x20] sm:$0xff]
    %v302 = vld [vmem:[#allocation8 + $0x28] sm:$0xff]
    %v303 = vld [vmem:[#allocation8 + $0x30] sm:$0xff]
    %v304 = vld [vmem:[#allocation8 + $0x38] sm:$0xff]
    %v305 = vld [vmem:[#allocation8 + $0x40] sm:$0xff]
    %v306 = vld [vmem:[#allocation8 + $0x48] sm:$0xff]
    %v307 = vld [vmem:[#allocation8 + $0x50] sm:$0xff]
    %v308 = vld [vmem:[#allocation8 + $0x58] sm:$0xff]
    %v309 = vld [vmem:[#allocation8 + $0x60] sm:$0xff]
    %v310 = vld [vmem:[#allocation8 + $0x68] sm:$0xff]
    %v311 = vld [vmem:[#allocation8 + $0x70] sm:$0xff]
    %v312 = vld [vmem:[#allocation8 + $0x78] sm:$0xff]
    %v313 = vld [vmem:[%s5] sm:$0x3]
    %v315 = vlaneseq
    %v316 = vshrl.u32 %v315, 7
    %v317 = vsub.s32 0, %v316
    %v318 = vrot.slane %v313, %v317
    %v319 = vlaneseq
    %v320 = vshrl.u32 %v319, 7
    %v321 = vsub.s32 1, %v320
    %v322 = vrot.slane %v313, %v321
    %v357 = vunpack.c.l.b16 %v153
    %v358 = vunpack.c.l.b16 %v154
    %v359 = vunpack.c.l.b16 %v155
    %v360 = vunpack.c.l.b16 %v156
    %v361 = vunpack.c.l.b16 %v157
    %v362 = vunpack.c.l.b16 %v158
    %v363 = vunpack.c.l.b16 %v159
    %v364 = vunpack.c.l.b16 %v160
    %v365 = vunpack.c.l.b16 %v161
    %v366 = vunpack.c.l.b16 %v162
    %v367 = vunpack.c.l.b16 %v163
    %v368 = vunpack.c.l.b16 %v164
    %v369 = vunpack.c.l.b16 %v165
    %v370 = vunpack.c.l.b16 %v166
    %v371 = vunpack.c.l.b16 %v167
    %v372 = vunpack.c.l.b16 %v168
    %v373 = vunpack.c.l.b16 %v169
    %v374 = vunpack.c.l.b16 %v170
    %v375 = vunpack.c.l.b16 %v171
    %v376 = vunpack.c.l.b16 %v172
    %v377 = vunpack.c.l.b16 %v173
    %v378 = vunpack.c.l.b16 %v174
    %v379 = vunpack.c.l.b16 %v175
    %v380 = vunpack.c.l.b16 %v176
    %v381 = vunpack.c.l.b16 %v177
    %v382 = vunpack.c.l.b16 %v178
    %v383 = vunpack.c.l.b16 %v179
    %v384 = vunpack.c.l.b16 %v180
    %v385 = vunpack.c.l.b16 %v181
    %v386 = vunpack.c.l.b16 %v182
    %v387 = vunpack.c.l.b16 %v183
    %v388 = vunpack.c.l.b16 %v184
    %v389 = vpack.c.b16 %v358, %v357
    %v390 = vpack.c.b16 %v360, %v359
    %v391 = vpack.c.b16 %v362, %v361
    %v392 = vpack.c.b16 %v364, %v363
    %v393 = vpack.c.b16 %v366, %v365
    %v394 = vpack.c.b16 %v368, %v367
    %v395 = vpack.c.b16 %v370, %v369
    %v396 = vpack.c.b16 %v372, %v371
    %v397 = vpack.c.b16 %v374, %v373
    %v398 = vpack.c.b16 %v376, %v375
    %v399 = vpack.c.b16 %v378, %v377
    %v400 = vpack.c.b16 %v380, %v379
    %v401 = vpack.c.b16 %v382, %v381
    %v402 = vpack.c.b16 %v384, %v383
    %v403 = vpack.c.b16 %v386, %v385
    %v404 = vpack.c.b16 %v388, %v387
    %v437 = vunpack.c.l.b16 %v297
    %v438 = vunpack.c.h.b16 %v297
    %v439 = vunpack.c.l.b16 %v298
    %v440 = vunpack.c.h.b16 %v298
    %v441 = vunpack.c.l.b16 %v299
    %v442 = vunpack.c.h.b16 %v299
    %v443 = vunpack.c.l.b16 %v300
    %v444 = vunpack.c.h.b16 %v300
    %v445 = vunpack.c.l.b16 %v301
    %v446 = vunpack.c.h.b16 %v301
    %v447 = vunpack.c.l.b16 %v302
    %v448 = vunpack.c.h.b16 %v302
    %v449 = vunpack.c.l.b16 %v303
    %v450 = vunpack.c.h.b16 %v303
    %v451 = vunpack.c.l.b16 %v304
    %v452 = vunpack.c.h.b16 %v304
    %v453 = vunpack.c.l.b16 %v305
    %v454 = vunpack.c.h.b16 %v305
    %v455 = vunpack.c.l.b16 %v306
    %v456 = vunpack.c.h.b16 %v306
    %v457 = vunpack.c.l.b16 %v307
    %v458 = vunpack.c.h.b16 %v307
    %v459 = vunpack.c.l.b16 %v308
    %v460 = vunpack.c.h.b16 %v308
    %v461 = vunpack.c.l.b16 %v309
    %v462 = vunpack.c.h.b16 %v309
    %v463 = vunpack.c.l.b16 %v310
    %v464 = vunpack.c.h.b16 %v310
    %v465 = vunpack.c.l.b16 %v311
    %v466 = vunpack.c.h.b16 %v311
    %v467 = vunpack.c.l.b16 %v312
    %v468 = vunpack.c.h.b16 %v312
    %v469 = vpack.c.b16 %v439, %v437
    %v470 = vpack.c.b16 %v440, %v438
    %v471 = vpack.c.b16 %v443, %v441
    %v472 = vpack.c.b16 %v444, %v442
    %v473 = vpack.c.b16 %v447, %v445
    %v474 = vpack.c.b16 %v448, %v446
    %v475 = vpack.c.b16 %v451, %v449
    %v476 = vpack.c.b16 %v452, %v450
    %v477 = vpack.c.b16 %v455, %v453
    %v478 = vpack.c.b16 %v456, %v454
    %v479 = vpack.c.b16 %v459, %v457
    %v480 = vpack.c.b16 %v460, %v458
    %v481 = vpack.c.b16 %v463, %v461
    %v482 = vpack.c.b16 %v464, %v462
    %v483 = vpack.c.b16 %v467, %v465
    %v484 = vpack.c.b16 %v468, %v466
    %501 = vmatprep.subr.bf16.mxu0 %v470
    %502 = vmatpush1.bf16.msra.mxu0 %v469
    %503 = vmatprep.subr.bf16.mxu0 %v472
    %504 = vmatpush1.bf16.msra.mxu0 %v471
    %505 = vmatprep.subr.bf16.mxu0 %v474
    %506 = vmatpush1.bf16.msra.mxu0 %v473
    %507 = vmatprep.subr.bf16.mxu0 %v476
    %508 = vmatpush1.bf16.msra.mxu0 %v475
    %509 = vmatprep.subr.bf16.mxu0 %v478
    %510 = vmatpush1.bf16.msra.mxu0 %v477
    %511 = vmatprep.subr.bf16.mxu0 %v480
    %512 = vmatpush1.bf16.msra.mxu0 %v479
    %513 = vmatprep.subr.bf16.mxu0 %v482
    %514 = vmatpush1.bf16.msra.mxu0 %v481
    %515 = vmatprep.subr.bf16.mxu0 %v484
    %516 = vmatpush1.bf16.msra.mxu0 %v483
    %517 = vmatprep.subr.bf16.mxu0 0
    %518 = vmatpush1.bf16.msra.mxu0 0
    %519 = vmatprep.subr.bf16.mxu0 0
    %520 = vmatpush1.bf16.msra.mxu0 0
    %521 = vmatprep.subr.bf16.mxu0 0
    %522 = vmatpush1.bf16.msra.mxu0 0
    %523 = vmatprep.subr.bf16.mxu0 0
    %524 = vmatpush1.bf16.msra.mxu0 0
    %525 = vmatprep.subr.bf16.mxu0 0
    %526 = vmatpush1.bf16.msra.mxu0 0
    %527 = vmatprep.subr.bf16.mxu0 0
    %528 = vmatpush1.bf16.msra.mxu0 0
    %529 = vmatprep.subr.bf16.mxu0 0
    %530 = vmatpush1.bf16.msra.mxu0 0
    %531 = vmatprep.subr.bf16.mxu0 0
    %532 = vmatpush1.bf16.msra.mxu0 0
    %533 = vmatprep.mubr.bf16.mxu0 0
    %534 = vmatmul.mubr.bf16.gmra.mrb[0].mxu0 %v389
    %v535 = vpop.f32.mrb[0].mxu0
    %v536 = vadd.f32 %v318, %v535
    %v537 = vpop.f32.mrb[0].mxu0
    %v538 = vadd.f32 %v322, %v537
    %v539 = vpop.f32.mrb[0].mxu0
    %v540 = vadd.f32 %v318, %v539
    %v541 = vpop.f32.mrb[0].mxu0
    %v542 = vadd.f32 %v322, %v541
    %543 = vmatprep.mubr.bf16.mxu0 0
    %544 = vmatmul.mubr.bf16.gmra.mrb[0].mxu0 %v390
    %v545 = vpop.f32.mrb[0].mxu0
    %v546 = vadd.f32 %v318, %v545
    %v547 = vpop.f32.mrb[0].mxu0
    %v548 = vadd.f32 %v322, %v547
    %v549 = vpop.f32.mrb[0].mxu0
    %v550 = vadd.f32 %v318, %v549
    %v551 = vpop.f32.mrb[0].mxu0
    %v552 = vadd.f32 %v322, %v551
    %553 = vmatprep.mubr.bf16.mxu0 0
    %554 = vmatmul.mubr.bf16.gmra.mrb[0].mxu0 %v391
    %v555 = vpop.f32.mrb[0].mxu0
    %v556 = vadd.f32 %v318, %v555
    %v557 = vpop.f32.mrb[0].mxu0
    %v558 = vadd.f32 %v322, %v557
    %v559 = vpop.f32.mrb[0].mxu0
    %v560 = vadd.f32 %v318, %v559
    %v561 = vpop.f32.mrb[0].mxu0
    %v562 = vadd.f32 %v322, %v561
    %563 = vmatprep.mubr.bf16.mxu0 0
    %564 = vmatmul.mubr.bf16.gmra.mrb[0].mxu0 %v392
    %v565 = vpop.f32.mrb[0].mxu0
    %v566 = vadd.f32 %v318, %v565
    %v567 = vpop.f32.mrb[0].mxu0
    %v568 = vadd.f32 %v322, %v567
    %v569 = vpop.f32.mrb[0].mxu0
    %v570 = vadd.f32 %v318, %v569
    %v571 = vpop.f32.mrb[0].mxu0
    %v572 = vadd.f32 %v322, %v571
    %573 = vmatprep.mubr.bf16.mxu0 0
    %574 = vmatmul.mubr.bf16.gmra.mrb[0].mxu0 %v393
    %v575 = vpop.f32.mrb[0].mxu0
    %v576 = vadd.f32 %v318, %v575
    %v577 = vpop.f32.mrb[0].mxu0
    %v578 = vadd.f32 %v322, %v577
    %v579 = vpop.f32.mrb[0].mxu0
    %v580 = vadd.f32 %v318, %v579
    %v581 = vpop.f32.mrb[0].mxu0
    %v582 = vadd.f32 %v322, %v581
    %583 = vmatprep.mubr.bf16.mxu0 0
    %584 = vmatmul.mubr.bf16.gmra.mrb[0].mxu0 %v394
    %v585 = vpop.f32.mrb[0].mxu0
    %v586 = vadd.f32 %v318, %v585
    %v587 = vpop.f32.mrb[0].mxu0
    %v588 = vadd.f32 %v322, %v587
    %v589 = vpop.f32.mrb[0].mxu0
    %v590 = vadd.f32 %v318, %v589
    %v591 = vpop.f32.mrb[0].mxu0
    %v592 = vadd.f32 %v322, %v591
    %593 = vmatprep.mubr.bf16.mxu0 0
    %594 = vmatmul.mubr.bf16.gmra.mrb[0].mxu0 %v395
    %v595 = vpop.f32.mrb[0].mxu0
    %v596 = vadd.f32 %v318, %v595
    %v597 = vpop.f32.mrb[0].mxu0
    %v598 = vadd.f32 %v322, %v597
    %v599 = vpop.f32.mrb[0].mxu0
    %v600 = vadd.f32 %v318, %v599
    %v601 = vpop.f32.mrb[0].mxu0
    %v602 = vadd.f32 %v322, %v601
    %603 = vmatprep.mubr.bf16.mxu0 0
    %604 = vmatmul.mubr.bf16.gmra.mrb[0].mxu0 %v396
    %v605 = vpop.f32.mrb[0].mxu0
    %v606 = vadd.f32 %v318, %v605
    %v607 = vpop.f32.mrb[0].mxu0
    %v608 = vadd.f32 %v322, %v607
    %v609 = vpop.f32.mrb[0].mxu0
    %v610 = vadd.f32 %v318, %v609
    %v611 = vpop.f32.mrb[0].mxu0
    %v612 = vadd.f32 %v322, %v611
    %613 = vmatprep.mubr.bf16.mxu0 0
    %614 = vmatmul.mubr.bf16.gmra.mrb[0].mxu0 %v397
    %v615 = vpop.f32.mrb[0].mxu0
    %v616 = vadd.f32 %v318, %v615
    %v617 = vpop.f32.mrb[0].mxu0
    %v618 = vadd.f32 %v322, %v617
    %v619 = vpop.f32.mrb[0].mxu0
    %v620 = vadd.f32 %v318, %v619
    %v621 = vpop.f32.mrb[0].mxu0
    %v622 = vadd.f32 %v322, %v621
    %623 = vmatprep.mubr.bf16.mxu0 0
    %624 = vmatmul.mubr.bf16.gmra.mrb[0].mxu0 %v398
    %v625 = vpop.f32.mrb[0].mxu0
    %v626 = vadd.f32 %v318, %v625
    %v627 = vpop.f32.mrb[0].mxu0
    %v628 = vadd.f32 %v322, %v627
    %v629 = vpop.f32.mrb[0].mxu0
    %v630 = vadd.f32 %v318, %v629
    %v631 = vpop.f32.mrb[0].mxu0
    %v632 = vadd.f32 %v322, %v631
    %633 = vmatprep.mubr.bf16.mxu0 0
    %634 = vmatmul.mubr.bf16.gmra.mrb[0].mxu0 %v399
    %v635 = vpop.f32.mrb[0].mxu0
    %v636 = vadd.f32 %v318, %v635
    %v637 = vpop.f32.mrb[0].mxu0
    %v638 = vadd.f32 %v322, %v637
    %v639 = vpop.f32.mrb[0].mxu0
    %v640 = vadd.f32 %v318, %v639
    %v641 = vpop.f32.mrb[0].mxu0
    %v642 = vadd.f32 %v322, %v641
    %643 = vmatprep.mubr.bf16.mxu0 0
    %644 = vmatmul.mubr.bf16.gmra.mrb[0].mxu0 %v400
    %v645 = vpop.f32.mrb[0].mxu0
    %v646 = vadd.f32 %v318, %v645
    %v647 = vpop.f32.mrb[0].mxu0
    %v648 = vadd.f32 %v322, %v647
    %v649 = vpop.f32.mrb[0].mxu0
    %v650 = vadd.f32 %v318, %v649
    %v651 = vpop.f32.mrb[0].mxu0
    %v652 = vadd.f32 %v322, %v651
    %653 = vmatprep.mubr.bf16.mxu0 0
    %654 = vmatmul.mubr.bf16.gmra.mrb[0].mxu0 %v401
    %v655 = vpop.f32.mrb[0].mxu0
    %v656 = vadd.f32 %v318, %v655
    %v657 = vpop.f32.mrb[0].mxu0
    %v658 = vadd.f32 %v322, %v657
    %v659 = vpop.f32.mrb[0].mxu0
    %v660 = vadd.f32 %v318, %v659
    %v661 = vpop.f32.mrb[0].mxu0
    %v662 = vadd.f32 %v322, %v661
    %663 = vmatprep.mubr.bf16.mxu0 0
    %664 = vmatmul.mubr.bf16.gmra.mrb[0].mxu0 %v402
    %v665 = vpop.f32.mrb[0].mxu0
    %v666 = vadd.f32 %v318, %v665
    %v667 = vpop.f32.mrb[0].mxu0
    %v668 = vadd.f32 %v322, %v667
    %v669 = vpop.f32.mrb[0].mxu0
    %v670 = vadd.f32 %v318, %v669
    %v671 = vpop.f32.mrb[0].mxu0
    %v672 = vadd.f32 %v322, %v671
    %673 = vmatprep.mubr.bf16.mxu0 0
    %674 = vmatmul.mubr.bf16.gmra.mrb[0].mxu0 %v403
    %v675 = vpop.f32.mrb[0].mxu0
    %v676 = vadd.f32 %v318, %v675
    %v677 = vpop.f32.mrb[0].mxu0
    %v678 = vadd.f32 %v322, %v677
    %v679 = vpop.f32.mrb[0].mxu0
    %v680 = vadd.f32 %v318, %v679
    %v681 = vpop.f32.mrb[0].mxu0
    %v682 = vadd.f32 %v322, %v681
    %683 = vmatprep.mubr.bf16.mxu0 0
    %684 = vmatmul.mubr.bf16.gmra.mrb[0].mxu0 %v404
    %v685 = vpop.f32.mrb[0].mxu0
    %v686 = vadd.f32 %v318, %v685
    %v687 = vpop.f32.mrb[0].mxu0
    %v688 = vadd.f32 %v322, %v687
    %v689 = vpop.f32.mrb[0].mxu0
    %v690 = vadd.f32 %v318, %v689
    %v691 = vpop.f32.mrb[0].mxu0
    %v692 = vadd.f32 %v322, %v691
    %693 = vdwg.mxu0
    %v694 = vpack.c.bf16 %v291, %v291
    %v695 = vpack.c.bf16 %v294, %v294
    %v696 = vpack.c.bf16 %v540, %v536
    %v697 = vpack.c.bf16 %v550, %v546
    %v698 = vpack.c.bf16 %v560, %v556
    %v699 = vpack.c.bf16 %v570, %v566
    %v700 = vpack.c.bf16 %v580, %v576
    %v701 = vpack.c.bf16 %v590, %v586
    %v702 = vpack.c.bf16 %v600, %v596
    %v703 = vpack.c.bf16 %v610, %v606
    %v704 = vpack.c.bf16 %v620, %v616
    %v705 = vpack.c.bf16 %v630, %v626
    %v706 = vpack.c.bf16 %v640, %v636
    %v707 = vpack.c.bf16 %v650, %v646
    %v708 = vpack.c.bf16 %v660, %v656
    %v709 = vpack.c.bf16 %v670, %v666
    %v710 = vpack.c.bf16 %v680, %v676
    %v711 = vpack.c.bf16 %v690, %v686
    %v712 = vpack.c.bf16 %v542, %v538
    %v713 = vpack.c.bf16 %v552, %v548
    %v714 = vpack.c.bf16 %v562, %v558
    %v715 = vpack.c.bf16 %v572, %v568
    %v716 = vpack.c.bf16 %v582, %v578
    %v717 = vpack.c.bf16 %v592, %v588
    %v718 = vpack.c.bf16 %v602, %v598
    %v719 = vpack.c.bf16 %v612, %v608
    %v720 = vpack.c.bf16 %v622, %v618
    %v721 = vpack.c.bf16 %v632, %v628
    %v722 = vpack.c.bf16 %v642, %v638
    %v723 = vpack.c.bf16 %v652, %v648
    %v724 = vpack.c.bf16 %v662, %v658
    %v725 = vpack.c.bf16 %v672, %v668
    %v726 = vpack.c.bf16 %v682, %v678
    %v727 = vpack.c.bf16 %v692, %v688
    %v728 = vlaneseq
    %v729 = vand.u32 %v728, 127
    %vm730 = vcmp.lt.s32.totalorder %v729, 16
    %v731 = vsel %vm730, 0.0, -1e+30
    %732 = vmatprep.subr.bf16.mxu0 0
    %733 = vmatpush1.bf16.xpose.msra.mxu0 %v696
    %734 = vmatprep.subr.bf16.mxu0 0
    %735 = vmatpush1.bf16.xpose.msra.mxu0 %v697
    %736 = vmatprep.subr.bf16.mxu0 0
    %737 = vmatpush1.bf16.xpose.msra.mxu0 %v698
    %738 = vmatprep.subr.bf16.mxu0 0
    %739 = vmatpush1.bf16.xpose.msra.mxu0 %v699
    %740 = vmatprep.subr.bf16.mxu0 0
    %741 = vmatpush1.bf16.xpose.msra.mxu0 %v700
    %742 = vmatprep.subr.bf16.mxu0 0
    %743 = vmatpush1.bf16.xpose.msra.mxu0 %v701
    %744 = vmatprep.subr.bf16.mxu0 0
    %745 = vmatpush1.bf16.xpose.msra.mxu0 %v702
    %746 = vmatprep.subr.bf16.mxu0 0
    %747 = vmatpush1.bf16.xpose.msra.mxu0 %v703
    %748 = vmatprep.subr.bf16.mxu0 0
    %749 = vmatpush1.bf16.xpose.msra.mxu0 0
    %750 = vmatprep.subr.bf16.mxu0 0
    %751 = vmatpush1.bf16.xpose.msra.mxu0 0
    %752 = vmatprep.subr.bf16.mxu0 0
    %753 = vmatpush1.bf16.xpose.msra.mxu0 0
    %754 = vmatprep.subr.bf16.mxu0 0
    %755 = vmatpush1.bf16.xpose.msra.mxu0 0
    %756 = vmatprep.subr.bf16.mxu0 0
    %757 = vmatpush1.bf16.xpose.msra.mxu0 0
    %758 = vmatprep.subr.bf16.mxu0 0
    %759 = vmatpush1.bf16.xpose.msra.mxu0 0
    %760 = vmatprep.subr.bf16.mxu0 0
    %761 = vmatpush1.bf16.xpose.msra.mxu0 0
    %762 = vmatprep.subr.bf16.mxu0 0
    %763 = vmatpush1.bf16.xpose.msra.mxu0 0
    %764 = vmatprep.mubr.bf16.mxu0 0
    %765 = vmatmul.mubr.bf16.gmra.mrb[0].mxu0 %v694
    %v766 = vpop.f32.mrb[0].mxu0
    %v767 = vadd.f32 0.0, %v766
    %v768 = vpop.f32.mrb[0].mxu0
    %v769 = vpop.f32.mrb[0].mxu0
    %v770 = vpop.f32.mrb[0].mxu0
    %771 = vdwg.mxu0
    %772 = vmatprep.subr.bf16.mxu0 0
    %773 = vmatpush1.bf16.xpose.msra.mxu0 %v704
    %774 = vmatprep.subr.bf16.mxu0 0
    %775 = vmatpush1.bf16.xpose.msra.mxu0 %v705
    %776 = vmatprep.subr.bf16.mxu0 0
    %777 = vmatpush1.bf16.xpose.msra.mxu0 %v706
    %778 = vmatprep.subr.bf16.mxu0 0
    %779 = vmatpush1.bf16.xpose.msra.mxu0 %v707
    %780 = vmatprep.subr.bf16.mxu0 0
    %781 = vmatpush1.bf16.xpose.msra.mxu0 %v708
    %782 = vmatprep.subr.bf16.mxu0 0
    %783 = vmatpush1.bf16.xpose.msra.mxu0 %v709
    %784 = vmatprep.subr.bf16.mxu0 0
    %785 = vmatpush1.bf16.xpose.msra.mxu0 %v710
    %786 = vmatprep.subr.bf16.mxu0 0
    %787 = vmatpush1.bf16.xpose.msra.mxu0 %v711
    %788 = vmatprep.subr.bf16.mxu0 0
    %789 = vmatpush1.bf16.xpose.msra.mxu0 0
    %790 = vmatprep.subr.bf16.mxu0 0
    %791 = vmatpush1.bf16.xpose.msra.mxu0 0
    %792 = vmatprep.subr.bf16.mxu0 0
    %793 = vmatpush1.bf16.xpose.msra.mxu0 0
    %794 = vmatprep.subr.bf16.mxu0 0
    %795 = vmatpush1.bf16.xpose.msra.mxu0 0
    %796 = vmatprep.subr.bf16.mxu0 0
    %797 = vmatpush1.bf16.xpose.msra.mxu0 0
    %798 = vmatprep.subr.bf16.mxu0 0
    %799 = vmatpush1.bf16.xpose.msra.mxu0 0
    %800 = vmatprep.subr.bf16.mxu0 0
    %801 = vmatpush1.bf16.xpose.msra.mxu0 0
    %802 = vmatprep.subr.bf16.mxu0 0
    %803 = vmatpush1.bf16.xpose.msra.mxu0 0
    %804 = vmatprep.mubr.bf16.mxu0 0
    %805 = vmatmul.mubr.bf16.gmra.mrb[0].mxu0 %v695
    %v806 = vpop.f32.mrb[0].mxu0
    %v807 = vadd.f32 0.0, %v806
    %v808 = vpop.f32.mrb[0].mxu0
    %v809 = vpop.f32.mrb[0].mxu0
    %v810 = vpop.f32.mrb[0].mxu0
    %811 = vdwg.mxu0
    %v812 = vmul.f32 %v767, 0.17677669
    %v813 = vmul.f32 %v807, 0.17677669
    %v814 = vadd.f32 %v812, %v731
    %v815 = vadd.f32 %v813, %v731
    %816 = vmax.xlane.f32.xlu0 %v814
    %v817 = vpop.xlane.xlu0 %816
    %818 = vmax.xlane.f32.xlu0 %v815
    %v819 = vpop.xlane.xlu0 %818
    %v820 = vsub.f32 %v814, %v817
    %v821 = vsub.f32 %v815, %v819
    %v822 = vmul.f32 %v820, 1.442695
    %v823 = vpow.pop %v822
    %v824 = vmul.f32 %v821, 1.442695
    %v825 = vpow.pop %v824
    %826 = vadd.xlane.f32.xlu0 %v823
    %v827 = vpop.xlane.xlu0 %826
    %828 = vadd.xlane.f32.xlu0 %v825
    %v829 = vpop.xlane.xlu0 %828
    %v830 = vrcp.pop %v827
    %v831 = vrcp.pop %v829
    %v832 = vmul.f32 %v823, %v830
    %v833 = vmul.f32 %v825, %v831
    %v834 = vpack.c.bf16 %v832, %v832
    %v835 = vpack.c.bf16 %v833, %v833
    %836 = vmatprep.subr.bf16.mxu0 0
    %837 = vmatpush1.bf16.msra.mxu0 %v712
    %838 = vmatprep.subr.bf16.mxu0 0
    %839 = vmatpush1.bf16.msra.mxu0 %v713
    %840 = vmatprep.subr.bf16.mxu0 0
    %841 = vmatpush1.bf16.msra.mxu0 %v714
    %842 = vmatprep.subr.bf16.mxu0 0
    %843 = vmatpush1.bf16.msra.mxu0 %v715
    %844 = vmatprep.subr.bf16.mxu0 0
    %845 = vmatpush1.bf16.msra.mxu0 %v716
    %846 = vmatprep.subr.bf16.mxu0 0
    %847 = vmatpush1.bf16.msra.mxu0 %v717
    %848 = vmatprep.subr.bf16.mxu0 0
    %849 = vmatpush1.bf16.msra.mxu0 %v718
    %850 = vmatprep.subr.bf16.mxu0 0
    %851 = vmatpush1.bf16.msra.mxu0 %v719
    %852 = vmatprep.subr.bf16.mxu0 0
    %853 = vmatpush1.bf16.msra.mxu0 0
    %854 = vmatprep.subr.bf16.mxu0 0
    %855 = vmatpush1.bf16.msra.mxu0 0
    %856 = vmatprep.subr.bf16.mxu0 0
    %857 = vmatpush1.bf16.msra.mxu0 0
    %858 = vmatprep.subr.bf16.mxu0 0
    %859 = vmatpush1.bf16.msra.mxu0 0
    %860 = vmatprep.subr.bf16.mxu0 0
    %861 = vmatpush1.bf16.msra.mxu0 0
    %862 = vmatprep.subr.bf16.mxu0 0
    %863 = vmatpush1.bf16.msra.mxu0 0
    %864 = vmatprep.subr.bf16.mxu0 0
    %865 = vmatpush1.bf16.msra.mxu0 0
    %866 = vmatprep.subr.bf16.mxu0 0
    %867 = vmatpush1.bf16.msra.mxu0 0
    %868 = vmatprep.mubr.bf16.mxu0 0
    %869 = vmatmul.mubr.bf16.gmra.mrb[0].mxu0 %v834
    %v870 = vpop.f32.mrb[0].mxu0
    %v871 = vadd.f32 0.0, %v870
    %v872 = vpop.f32.mrb[0].mxu0
    %v873 = vpop.f32.mrb[0].mxu0
    %v874 = vpop.f32.mrb[0].mxu0
    %875 = vdwg.mxu0
    %876 = vmatprep.subr.bf16.mxu0 0
    %877 = vmatpush1.bf16.msra.mxu0 %v720
    %878 = vmatprep.subr.bf16.mxu0 0
    %879 = vmatpush1.bf16.msra.mxu0 %v721
    %880 = vmatprep.subr.bf16.mxu0 0
    %881 = vmatpush1.bf16.msra.mxu0 %v722
    %882 = vmatprep.subr.bf16.mxu0 0
    %883 = vmatpush1.bf16.msra.mxu0 %v723
    %884 = vmatprep.subr.bf16.mxu0 0
    %885 = vmatpush1.bf16.msra.mxu0 %v724
    %886 = vmatprep.subr.bf16.mxu0 0
    %887 = vmatpush1.bf16.msra.mxu0 %v725
    %888 = vmatprep.subr.bf16.mxu0 0
    %889 = vmatpush1.bf16.msra.mxu0 %v726
    %890 = vmatprep.subr.bf16.mxu0 0
    %891 = vmatpush1.bf16.msra.mxu0 %v727
    %892 = vmatprep.subr.bf16.mxu0 0
    %893 = vmatpush1.bf16.msra.mxu0 0
    %894 = vmatprep.subr.bf16.mxu0 0
    %895 = vmatpush1.bf16.msra.mxu0 0
    %896 = vmatprep.subr.bf16.mxu0 0
    %897 = vmatpush1.bf16.msra.mxu0 0
    %898 = vmatprep.subr.bf16.mxu0 0
    %899 = vmatpush1.bf16.msra.mxu0 0
    %900 = vmatprep.subr.bf16.mxu0 0
    %901 = vmatpush1.bf16.msra.mxu0 0
    %902 = vmatprep.subr.bf16.mxu0 0
    %903 = vmatpush1.bf16.msra.mxu0 0
    %904 = vmatprep.subr.bf16.mxu0 0
    %905 = vmatpush1.bf16.msra.mxu0 0
    %906 = vmatprep.subr.bf16.mxu0 0
    %907 = vmatpush1.bf16.msra.mxu0 0
    %908 = vmatprep.mubr.bf16.mxu0 0
    %909 = vmatmul.mubr.bf16.gmra.mrb[0].mxu0 %v835
    %v910 = vpop.f32.mrb[0].mxu0
    %v911 = vadd.f32 0.0, %v910
    %v912 = vpop.f32.mrb[0].mxu0
    %v913 = vpop.f32.mrb[0].mxu0
    %v914 = vpop.f32.mrb[0].mxu0
    %915 = vdwg.mxu0
    %v916 = vpack.c.bf16 %v911, %v871
    %v917 = vld [vmem:[#allocation10] sm:$0xf]
    %v918 = vld [vmem:[#allocation10 + $0x4] sm:$0xf]
    %v919 = vld [vmem:[#allocation10 + $0x8] sm:$0xf]
    %v920 = vld [vmem:[#allocation10 + $0xc] sm:$0xf]
    %v921 = vld [vmem:[#allocation10 + $0x10] sm:$0xf]
    %v922 = vld [vmem:[#allocation10 + $0x14] sm:$0xf]
    %v923 = vld [vmem:[#allocation10 + $0x18] sm:$0xf]
    %v924 = vld [vmem:[#allocation10 + $0x1c] sm:$0xf]
    %v925 = vld [vmem:[#allocation10 + $0x20] sm:$0xf]
    %v926 = vld [vmem:[#allocation10 + $0x24] sm:$0xf]
    %v927 = vld [vmem:[#allocation10 + $0x28] sm:$0xf]
    %v928 = vld [vmem:[#allocation10 + $0x2c] sm:$0xf]
    %v929 = vld [vmem:[#allocation10 + $0x30] sm:$0xf]
    %v930 = vld [vmem:[#allocation10 + $0x34] sm:$0xf]
    %v931 = vld [vmem:[#allocation10 + $0x38] sm:$0xf]
    %v932 = vld [vmem:[#allocation10 + $0x3c] sm:$0xf]
    %v933 = vld [vmem:[%s7] sm:$0x1]
    %v935 = vlaneseq
    %v936 = vshrl.u32 %v935, 7
    %v937 = vsub.s32 0, %v936
    %v938 = vrot.slane %v933, %v937
    %v956 = vunpack.c.l.b16 %v917
    %v957 = vunpack.c.l.b16 %v918
    %v958 = vunpack.c.l.b16 %v919
    %v959 = vunpack.c.l.b16 %v920
    %v960 = vunpack.c.l.b16 %v921
    %v961 = vunpack.c.l.b16 %v922
    %v962 = vunpack.c.l.b16 %v923
    %v963 = vunpack.c.l.b16 %v924
    %v964 = vunpack.c.l.b16 %v925
    %v965 = vunpack.c.l.b16 %v926
    %v966 = vunpack.c.l.b16 %v927
    %v967 = vunpack.c.l.b16 %v928
    %v968 = vunpack.c.l.b16 %v929
    %v969 = vunpack.c.l.b16 %v930
    %v970 = vunpack.c.l.b16 %v931
    %v971 = vunpack.c.l.b16 %v932
    %v972 = vpack.c.b16 %v957, %v956
    %v973 = vpack.c.b16 %v959, %v958
    %v974 = vpack.c.b16 %v961, %v960
    %v975 = vpack.c.b16 %v963, %v962
    %v976 = vpack.c.b16 %v965, %v964
    %v977 = vpack.c.b16 %v967, %v966
    %v978 = vpack.c.b16 %v969, %v968
    %v979 = vpack.c.b16 %v971, %v970
    %988 = vmatprep.subr.bf16.mxu0 0
    %989 = vmatpush1.bf16.msra.mxu0 %v972
    %990 = vmatprep.subr.bf16.mxu0 0
    %991 = vmatpush1.bf16.msra.mxu0 %v973
    %992 = vmatprep.subr.bf16.mxu0 0
    %993 = vmatpush1.bf16.msra.mxu0 %v974
    %994 = vmatprep.subr.bf16.mxu0 0
    %995 = vmatpush1.bf16.msra.mxu0 %v975
    %996 = vmatprep.subr.bf16.mxu0 0
    %997 = vmatpush1.bf16.msra.mxu0 %v976
    %998 = vmatprep.subr.bf16.mxu0 0
    %999 = vmatpush1.bf16.msra.mxu0 %v977
    %1000 = vmatprep.subr.bf16.mxu0 0
    %1001 = vmatpush1.bf16.msra.mxu0 %v978
    %1002 = vmatprep.subr.bf16.mxu0 0
    %1003 = vmatpush1.bf16.msra.mxu0 %v979
    %1004 = vmatprep.subr.bf16.mxu0 0
    %1005 = vmatpush1.bf16.msra.mxu0 0
    %1006 = vmatprep.subr.bf16.mxu0 0
    %1007 = vmatpush1.bf16.msra.mxu0 0
    %1008 = vmatprep.subr.bf16.mxu0 0
    %1009 = vmatpush1.bf16.msra.mxu0 0
    %1010 = vmatprep.subr.bf16.mxu0 0
    %1011 = vmatpush1.bf16.msra.mxu0 0
    %1012 = vmatprep.subr.bf16.mxu0 0
    %1013 = vmatpush1.bf16.msra.mxu0 0
    %1014 = vmatprep.subr.bf16.mxu0 0
    %1015 = vmatpush1.bf16.msra.mxu0 0
    %1016 = vmatprep.subr.bf16.mxu0 0
    %1017 = vmatpush1.bf16.msra.mxu0 0
    %1018 = vmatprep.subr.bf16.mxu0 0
    %1019 = vmatpush1.bf16.msra.mxu0 0
    %1020 = vmatprep.mubr.bf16.mxu0 0
    %1021 = vmatmul.mubr.bf16.gmra.mrb[0].mxu0 %v916
    %v1022 = vpop.f32.mrb[0].mxu0
    %v1023 = vadd.f32 %v938, %v1022
    %v1024 = vpop.f32.mrb[0].mxu0
    %v1025 = vpop.f32.mrb[0].mxu0
    %v1026 = vadd.f32 %v938, %v1025
    %v1027 = vpop.f32.mrb[0].mxu0
    %1028 = vdwg.mxu0
    %vm1029 = vcmp.lt.s32.totalorder %v729, 32
    %v1030 = vsel %vm1029, 1, 0
    %v1031 = vcvt.s32.f32 %v1030
    %v1032 = vadd.f32 %v1023, %v150
    %v1033 = vadd.f32 %v1026, %v151
    %v1034 = vld [vmem:[%s8] sm:$0x1]
    %v1035 = vld [vmem:[%s9] sm:$0x1]
    %1036 = vadd.xlane.f32.xlu0 %v1032
    %v1037 = vpop.xlane.xlu0 %1036
    %1038 = vadd.xlane.f32.xlu0 %v1033
    %v1039 = vpop.xlane.xlu0 %1038
    %v1040 = vmul.f32 %v1037, 0.03125
    %v1041 = vmul.f32 %v1039, 0.03125
    %v1042 = vsub.f32 %v1032, %v1040
    %v1043 = vsub.f32 %v1033, %v1041
    %v1044 = vmul.f32 %v1042, %v1031
    %v1045 = vmul.f32 %v1043, %v1031
    %v1046 = vmul.f32 %v1044, %v1044
    %v1047 = vmul.f32 %v1045, %v1045
    %1048 = vadd.xlane.f32.xlu0 %v1046
    %v1049 = vpop.xlane.xlu0 %1048
    %1050 = vadd.xlane.f32.xlu0 %v1047
    %v1051 = vpop.xlane.xlu0 %1050
    %v1052 = vmul.f32 %v1049, 0.03125
    %v1053 = vmul.f32 %v1051, 0.03125
    %v1054 = vadd.f32 %v1052, 1e-05
    %v1055 = vadd.f32 %v1053, 1e-05
    %v1056 = vrsqrt.pop %v1054
    %v1057 = vrsqrt.pop %v1055
    %v1058 = vmul.f32 %v1044, %v1056
    %v1059 = vmul.f32 %v1045, %v1057
    %v1061 = vlaneseq
    %v1062 = vshrl.u32 %v1061, 7
    %v1063 = vsub.s32 0, %v1062
    %v1064 = vrot.slane %v1034, %v1063
    %v1066 = vmul.f32 %v1058, %v1064
    %v1067 = vmul.f32 %v1059, %v1064
    %v1069 = vlaneseq
    %v1070 = vshrl.u32 %v1069, 7
    %v1071 = vsub.s32 0, %v1070
    %v1072 = vrot.slane %v1035, %v1071
    %v1074 = vadd.f32 %v1066, %v1072
    %v1075 = vadd.f32 %v1067, %v1072
    %v1076 = vpack.c.bf16 %v1075, %v1074
    %v1077 = vld [vmem:[#allocation11] sm:$0xf]
    %v1078 = vld [vmem:[#allocation11 + $0x4] sm:$0xf]
    %v1079 = vld [vmem:[#allocation11 + $0x8] sm:$0xf]
    %v1080 = vld [vmem:[#allocation11 + $0xc] sm:$0xf]
    %v1081 = vld [vmem:[#allocation11 + $0x10] sm:$0xf]
    %v1082 = vld [vmem:[#allocation11 + $0x14] sm:$0xf]
    %v1083 = vld [vmem:[#allocation11 + $0x18] sm:$0xf]
    %v1084 = vld [vmem:[#allocation11 + $0x1c] sm:$0xf]
    %v1085 = vld [vmem:[#allocation11 + $0x20] sm:$0xf]
    %v1086 = vld [vmem:[#allocation11 + $0x24] sm:$0xf]
    %v1087 = vld [vmem:[#allocation11 + $0x28] sm:$0xf]
    %v1088 = vld [vmem:[#allocation11 + $0x2c] sm:$0xf]
    %v1089 = vld [vmem:[#allocation11 + $0x30] sm:$0xf]
    %v1090 = vld [vmem:[#allocation11 + $0x34] sm:$0xf]
    %v1091 = vld [vmem:[#allocation11 + $0x38] sm:$0xf]
    %v1092 = vld [vmem:[#allocation11 + $0x3c] sm:$0xf]
    %v1093 = vld [vmem:[%s11] sm:$0x1]
    %v1095 = vlaneseq
    %v1096 = vshrl.u32 %v1095, 7
    %v1097 = vsub.s32 0, %v1096
    %v1098 = vrot.slane %v1093, %v1097
    %v1116 = vunpack.c.l.b16 %v1077
    %v1117 = vunpack.c.l.b16 %v1078
    %v1118 = vunpack.c.l.b16 %v1079
    %v1119 = vunpack.c.l.b16 %v1080
    %v1120 = vunpack.c.l.b16 %v1081
    %v1121 = vunpack.c.l.b16 %v1082
    %v1122 = vunpack.c.l.b16 %v1083
    %v1123 = vunpack.c.l.b16 %v1084
    %v1124 = vunpack.c.l.b16 %v1085
    %v1125 = vunpack.c.l.b16 %v1086
    %v1126 = vunpack.c.l.b16 %v1087
    %v1127 = vunpack.c.l.b16 %v1088
    %v1128 = vunpack.c.l.b16 %v1089
    %v1129 = vunpack.c.l.b16 %v1090
    %v1130 = vunpack.c.l.b16 %v1091
    %v1131 = vunpack.c.l.b16 %v1092
    %v1132 = vpack.c.b16 %v1117, %v1116
    %v1133 = vpack.c.b16 %v1119, %v1118
    %v1134 = vpack.c.b16 %v1121, %v1120
    %v1135 = vpack.c.b16 %v1123, %v1122
    %v1136 = vpack.c.b16 %v1125, %v1124
    %v1137 = vpack.c.b16 %v1127, %v1126
    %v1138 = vpack.c.b16 %v1129, %v1128
    %v1139 = vpack.c.b16 %v1131, %v1130
    %1148 = vmatprep.subr.bf16.mxu0 0
    %1149 = vmatpush1.bf16.msra.mxu0 %v1132
    %1150 = vmatprep.subr.bf16.mxu0 0
    %1151 = vmatpush1.bf16.msra.mxu0 %v1133
    %1152 = vmatprep.subr.bf16.mxu0 0
    %1153 = vmatpush1.bf16.msra.mxu0 %v1134
    %1154 = vmatprep.subr.bf16.mxu0 0
    %1155 = vmatpush1.bf16.msra.mxu0 %v1135
    %1156 = vmatprep.subr.bf16.mxu0 0
    %1157 = vmatpush1.bf16.msra.mxu0 %v1136
    %1158 = vmatprep.subr.bf16.mxu0 0
    %1159 = vmatpush1.bf16.msra.mxu0 %v1137
    %1160 = vmatprep.subr.bf16.mxu0 0
    %1161 = vmatpush1.bf16.msra.mxu0 %v1138
    %1162 = vmatprep.subr.bf16.mxu0 0
    %1163 = vmatpush1.bf16.msra.mxu0 %v1139
    %1164 = vmatprep.subr.bf16.mxu0 0
    %1165 = vmatpush1.bf16.msra.mxu0 0
    %1166 = vmatprep.subr.bf16.mxu0 0
    %1167 = vmatpush1.bf16.msra.mxu0 0
    %1168 = vmatprep.subr.bf16.mxu0 0
    %1169 = vmatpush1.bf16.msra.mxu0 0
    %1170 = vmatprep.subr.bf16.mxu0 0
    %1171 = vmatpush1.bf16.msra.mxu0 0
    %1172 = vmatprep.subr.bf16.mxu0 0
    %1173 = vmatpush1.bf16.msra.mxu0 0
    %1174 = vmatprep.subr.bf16.mxu0 0
    %1175 = vmatpush1.bf16.msra.mxu0 0
    %1176 = vmatprep.subr.bf16.mxu0 0
    %1177 = vmatpush1.bf16.msra.mxu0 0
    %1178 = vmatprep.subr.bf16.mxu0 0
    %1179 = vmatpush1.bf16.msra.mxu0 0
    %1180 = vmatprep.mubr.bf16.mxu0 0
    %1181 = vmatmul.mubr.bf16.gmra.mrb[0].mxu0 %v1076
    %v1182 = vpop.f32.mrb[0].mxu0
    %v1183 = vadd.f32 %v1098, %v1182
    %v1184 = vpop.f32.mrb[0].mxu0
    %v1185 = vpop.f32.mrb[0].mxu0
    %v1186 = vadd.f32 %v1098, %v1185
    %v1187 = vpop.f32.mrb[0].mxu0
    %1188 = vdwg.mxu0
    %v1189 = vmax.f32 %v1183, 0.0
    %v1190 = vmax.f32 %v1186, 0.0
    %v1191 = vpack.c.bf16 %v1190, %v1189
    %v1192 = vld [vmem:[#allocation13] sm:$0xf]
    %v1193 = vld [vmem:[#allocation13 + $0x4] sm:$0xf]
    %v1194 = vld [vmem:[#allocation13 + $0x8] sm:$0xf]
    %v1195 = vld [vmem:[#allocation13 + $0xc] sm:$0xf]
    %v1196 = vld [vmem:[#allocation13 + $0x10] sm:$0xf]
    %v1197 = vld [vmem:[#allocation13 + $0x14] sm:$0xf]
    %v1198 = vld [vmem:[#allocation13 + $0x18] sm:$0xf]
    %v1199 = vld [vmem:[#allocation13 + $0x1c] sm:$0xf]
    %v1200 = vld [vmem:[#allocation13 + $0x20] sm:$0xf]
    %v1201 = vld [vmem:[#allocation13 + $0x24] sm:$0xf]
    %v1202 = vld [vmem:[#allocation13 + $0x28] sm:$0xf]
    %v1203 = vld [vmem:[#allocation13 + $0x2c] sm:$0xf]
    %v1204 = vld [vmem:[#allocation13 + $0x30] sm:$0xf]
    %v1205 = vld [vmem:[#allocation13 + $0x34] sm:$0xf]
    %v1206 = vld [vmem:[#allocation13 + $0x38] sm:$0xf]
    %v1207 = vld [vmem:[#allocation13 + $0x3c] sm:$0xf]
    %v1208 = vld [vmem:[%s13] sm:$0x1]
    %v1210 = vlaneseq
    %v1211 = vshrl.u32 %v1210, 7
    %v1212 = vsub.s32 0, %v1211
    %v1213 = vrot.slane %v1208, %v1212
    %v1231 = vunpack.c.l.b16 %v1192
    %v1232 = vunpack.c.l.b16 %v1193
    %v1233 = vunpack.c.l.b16 %v1194
    %v1234 = vunpack.c.l.b16 %v1195
    %v1235 = vunpack.c.l.b16 %v1196
    %v1236 = vunpack.c.l.b16 %v1197
    %v1237 = vunpack.c.l.b16 %v1198
    %v1238 = vunpack.c.l.b16 %v1199
    %v1239 = vunpack.c.l.b16 %v1200
    %v1240 = vunpack.c.l.b16 %v1201
    %v1241 = vunpack.c.l.b16 %v1202
    %v1242 = vunpack.c.l.b16 %v1203
    %v1243 = vunpack.c.l.b16 %v1204
    %v1244 = vunpack.c.l.b16 %v1205
    %v1245 = vunpack.c.l.b16 %v1206
    %v1246 = vunpack.c.l.b16 %v1207
    %v1247 = vpack.c.b16 %v1232, %v1231
    %v1248 = vpack.c.b16 %v1234, %v1233
    %v1249 = vpack.c.b16 %v1236, %v1235
    %v1250 = vpack.c.b16 %v1238, %v1237
    %v1251 = vpack.c.b16 %v1240, %v1239
    %v1252 = vpack.c.b16 %v1242, %v1241
    %v1253 = vpack.c.b16 %v1244, %v1243
    %v1254 = vpack.c.b16 %v1246, %v1245
    %1263 = vmatprep.subr.bf16.mxu0 0
    %1264 = vmatpush1.bf16.msra.mxu0 %v1247
    %1265 = vmatprep.subr.bf16.mxu0 0
    %1266 = vmatpush1.bf16.msra.mxu0 %v1248
    %1267 = vmatprep.subr.bf16.mxu0 0
    %1268 = vmatpush1.bf16.msra.mxu0 %v1249
    %1269 = vmatprep.subr.bf16.mxu0 0
    %1270 = vmatpush1.bf16.msra.mxu0 %v1250
    %1271 = vmatprep.subr.bf16.mxu0 0
    %1272 = vmatpush1.bf16.msra.mxu0 %v1251
    %1273 = vmatprep.subr.bf16.mxu0 0
    %1274 = vmatpush1.bf16.msra.mxu0 %v1252
    %1275 = vmatprep.subr.bf16.mxu0 0
    %1276 = vmatpush1.bf16.msra.mxu0 %v1253
    %1277 = vmatprep.subr.bf16.mxu0 0
    %1278 = vmatpush1.bf16.msra.mxu0 %v1254
    %1279 = vmatprep.subr.bf16.mxu0 0
    %1280 = vmatpush1.bf16.msra.mxu0 0
    %1281 = vmatprep.subr.bf16.mxu0 0
    %1282 = vmatpush1.bf16.msra.mxu0 0
    %1283 = vmatprep.subr.bf16.mxu0 0
    %1284 = vmatpush1.bf16.msra.mxu0 0
    %1285 = vmatprep.subr.bf16.mxu0 0
    %1286 = vmatpush1.bf16.msra.mxu0 0
    %1287 = vmatprep.subr.bf16.mxu0 0
    %1288 = vmatpush1.bf16.msra.mxu0 0
    %1289 = vmatprep.subr.bf16.mxu0 0
    %1290 = vmatpush1.bf16.msra.mxu0 0
    %1291 = vmatprep.subr.bf16.mxu0 0
    %1292 = vmatpush1.bf16.msra.mxu0 0
    %1293 = vmatprep.subr.bf16.mxu0 0
    %1294 = vmatpush1.bf16.msra.mxu0 0
    %1295 = vmatprep.mubr.bf16.mxu0 0
    %1296 = vmatmul.mubr.bf16.gmra.mrb[0].mxu0 %v1191
    %v1297 = vpop.f32.mrb[0].mxu0
    %v1298 = vadd.f32 %v1213, %v1297
    %v1299 = vpop.f32.mrb[0].mxu0
    %v1300 = vpop.f32.mrb[0].mxu0
    %v1301 = vadd.f32 %v1213, %v1300
    %v1302 = vpop.f32.mrb[0].mxu0
    %1303 = vdwg.mxu0
    %v1304 = vadd.f32 %v1298, %v1074
    %v1305 = vadd.f32 %v1301, %v1075
    %v1306 = vld [vmem:[%s14] sm:$0x1]
    %v1307 = vld [vmem:[%s15] sm:$0x1]
    %1308 = vadd.xlane.f32.xlu0 %v1304
    %v1309 = vpop.xlane.xlu0 %1308
    %1310 = vadd.xlane.f32.xlu0 %v1305
    %v1311 = vpop.xlane.xlu0 %1310
    %v1312 = vmul.f32 %v1309, 0.03125
    %v1313 = vmul.f32 %v1311, 0.03125
    %v1314 = vsub.f32 %v1304, %v1312
    %v1315 = vsub.f32 %v1305, %v1313
    %v1316 = vmul.f32 %v1314, %v1031
    %v1317 = vmul.f32 %v1315, %v1031
    %v1318 = vmul.f32 %v1316, %v1316
    %v1319 = vmul.f32 %v1317, %v1317
    %1320 = vadd.xlane.f32.xlu0 %v1318
    %v1321 = vpop.xlane.xlu0 %1320
    %1322 = vadd.xlane.f32.xlu0 %v1319
    %v1323 = vpop.xlane.xlu0 %1322
    %v1324 = vmul.f32 %v1321, 0.03125
    %v1325 = vmul.f32 %v1323, 0.03125
    %v1326 = vadd.f32 %v1324, 1e-05
    %v1327 = vadd.f32 %v1325, 1e-05
    %v1328 = vrsqrt.pop %v1326
    %v1329 = vrsqrt.pop %v1327
    %v1330 = vmul.f32 %v1316, %v1328
    %v1331 = vmul.f32 %v1317, %v1329
    %v1333 = vlaneseq
    %v1334 = vshrl.u32 %v1333, 7
    %v1335 = vsub.s32 0, %v1334
    %v1336 = vrot.slane %v1306, %v1335
    %v1338 = vmul.f32 %v1330, %v1336
    %v1339 = vmul.f32 %v1331, %v1336
    %v1341 = vlaneseq
    %v1342 = vshrl.u32 %v1341, 7
    %v1343 = vsub.s32 0, %v1342
    %v1344 = vrot.slane %v1307, %v1343
    %v1346 = vadd.f32 %v1338, %v1344
    %v1347 = vadd.f32 %v1339, %v1344
    %1348 = vst [vmem:[#allocation14] sm:$0xff] %v1346
    %1349 = vst [vmem:[#allocation14 + $0x8] sm:$0xff] %v1347
    // Predicated region
    $region94: #{tpu_custom_call.1} parent=1 // pred_check
      _
    $region95: #{tpu_custom_call.1} parent=1 // pred_check_branch
      %1351 = sbr.rel (0) target = $region97
    $region96: #{tpu_custom_call.1} parent=1 // pred_region
      %s1353 = ssub.s32 256, 256
      %1354 = vsyncadd [#allocation4], %s1353
      %s1355 = sshll.u32 [#allocation14], 4
      %s1356 = int_to_ptr.vmem [resolvable:$true] %s1355
      %1361 = dma.vmem_to_hbm [thread:$0]  %s1356, 256, %s16, [#allocation4], 128, 128, 8
    $region97: #{tpu_custom_call.1} parent=1 // pred_fallthru
      _
    // Predicated region
    $region98: #{tpu_custom_call.1} parent=1 // pred_check
      _
    $region99: #{tpu_custom_call.1} parent=1 // pred_check_branch
      %1363 = sbr.rel (0) target = $region101
    $region100: #{tpu_custom_call.1} parent=1 // pred_region
      %1364 = dma.done [#allocation4], 256
    $region101: #{tpu_custom_call.1} parent=1 // pred_fallthru
      _
    %1365 = vsyncpa [#allocation3], 1
    %1366 = vsyncpa [#allocation6], 1
    %1367 = vsyncpa [#allocation9], 1
    %1368 = vsyncpa [#allocation12], 1
    %1369 = vsyncpa [#allocation4], 1

// kernel: tpu_custom_call.1
$region0: #{tpu_custom_call.1}
  #allocation0 [shape = 'u32[]', space=smem, size = 0x4, offset = 0x4, fixed_abs, tag = 'smem constant byte address 0x4 - core index']
  #allocation1 [shape = 'u32[144,128]{1,0:T(1,128)}', space=vmem, size = 0x12000, scoped, tag = 'internal scratch']
  %s0 = inlined_call_operand.hbm [shape: f32[2,8,128], index: 0, kind: input, shape index: {}]
  %s1 = inlined_call_operand.hbm [shape: bf16[2,128,128], index: 1, kind: input, shape index: {}]
  %s2 = inlined_call_operand.hbm [shape: bf16[128,128], index: 2, kind: input, shape index: {}]
  %s3 = inlined_call_operand.vmem [shape: f32[1,128], index: 3, kind: input, shape index: {}]
  %s4 = inlined_call_operand.hbm [shape: bf16[128,256], index: 4, kind: input, shape index: {}]
  %s5 = inlined_call_operand.vmem [shape: f32[1,256], index: 5, kind: input, shape index: {}]
  %s6 = inlined_call_operand.hbm [shape: bf16[128,128], index: 6, kind: input, shape index: {}]
  %s7 = inlined_call_operand.vmem [shape: f32[1,128], index: 7, kind: input, shape index: {}]
  %s8 = inlined_call_operand.vmem [shape: f32[1,128], index: 8, kind: input, shape index: {}]
  %s9 = inlined_call_operand.vmem [shape: f32[1,128], index: 9, kind: input, shape index: {}]
  %s10 = inlined_call_operand.hbm [shape: bf16[128,128], index: 10, kind: input, shape index: {}]
  %s11 = inlined_call_operand.vmem [shape: f32[1,128], index: 11, kind: input, shape index: {}]
  %s12 = inlined_call_operand.hbm [shape: bf16[128,128], index: 12, kind: input, shape index: {}]
  %s13 = inlined_call_operand.vmem [shape: f32[1,128], index: 13, kind: input, shape index: {}]
  %s14 = inlined_call_operand.vmem [shape: f32[1,128], index: 14, kind: input, shape index: {}]
  %s15 = inlined_call_operand.vmem [shape: f32[1,128], index: 15, kind: input, shape index: {}]
  %s16 = inlined_call_operand.hbm [shape: f32[2,8,128], index: 16, kind: output, shape index: {}]
  %s17 = sld [smem:[#allocation0]]
  $region102: #{tpu_custom_call.1} parent=0
    _
  %s19 = ssub.s32 1, %s17
  %s20 = scalar_select 0, %s19, %s17
  $region1: #{tpu_custom_call.1} parent=0
    #allocation2 [shape = 'u8[8192]{0}', space=vmem, size = 0x2000, scoped, tag = 'input window, operand 0, single buffered']
    #allocation3 [shape = 's32[1]{0}', space=sflag, size = 0x4, scoped, tag = 'scoped memory for tpu_custom_call.1']
    #allocation4 [shape = 's32[1]{0}', space=sflag, size = 0x4, scoped, tag = 'scoped memory for tpu_custom_call.1']
    #allocation5 [shape = 'u8[65536]{0}', space=vmem, size = 0x10000, scoped, tag = 'input window, operand 1, single buffered']
    #allocation6 [shape = 's32[1]{0}', space=sflag, size = 0x4, scoped, tag = 'scoped memory for tpu_custom_call.1']
    #allocation7 [shape = 'u8[32768]{0}', space=vmem, size = 0x8000, scoped, tag = 'input window, operand 2, single buffered']
    #allocation8 [shape = 'u8[65536]{0}', space=vmem, size = 0x10000, scoped, tag = 'input window, operand 4, single buffered']
    #allocation9 [shape = 's32[1]{0}', space=sflag, size = 0x4, scoped, tag = 'scoped memory for tpu_custom_call.1']
    #allocation10 [shape = 'u8[32768]{0}', space=vmem, size = 0x8000, scoped, tag = 'input window, operand 6, single buffered']
    #allocation11 [shape = 'u8[32768]{0}', space=vmem, size = 0x8000, scoped, tag = 'input window, operand 10, single buffered']
    #allocation12 [shape = 's32[1]{0}', space=sflag, size = 0x4, scoped, tag = 'scoped memory for tpu_custom_call.1']
    #allocation13 [shape = 'u8[32768]{0}', space=vmem, size = 0x8000, scoped, tag = 'input window, operand 12, single buffered']
    #allocation14 [shape = 'u8[8192]{0}', space=vmem, size = 0x2000, scoped, tag = 'output window, operand 0, single buffered']
    %21 = vsyncpa [#allocation3], 0
    %22 = vsyncpa [#allocation6], 0
    %23 = vsyncpa [#allocation9], 0
    %24 = vsyncpa [#allocation12], 0
    %25 = vsyncpa [#allocation4], 0
    // Predicated region
    $region2: #{tpu_custom_call.1} parent=1 // pred_check
      _
    $region3: #{tpu_custom_call.1} parent=1 // pred_check_branch
      %27 = sbr.rel (0) target = $region5
    $region4: #{tpu_custom_call.1} parent=1 // pred_region
      %s29 = ssub.s32 256, 256
      %30 = vsyncadd [#allocation3], %s29
      %s31 = sshll.u32 [#allocation2], 4
      %s32 = int_to_ptr.vmem [resolvable:$true] %s31
      %37 = dma.hbm_to_vmem [thread:$0]  %s0, 256, %s32, [#allocation3], 128, 128, 8
    $region5: #{tpu_custom_call.1} parent=1 // pred_fallthru
      _
    // Predicated region
    $region6: #{tpu_custom_call.1} parent=1 // pred_check
      _
    $region7: #{tpu_custom_call.1} parent=1 // pred_check_branch
      %39 = sbr.rel (0) target = $region9
    $region8: #{tpu_custom_call.1} parent=1 // pred_region
      %s41 = ssub.s32 2048, 2048
      %42 = vsyncadd [#allocation6], %s41
      %s43 = sshll.u32 [#allocation5], 4
      %s44 = int_to_ptr.vmem [resolvable:$true] %s43
      %49 = dma.hbm_to_vmem [thread:$0]  %s1, 2048, %s44, [#allocation6], 64, 64, 4
    $region9: #{tpu_custom_call.1} parent=1 // pred_fallthru
      _
    // Predicated region
    $region10: #{tpu_custom_call.1} parent=1 // pred_check
      _
    $region11: #{tpu_custom_call.1} parent=1 // pred_check_branch
      %51 = sbr.rel (0) target = $region13
    $region12: #{tpu_custom_call.1} parent=1 // pred_region
      %s53 = ssub.s32 1024, 1024
      %54 = vsyncadd [#allocation6], %s53
      %s55 = sshll.u32 [#allocation7], 4
      %s56 = int_to_ptr.vmem [resolvable:$true] %s55
      %61 = dma.hbm_to_vmem [thread:$0]  %s2, 1024, %s56, [#allocation6], 64, 64, 4
    $region13: #{tpu_custom_call.1} parent=1 // pred_fallthru
      _
    // Predicated region
    $region14: #{tpu_custom_call.1} parent=1 // pred_check
      _
    $region15: #{tpu_custom_call.1} parent=1 // pred_check_branch
      %63 = sbr.rel (0) target = $region17
    $region16: #{tpu_custom_call.1} parent=1 // pred_region
      _
    $region17: #{tpu_custom_call.1} parent=1 // pred_fallthru
      _
    // Predicated region
    $region18: #{tpu_custom_call.1} parent=1 // pred_check
      _
    $region19: #{tpu_custom_call.1} parent=1 // pred_check_branch
      %65 = sbr.rel (0) target = $region21
    $region20: #{tpu_custom_call.1} parent=1 // pred_region
      %s67 = ssub.s32 2048, 2048
      %68 = vsyncadd [#allocation9], %s67
      %s69 = sshll.u32 [#allocation8], 4
      %s70 = int_to_ptr.vmem [resolvable:$true] %s69
      %75 = dma.hbm_to_vmem [thread:$0]  %s4, 2048, %s70, [#allocation9], 128, 128, 8
    $region21: #{tpu_custom_call.1} parent=1 // pred_fallthru
      _
    // Predicated region
    $region22: #{tpu_custom_call.1} parent=1 // pred_check
      _
    $region23: #{tpu_custom_call.1} parent=1 // pred_check_branch
      %77 = sbr.rel (0) target = $region25
    $region24: #{tpu_custom_call.1} parent=1 // pred_region
      _
    $region25: #{tpu_custom_call.1} parent=1 // pred_fallthru
      _
    // Predicated region
    $region26: #{tpu_custom_call.1} parent=1 // pred_check
      _
    $region27: #{tpu_custom_call.1} parent=1 // pred_check_branch
      %79 = sbr.rel (0) target = $region29
    $region28: #{tpu_custom_call.1} parent=1 // pred_region
      %s81 = ssub.s32 1024, 1024
      %82 = vsyncadd [#allocation9], %s81
      %s83 = sshll.u32 [#allocation10], 4
      %s84 = int_to_ptr.vmem [resolvable:$true] %s83
      %89 = dma.hbm_to_vmem [thread:$0]  %s6, 1024, %s84, [#allocation9], 64, 64, 4
    $region29: #{tpu_custom_call.1} parent=1 // pred_fallthru
      _
    // Predicated region
    $region30: #{tpu_custom_call.1} parent=1 // pred_check
      _
    $region31: #{tpu_custom_call.1} parent=1 // pred_check_branch
      %91 = sbr.rel (0) target = $region33
    $region32: #{tpu_custom_call.1} parent=1 // pred_region
      _
    $region33: #{tpu_custom_call.1} parent=1 // pred_fallthru
      _
    // Predicated region
    $region34: #{tpu_custom_call.1} parent=1 // pred_check
      _
    $region35: #{tpu_custom_call.1} parent=1 // pred_check_branch
      %93 = sbr.rel (0) target = $region37
    $region36: #{tpu_custom_call.1} parent=1 // pred_region
      _
    $region37: #{tpu_custom_call.1} parent=1 // pred_fallthru
      _
    // Predicated region
    $region38: #{tpu_custom_call.1} parent=1 // pred_check
      _
    $region39: #{tpu_custom_call.1} parent=1 // pred_check_branch
      %95 = sbr.rel (0) target = $region41
    $region40: #{tpu_custom_call.1} parent=1 // pred_region
      _
    $region41: #{tpu_custom_call.1} parent=1 // pred_fallthru
      _
    // Predicated region
    $region42: #{tpu_custom_call.1} parent=1 // pred_check
      _
    $region43: #{tpu_custom_call.1} parent=1 // pred_check_branch
      %97 = sbr.rel (0) target = $region45
    $region44: #{tpu_custom_call.1} parent=1 // pred_region
      %s99 = ssub.s32 1024, 1024
      %100 = vsyncadd [#allocation12], %s99
      %s101 = sshll.u32 [#allocation11], 4
      %s102 = int_to_ptr.vmem [resolvable:$true] %s101
      %107 = dma.hbm_to_vmem [thread:$0]  %s10, 1024, %s102, [#allocation12], 64, 64, 4
    $region45: #{tpu_custom_call.1} parent=1 // pred_fallthru
      _
    // Predicated region
    $region46: #{tpu_custom_call.1} parent=1 // pred_check
      _
    $region47: #{tpu_custom_call.1} parent=1 // pred_check_branch
      %109 = sbr.rel (0) target = $region49
    $region48: #{tpu_custom_call.1} parent=1 // pred_region
      _
    $region49: #{tpu_custom_call.1} parent=1 // pred_fallthru
      _
    // Predicated region
    $region50: #{tpu_custom_call.1} parent=1 // pred_check
      _
    $region51: #{tpu_custom_call.1} parent=1 // pred_check_branch
      %111 = sbr.rel (0) target = $region53
    $region52: #{tpu_custom_call.1} parent=1 // pred_region
      %s113 = ssub.s32 1024, 1024
      %114 = vsyncadd [#allocation12], %s113
      %s115 = sshll.u32 [#allocation13], 4
      %s116 = int_to_ptr.vmem [resolvable:$true] %s115
      %121 = dma.hbm_to_vmem [thread:$0]  %s12, 1024, %s116, [#allocation12], 64, 64, 4
    $region53: #{tpu_custom_call.1} parent=1 // pred_fallthru
      _
    // Predicated region
    $region54: #{tpu_custom_call.1} parent=1 // pred_check
      _
    $region55: #{tpu_custom_call.1} parent=1 // pred_check_branch
      %123 = sbr.rel (0) target = $region57
    $region56: #{tpu_custom_call.1} parent=1 // pred_region
      _
    $region57: #{tpu_custom_call.1} parent=1 // pred_fallthru
      _
    // Predicated region
    $region58: #{tpu_custom_call.1} parent=1 // pred_check
      _
    $region59: #{tpu_custom_call.1} parent=1 // pred_check_branch
      %125 = sbr.rel (0) target = $region61
    $region60: #{tpu_custom_call.1} parent=1 // pred_region
      _
    $region61: #{tpu_custom_call.1} parent=1 // pred_fallthru
      _
    // Predicated region
    $region62: #{tpu_custom_call.1} parent=1 // pred_check
      _
    $region63: #{tpu_custom_call.1} parent=1 // pred_check_branch
      %127 = sbr.rel (0) target = $region65
    $region64: #{tpu_custom_call.1} parent=1 // pred_region
      _
    $region65: #{tpu_custom_call.1} parent=1 // pred_fallthru
      _
    // Predicated region
    $region66: #{tpu_custom_call.1} parent=1 // pred_check
      _
    $region67: #{tpu_custom_call.1} parent=1 // pred_check_branch
      %129 = sbr.rel (0) target = $region69
    $region68: #{tpu_custom_call.1} parent=1 // pred_region
      %130 = dma.done [#allocation3], 256
    $region69: #{tpu_custom_call.1} parent=1 // pred_fallthru
      _
    // Predicated region
    $region70: #{tpu_custom_call.1} parent=1 // pred_check
      _
    $region71: #{tpu_custom_call.1} parent=1 // pred_check_branch
      %132 = sbr.rel (0) target = $region73
    $region72: #{tpu_custom_call.1} parent=1 // pred_region
      %133 = dma.done [#allocation6], 2048
    $region73: #{tpu_custom_call.1} parent=1 // pred_fallthru
      _
    // Predicated region
    $region74: #{tpu_custom_call.1} parent=1 // pred_check
      _
    $region75: #{tpu_custom_call.1} parent=1 // pred_check_branch
      %135 = sbr.rel (0) target = $region77
    $region76: #{tpu_custom_call.1} parent=1 // pred_region
      %136 = dma.done [#allocation6], 1024
    $region77: #{tpu_custom_call.1} parent=1 // pred_fallthru
      _
    // Predicated region
    $region78: #{tpu_custom_call.1} parent=1 // pred_check
      _
    $region79: #{tpu_custom_call.1} parent=1 // pred_check_branch
      %138 = sbr.rel (0) target = $region81
    $region80: #{tpu_custom_call.1} parent=1 // pred_region
      %139 = dma.done [#allocation9], 2048
    $region81: #{tpu_custom_call.1} parent=1 // pred_fallthru
      _
    // Predicated region
    $region82: #{tpu_custom_call.1} parent=1 // pred_check
      _
    $region83: #{tpu_custom_call.1} parent=1 // pred_check_branch
      %141 = sbr.rel (0) target = $region85
    $region84: #{tpu_custom_call.1} parent=1 // pred_region
      %142 = dma.done [#allocation9], 1024
    $region85: #{tpu_custom_call.1} parent=1 // pred_fallthru
      _
    // Predicated region
    $region86: #{tpu_custom_call.1} parent=1 // pred_check
      _
    $region87: #{tpu_custom_call.1} parent=1 // pred_check_branch
      %144 = sbr.rel (0) target = $region89
    $region88: #{tpu_custom_call.1} parent=1 // pred_region
      %145 = dma.done [#allocation12], 1024
    $region89: #{tpu_custom_call.1} parent=1 // pred_fallthru
      _
    // Predicated region
    $region90: #{tpu_custom_call.1} parent=1 // pred_check
      _
    $region91: #{tpu_custom_call.1} parent=1 // pred_check_branch
      %147 = sbr.rel (0) target = $region93
    $region92: #{tpu_custom_call.1} parent=1 // pred_region
      %148 = dma.done [#allocation12], 1024
    $region93: #{tpu_custom_call.1} parent=1 // pred_fallthru
      _
    %v150 = vld [vmem:[#allocation2] sm:$0xff]
    %v151 = vld [vmem:[#allocation2 + $0x8] sm:$0xff]
    %v152 = vpack.c.bf16 %v151, %v150
    %v153 = vld [vmem:[#allocation5] sm:$0xf]
    %v154 = vld [vmem:[#allocation5 + $0x4] sm:$0xf]
    %v155 = vld [vmem:[#allocation5 + $0x8] sm:$0xf]
    %v156 = vld [vmem:[#allocation5 + $0xc] sm:$0xf]
    %v157 = vld [vmem:[#allocation5 + $0x10] sm:$0xf]
    %v158 = vld [vmem:[#allocation5 + $0x14] sm:$0xf]
    %v159 = vld [vmem:[#allocation5 + $0x18] sm:$0xf]
    %v160 = vld [vmem:[#allocation5 + $0x1c] sm:$0xf]
    %v161 = vld [vmem:[#allocation5 + $0x20] sm:$0xf]
    %v162 = vld [vmem:[#allocation5 + $0x24] sm:$0xf]
    %v163 = vld [vmem:[#allocation5 + $0x28] sm:$0xf]
    %v164 = vld [vmem:[#allocation5 + $0x2c] sm:$0xf]
    %v165 = vld [vmem:[#allocation5 + $0x30] sm:$0xf]
    %v166 = vld [vmem:[#allocation5 + $0x34] sm:$0xf]
    %v167 = vld [vmem:[#allocation5 + $0x38] sm:$0xf]
    %v168 = vld [vmem:[#allocation5 + $0x3c] sm:$0xf]
    %v169 = vld [vmem:[#allocation5 + $0x40] sm:$0xf]
    %v170 = vld [vmem:[#allocation5 + $0x44] sm:$0xf]
    %v171 = vld [vmem:[#allocation5 + $0x48] sm:$0xf]
    %v172 = vld [vmem:[#allocation5 + $0x4c] sm:$0xf]
    %v173 = vld [vmem:[#allocation5 + $0x50] sm:$0xf]
    %v174 = vld [vmem:[#allocation5 + $0x54] sm:$0xf]
    %v175 = vld [vmem:[#allocation5 + $0x58] sm:$0xf]
    %v176 = vld [vmem:[#allocation5 + $0x5c] sm:$0xf]
    %v177 = vld [vmem:[#allocation5 + $0x60] sm:$0xf]
    %v178 = vld [vmem:[#allocation5 + $0x64] sm:$0xf]
    %v179 = vld [vmem:[#allocation5 + $0x68] sm:$0xf]
    %v180 = vld [vmem:[#allocation5 + $0x6c] sm:$0xf]
    %v181 = vld [vmem:[#allocation5 + $0x70] sm:$0xf]
    %v182 = vld [vmem:[#allocation5 + $0x74] sm:$0xf]
    %v183 = vld [vmem:[#allocation5 + $0x78] sm:$0xf]
    %v184 = vld [vmem:[#allocation5 + $0x7c] sm:$0xf]
    %v185 = vld [vmem:[#allocation7] sm:$0xf]
    %v186 = vld [vmem:[#allocation7 + $0x4] sm:$0xf]
    %v187 = vld [vmem:[#allocation7 + $0x8] sm:$0xf]
    %v188 = vld [vmem:[#allocation7 + $0xc] sm:$0xf]
    %v189 = vld [vmem:[#allocation7 + $0x10] sm:$0xf]
    %v190 = vld [vmem:[#allocation7 + $0x14] sm:$0xf]
    %v191 = vld [vmem:[#allocation7 + $0x18] sm:$0xf]
    %v192 = vld [vmem:[#allocation7 + $0x1c] sm:$0xf]
    %v193 = vld [vmem:[#allocation7 + $0x20] sm:$0xf]
    %v194 = vld [vmem:[#allocation7 + $0x24] sm:$0xf]
    %v195 = vld [vmem:[#allocation7 + $0x28] sm:$0xf]
    %v196 = vld [vmem:[#allocation7 + $0x2c] sm:$0xf]
    %v197 = vld [vmem:[#allocation7 + $0x30] sm:$0xf]
    %v198 = vld [vmem:[#allocation7 + $0x34] sm:$0xf]
    %v199 = vld [vmem:[#allocation7 + $0x38] sm:$0xf]
    %v200 = vld [vmem:[#allocation7 + $0x3c] sm:$0xf]
    %v201 = vld [vmem:[%s3] sm:$0x1]
    %v203 = vlaneseq
    %v204 = vshrl.u32 %v203, 7
    %v205 = vsub.s32 0, %v204
    %v206 = vrot.slane %v201, %v205
    %v224 = vunpack.c.l.b16 %v185
    %v225 = vunpack.c.l.b16 %v186
    %v226 = vunpack.c.l.b16 %v187
    %v227 = vunpack.c.l.b16 %v188
    %v228 = vunpack.c.l.b16 %v189
    %v229 = vunpack.c.l.b16 %v190
    %v230 = vunpack.c.l.b16 %v191
    %v231 = vunpack.c.l.b16 %v192
    %v232 = vunpack.c.l.b16 %v193
    %v233 = vunpack.c.l.b16 %v194
    %v234 = vunpack.c.l.b16 %v195
    %v235 = vunpack.c.l.b16 %v196
    %v236 = vunpack.c.l.b16 %v197
    %v237 = vunpack.c.l.b16 %v198
    %v238 = vunpack.c.l.b16 %v199
    %v239 = vunpack.c.l.b16 %v200
    %v240 = vpack.c.b16 %v225, %v224
    %v241 = vpack.c.b16 %v227, %v226
    %v242 = vpack.c.b16 %v229, %v228
    %v243 = vpack.c.b16 %v231, %v230
    %v244 = vpack.c.b16 %v233, %v232
    %v245 = vpack.c.b16 %v235, %v234
    %v246 = vpack.c.b16 %v237, %v236
    %v247 = vpack.c.b16 %v239, %v238
    %256 = vmatprep.subr.bf16.mxu0 0
    %257 = vmatpush1.bf16.msra.mxu0 %v240
    %258 = vmatprep.subr.bf16.mxu0 0
    %259 = vmatpush1.bf16.msra.mxu0 %v241
    %260 = vmatprep.subr.bf16.mxu0 0
    %261 = vmatpush1.bf16.msra.mxu0 %v242
    %262 = vmatprep.subr.bf16.mxu0 0
    %263 = vmatpush1.bf16.msra.mxu0 %v243
    %264 = vmatprep.subr.bf16.mxu0 0
    %265 = vmatpush1.bf16.msra.mxu0 %v244
    %266 = vmatprep.subr.bf16.mxu0 0
    %267 = vmatpush1.bf16.msra.mxu0 %v245
    %268 = vmatprep.subr.bf16.mxu0 0
    %269 = vmatpush1.bf16.msra.mxu0 %v246
    %270 = vmatprep.subr.bf16.mxu0 0
    %271 = vmatpush1.bf16.msra.mxu0 %v247
    %272 = vmatprep.subr.bf16.mxu0 0
    %273 = vmatpush1.bf16.msra.mxu0 0
    %274 = vmatprep.subr.bf16.mxu0 0
    %275 = vmatpush1.bf16.msra.mxu0 0
    %276 = vmatprep.subr.bf16.mxu0 0
    %277 = vmatpush1.bf16.msra.mxu0 0
    %278 = vmatprep.subr.bf16.mxu0 0
    %279 = vmatpush1.bf16.msra.mxu0 0
    %280 = vmatprep.subr.bf16.mxu0 0
    %281 = vmatpush1.bf16.msra.mxu0 0
    %282 = vmatprep.subr.bf16.mxu0 0
    %283 = vmatpush1.bf16.msra.mxu0 0
    %284 = vmatprep.subr.bf16.mxu0 0
    %285 = vmatpush1.bf16.msra.mxu0 0
    %286 = vmatprep.subr.bf16.mxu0 0
    %287 = vmatpush1.bf16.msra.mxu0 0
    %288 = vmatprep.mubr.bf16.mxu0 0
    %289 = vmatmul.mubr.bf16.gmra.mrb[0].mxu0 %v152
    %v290 = vpop.f32.mrb[0].mxu0
    %v291 = vadd.f32 %v206, %v290
    %v292 = vpop.f32.mrb[0].mxu0
    %v293 = vpop.f32.mrb[0].mxu0
    %v294 = vadd.f32 %v206, %v293
    %v295 = vpop.f32.mrb[0].mxu0
    %296 = vdwg.mxu0
    %v297 = vld [vmem:[#allocation8] sm:$0xff]
    %v298 = vld [vmem:[#allocation8 + $0x8] sm:$0xff]
    %v299 = vld [vmem:[#allocation8 + $0x10] sm:$0xff]
    %v300 = vld [vmem:[#allocation8 + $0x18] sm:$0xff]
    %v301 = vld [vmem:[#allocation8 + $0x20] sm:$0xff]
    %v302 = vld [vmem:[#allocation8 + $0x28] sm:$0xff]
    %v303 = vld [vmem:[#allocation8 + $0x30] sm:$0xff]
    %v304 = vld [vmem:[#allocation8 + $0x38] sm:$0xff]
    %v305 = vld [vmem:[#allocation8 + $0x40] sm:$0xff]
    %v306 = vld [vmem:[#allocation8 + $0x48] sm:$0xff]
    %v307 = vld [vmem:[#allocation8 + $0x50] sm:$0xff]
    %v308 = vld [vmem:[#allocation8 + $0x58] sm:$0xff]
    %v309 = vld [vmem:[#allocation8 + $0x60] sm:$0xff]
    %v310 = vld [vmem:[#allocation8 + $0x68] sm:$0xff]
    %v311 = vld [vmem:[#allocation8 + $0x70] sm:$0xff]
    %v312 = vld [vmem:[#allocation8 + $0x78] sm:$0xff]
    %v313 = vld [vmem:[%s5] sm:$0x3]
    %v315 = vlaneseq
    %v316 = vshrl.u32 %v315, 7
    %v317 = vsub.s32 0, %v316
    %v318 = vrot.slane %v313, %v317
    %v319 = vlaneseq
    %v320 = vshrl.u32 %v319, 7
    %v321 = vsub.s32 1, %v320
    %v322 = vrot.slane %v313, %v321
    %v357 = vunpack.c.l.b16 %v153
    %v358 = vunpack.c.l.b16 %v154
    %v359 = vunpack.c.l.b16 %v155
    %v360 = vunpack.c.l.b16 %v156
    %v361 = vunpack.c.l.b16 %v157
    %v362 = vunpack.c.l.b16 %v158
    %v363 = vunpack.c.l.b16 %v159
    %v364 = vunpack.c.l.b16 %v160
    %v365 = vunpack.c.l.b16 %v161
    %v366 = vunpack.c.l.b16 %v162
    %v367 = vunpack.c.l.b16 %v163
    %v368 = vunpack.c.l.b16 %v164
    %v369 = vunpack.c.l.b16 %v165
    %v370 = vunpack.c.l.b16 %v166
    %v371 = vunpack.c.l.b16 %v167
    %v372 = vunpack.c.l.b16 %v168
    %v373 = vunpack.c.l.b16 %v169
    %v374 = vunpack.c.l.b16 %v170
    %v375 = vunpack.c.l.b16 %v171
    %v376 = vunpack.c.l.b16 %v172
    %v377 = vunpack.c.l.b16 %v173
    %v378 = vunpack.c.l.b16 %v174
    %v379 = vunpack.c.l.b16 %v175
    %v380 = vunpack.c.l.b16 %v176
    %v381 = vunpack.c.l.b16 %v177
    %v382 = vunpack.c.l.b16 %v178
    %v383 = vunpack.c.l.b16 %v179
    %v384 = vunpack.c.l.b16 %v180
    %v385 = vunpack.c.l.b16 %v181
    %v386 = vunpack.c.l.b16 %v182
    %v387 = vunpack.c.l.b16 %v183
    %v388 = vunpack.c.l.b16 %v184
    %v389 = vpack.c.b16 %v358, %v357
    %v390 = vpack.c.b16 %v360, %v359
    %v391 = vpack.c.b16 %v362, %v361
    %v392 = vpack.c.b16 %v364, %v363
    %v393 = vpack.c.b16 %v366, %v365
    %v394 = vpack.c.b16 %v368, %v367
    %v395 = vpack.c.b16 %v370, %v369
    %v396 = vpack.c.b16 %v372, %v371
    %v397 = vpack.c.b16 %v374, %v373
    %v398 = vpack.c.b16 %v376, %v375
    %v399 = vpack.c.b16 %v378, %v377
    %v400 = vpack.c.b16 %v380, %v379
    %v401 = vpack.c.b16 %v382, %v381
    %v402 = vpack.c.b16 %v384, %v383
    %v403 = vpack.c.b16 %v386, %v385
    %v404 = vpack.c.b16 %v388, %v387
    %v437 = vunpack.c.l.b16 %v297
    %v438 = vunpack.c.h.b16 %v297
    %v439 = vunpack.c.l.b16 %v298
    %v440 = vunpack.c.h.b16 %v298
    %v441 = vunpack.c.l.b16 %v299
    %v442 = vunpack.c.h.b16 %v299
    %v443 = vunpack.c.l.b16 %v300
    %v444 = vunpack.c.h.b16 %v300
    %v445 = vunpack.c.l.b16 %v301
    %v446 = vunpack.c.h.b16 %v301
    %v447 = vunpack.c.l.b16 %v302
    %v448 = vunpack.c.h.b16 %v302
    %v449 = vunpack.c.l.b16 %v303
    %v450 = vunpack.c.h.b16 %v303
    %v451 = vunpack.c.l.b16 %v304
    %v452 = vunpack.c.h.b16 %v304
    %v453 = vunpack.c.l.b16 %v305
    %v454 = vunpack.c.h.b16 %v305
    %v455 = vunpack.c.l.b16 %v306
    %v456 = vunpack.c.h.b16 %v306
    %v457 = vunpack.c.l.b16 %v307
    %v458 = vunpack.c.h.b16 %v307
    %v459 = vunpack.c.l.b16 %v308
    %v460 = vunpack.c.h.b16 %v308
    %v461 = vunpack.c.l.b16 %v309
    %v462 = vunpack.c.h.b16 %v309
    %v463 = vunpack.c.l.b16 %v310
    %v464 = vunpack.c.h.b16 %v310
    %v465 = vunpack.c.l.b16 %v311
    %v466 = vunpack.c.h.b16 %v311
    %v467 = vunpack.c.l.b16 %v312
    %v468 = vunpack.c.h.b16 %v312
    %v469 = vpack.c.b16 %v439, %v437
    %v470 = vpack.c.b16 %v440, %v438
    %v471 = vpack.c.b16 %v443, %v441
    %v472 = vpack.c.b16 %v444, %v442
    %v473 = vpack.c.b16 %v447, %v445
    %v474 = vpack.c.b16 %v448, %v446
    %v475 = vpack.c.b16 %v451, %v449
    %v476 = vpack.c.b16 %v452, %v450
    %v477 = vpack.c.b16 %v455, %v453
    %v478 = vpack.c.b16 %v456, %v454
    %v479 = vpack.c.b16 %v459, %v457
    %v480 = vpack.c.b16 %v460, %v458
    %v481 = vpack.c.b16 %v463, %v461
    %v482 = vpack.c.b16 %v464, %v462
    %v483 = vpack.c.b16 %v467, %v465
    %v484 = vpack.c.b16 %v468, %v466
    %501 = vmatprep.subr.bf16.mxu0 %v470
    %502 = vmatpush1.bf16.msra.mxu0 %v469
    %503 = vmatprep.subr.bf16.mxu0 %v472
    %504 = vmatpush1.bf16.msra.mxu0 %v471
    %505 = vmatprep.subr.bf16.mxu0 %v474
    %506 = vmatpush1.bf16.msra.mxu0 %v473
    %507 = vmatprep.subr.bf16.mxu0 %v476
    %508 = vmatpush1.bf16.msra.mxu0 %v475
    %509 = vmatprep.subr.bf16.mxu0 %v478
    %510 = vmatpush1.bf16.msra.mxu0 %v477
    %511 = vmatprep.subr.bf16.mxu0 %v480
    %512 = vmatpush1.bf16.msra.mxu0 %v479
    %513 = vmatprep.subr.bf16.mxu0 %v482
    %514 = vmatpush1.bf16.msra.mxu0 %v481
    %515 = vmatprep.subr.bf16.mxu0 %v484
    %516 = vmatpush1.bf16.msra.mxu0 %v483
    %517 = vmatprep.subr.bf16.mxu0 0
    %518 = vmatpush1.bf16.msra.mxu0 0
    %519 = vmatprep.subr.bf16.mxu0 0
    %520 = vmatpush1.bf16.msra.mxu0 0
    %521 = vmatprep.subr.bf16.mxu0 0
    %522 = vmatpush1.bf16.msra.mxu0 0
    %523 = vmatprep.subr.bf16.mxu0 0
    %524 = vmatpush1.bf16.msra.mxu0 0
    %525 = vmatprep.subr.bf16.mxu0 0
    %526 = vmatpush1.bf16.msra.mxu0 0
    %527 = vmatprep.subr.bf16.mxu0 0
    %528 = vmatpush1.bf16.msra.mxu0 0
    %529 = vmatprep.subr.bf16.mxu0 0
    %530 = vmatpush1.bf16.msra.mxu0 0
    %531 = vmatprep.subr.bf16.mxu0 0
    %532 = vmatpush1.bf16.msra.mxu0 0
    %533 = vmatprep.mubr.bf16.mxu0 0
    %534 = vmatmul.mubr.bf16.gmra.mrb[0].mxu0 %v389
    %v535 = vpop.f32.mrb[0].mxu0
    %v536 = vadd.f32 %v318, %v535
    %v537 = vpop.f32.mrb[0].mxu0
    %v538 = vadd.f32 %v322, %v537
    %v539 = vpop.f32.mrb[0].mxu0
    %v540 = vadd.f32 %v318, %v539
    %v541 = vpop.f32.mrb[0].mxu0
    %v542 = vadd.f32 %v322, %v541
    %543 = vmatprep.mubr.bf16.mxu0 0
    %544 = vmatmul.mubr.bf16.gmra.mrb[0].mxu0 %v390
    %v545 = vpop.f32.mrb[0].mxu0
    %v546 = vadd.f32 %v318, %v545
    %v547 = vpop.f32.mrb[0].mxu0
    %v548 = vadd.f32 %v322, %v547
    %v549 = vpop.f32.mrb[0].mxu0
    %v550 = vadd.f32 %v318, %v549
    %v551 = vpop.f32.mrb[0].mxu0
    %v552 = vadd.f32 %v322, %v551
    %553 = vmatprep.mubr.bf16.mxu0 0
    %554 = vmatmul.mubr.bf16.gmra.mrb[0].mxu0 %v391
    %v555 = vpop.f32.mrb[0].mxu0
    %v556 = vadd.f32 %v318, %v555
    %v557 = vpop.f32.mrb[0].mxu0
    %v558 = vadd.f32 %v322, %v557
    %v559 = vpop.f32.mrb[0].mxu0
    %v560 = vadd.f32 %v318, %v559
    %v561 = vpop.f32.mrb[0].mxu0
    %v562 = vadd.f32 %v322, %v561
    %563 = vmatprep.mubr.bf16.mxu0 0
    %564 = vmatmul.mubr.bf16.gmra.mrb[0].mxu0 %v392
    %v565 = vpop.f32.mrb[0].mxu0
    %v566 = vadd.f32 %v318, %v565
    %v567 = vpop.f32.mrb[0].mxu0
    %v568 = vadd.f32 %v322, %v567
    %v569 = vpop.f32.mrb[0].mxu0
    %v570 = vadd.f32 %v318, %v569
    %v571 = vpop.f32.mrb[0].mxu0
    %v572 = vadd.f32 %v322, %v571
    %573 = vmatprep.mubr.bf16.mxu0 0
    %574 = vmatmul.mubr.bf16.gmra.mrb[0].mxu0 %v393
    %v575 = vpop.f32.mrb[0].mxu0
    %v576 = vadd.f32 %v318, %v575
    %v577 = vpop.f32.mrb[0].mxu0
    %v578 = vadd.f32 %v322, %v577
    %v579 = vpop.f32.mrb[0].mxu0
    %v580 = vadd.f32 %v318, %v579
    %v581 = vpop.f32.mrb[0].mxu0
    %v582 = vadd.f32 %v322, %v581
    %583 = vmatprep.mubr.bf16.mxu0 0
    %584 = vmatmul.mubr.bf16.gmra.mrb[0].mxu0 %v394
    %v585 = vpop.f32.mrb[0].mxu0
    %v586 = vadd.f32 %v318, %v585
    %v587 = vpop.f32.mrb[0].mxu0
    %v588 = vadd.f32 %v322, %v587
    %v589 = vpop.f32.mrb[0].mxu0
    %v590 = vadd.f32 %v318, %v589
    %v591 = vpop.f32.mrb[0].mxu0
    %v592 = vadd.f32 %v322, %v591
    %593 = vmatprep.mubr.bf16.mxu0 0
    %594 = vmatmul.mubr.bf16.gmra.mrb[0].mxu0 %v395
    %v595 = vpop.f32.mrb[0].mxu0
    %v596 = vadd.f32 %v318, %v595
    %v597 = vpop.f32.mrb[0].mxu0
    %v598 = vadd.f32 %v322, %v597
    %v599 = vpop.f32.mrb[0].mxu0
    %v600 = vadd.f32 %v318, %v599
    %v601 = vpop.f32.mrb[0].mxu0
    %v602 = vadd.f32 %v322, %v601
    %603 = vmatprep.mubr.bf16.mxu0 0
    %604 = vmatmul.mubr.bf16.gmra.mrb[0].mxu0 %v396
    %v605 = vpop.f32.mrb[0].mxu0
    %v606 = vadd.f32 %v318, %v605
    %v607 = vpop.f32.mrb[0].mxu0
    %v608 = vadd.f32 %v322, %v607
    %v609 = vpop.f32.mrb[0].mxu0
    %v610 = vadd.f32 %v318, %v609
    %v611 = vpop.f32.mrb[0].mxu0
    %v612 = vadd.f32 %v322, %v611
    %613 = vmatprep.mubr.bf16.mxu0 0
    %614 = vmatmul.mubr.bf16.gmra.mrb[0].mxu0 %v397
    %v615 = vpop.f32.mrb[0].mxu0
    %v616 = vadd.f32 %v318, %v615
    %v617 = vpop.f32.mrb[0].mxu0
    %v618 = vadd.f32 %v322, %v617
    %v619 = vpop.f32.mrb[0].mxu0
    %v620 = vadd.f32 %v318, %v619
    %v621 = vpop.f32.mrb[0].mxu0
    %v622 = vadd.f32 %v322, %v621
    %623 = vmatprep.mubr.bf16.mxu0 0
    %624 = vmatmul.mubr.bf16.gmra.mrb[0].mxu0 %v398
    %v625 = vpop.f32.mrb[0].mxu0
    %v626 = vadd.f32 %v318, %v625
    %v627 = vpop.f32.mrb[0].mxu0
    %v628 = vadd.f32 %v322, %v627
    %v629 = vpop.f32.mrb[0].mxu0
    %v630 = vadd.f32 %v318, %v629
    %v631 = vpop.f32.mrb[0].mxu0
    %v632 = vadd.f32 %v322, %v631
    %633 = vmatprep.mubr.bf16.mxu0 0
    %634 = vmatmul.mubr.bf16.gmra.mrb[0].mxu0 %v399
    %v635 = vpop.f32.mrb[0].mxu0
    %v636 = vadd.f32 %v318, %v635
    %v637 = vpop.f32.mrb[0].mxu0
    %v638 = vadd.f32 %v322, %v637
    %v639 = vpop.f32.mrb[0].mxu0
    %v640 = vadd.f32 %v318, %v639
    %v641 = vpop.f32.mrb[0].mxu0
    %v642 = vadd.f32 %v322, %v641
    %643 = vmatprep.mubr.bf16.mxu0 0
    %644 = vmatmul.mubr.bf16.gmra.mrb[0].mxu0 %v400
    %v645 = vpop.f32.mrb[0].mxu0
    %v646 = vadd.f32 %v318, %v645
    %v647 = vpop.f32.mrb[0].mxu0
    %v648 = vadd.f32 %v322, %v647
    %v649 = vpop.f32.mrb[0].mxu0
    %v650 = vadd.f32 %v318, %v649
    %v651 = vpop.f32.mrb[0].mxu0
    %v652 = vadd.f32 %v322, %v651
    %653 = vmatprep.mubr.bf16.mxu0 0
    %654 = vmatmul.mubr.bf16.gmra.mrb[0].mxu0 %v401
    %v655 = vpop.f32.mrb[0].mxu0
    %v656 = vadd.f32 %v318, %v655
    %v657 = vpop.f32.mrb[0].mxu0
    %v658 = vadd.f32 %v322, %v657
    %v659 = vpop.f32.mrb[0].mxu0
    %v660 = vadd.f32 %v318, %v659
    %v661 = vpop.f32.mrb[0].mxu0
    %v662 = vadd.f32 %v322, %v661
    %663 = vmatprep.mubr.bf16.mxu0 0
    %664 = vmatmul.mubr.bf16.gmra.mrb[0].mxu0 %v402
    %v665 = vpop.f32.mrb[0].mxu0
    %v666 = vadd.f32 %v318, %v665
    %v667 = vpop.f32.mrb[0].mxu0
    %v668 = vadd.f32 %v322, %v667
    %v669 = vpop.f32.mrb[0].mxu0
    %v670 = vadd.f32 %v318, %v669
    %v671 = vpop.f32.mrb[0].mxu0
    %v672 = vadd.f32 %v322, %v671
    %673 = vmatprep.mubr.bf16.mxu0 0
    %674 = vmatmul.mubr.bf16.gmra.mrb[0].mxu0 %v403
    %v675 = vpop.f32.mrb[0].mxu0
    %v676 = vadd.f32 %v318, %v675
    %v677 = vpop.f32.mrb[0].mxu0
    %v678 = vadd.f32 %v322, %v677
    %v679 = vpop.f32.mrb[0].mxu0
    %v680 = vadd.f32 %v318, %v679
    %v681 = vpop.f32.mrb[0].mxu0
    %v682 = vadd.f32 %v322, %v681
    %683 = vmatprep.mubr.bf16.mxu0 0
    %684 = vmatmul.mubr.bf16.gmra.mrb[0].mxu0 %v404
    %v685 = vpop.f32.mrb[0].mxu0
    %v686 = vadd.f32 %v318, %v685
    %v687 = vpop.f32.mrb[0].mxu0
    %v688 = vadd.f32 %v322, %v687
    %v689 = vpop.f32.mrb[0].mxu0
    %v690 = vadd.f32 %v318, %v689
    %v691 = vpop.f32.mrb[0].mxu0
    %v692 = vadd.f32 %v322, %v691
    %693 = vdwg.mxu0
    %v694 = vpack.c.bf16 %v291, %v291
    %v695 = vpack.c.bf16 %v294, %v294
    %v696 = vpack.c.bf16 %v540, %v536
    %v697 = vpack.c.bf16 %v550, %v546
    %v698 = vpack.c.bf16 %v560, %v556
    %v699 = vpack.c.bf16 %v570, %v566
    %v700 = vpack.c.bf16 %v580, %v576
    %v701 = vpack.c.bf16 %v590, %v586
    %v702 = vpack.c.bf16 %v600, %v596
    %v703 = vpack.c.bf16 %v610, %v606
    %v704 = vpack.c.bf16 %v620, %v616
    %v705 = vpack.c.bf16 %v630, %v626
    %v706 = vpack.c.bf16 %v640, %v636
    %v707 = vpack.c.bf16 %v650, %v646
    %v708 = vpack.c.bf16 %v660, %v656
    %v709 = vpack.c.bf16 %v670, %v666
    %v710 = vpack.c.bf16 %v680, %v676
    %v711 = vpack.c.bf16 %v690, %v686
    %v712 = vpack.c.bf16 %v542, %v538
    %v713 = vpack.c.bf16 %v552, %v548
    %v714 = vpack.c.bf16 %v562, %v558
    %v715 = vpack.c.bf16 %v572, %v568
    %v716 = vpack.c.bf16 %v582, %v578
    %v717 = vpack.c.bf16 %v592, %v588
    %v718 = vpack.c.bf16 %v602, %v598
    %v719 = vpack.c.bf16 %v612, %v608
    %v720 = vpack.c.bf16 %v622, %v618
    %v721 = vpack.c.bf16 %v632, %v628
    %v722 = vpack.c.bf16 %v642, %v638
    %v723 = vpack.c.bf16 %v652, %v648
    %v724 = vpack.c.bf16 %v662, %v658
    %v725 = vpack.c.bf16 %v672, %v668
    %v726 = vpack.c.bf16 %v682, %v678
    %v727 = vpack.c.bf16 %v692, %v688
    %v728 = vlaneseq
    %v729 = vand.u32 %v728, 127
    %vm730 = vcmp.lt.s32.totalorder %v729, 16
    %v731 = vsel %vm730, 0.0, -1e+30
    %732 = vmatprep.subr.bf16.mxu0 0
    %733 = vmatpush1.bf16.xpose.msra.mxu0 %v696
    %734 = vmatprep.subr.bf16.mxu0 0
    %735 = vmatpush1.bf16.xpose.msra.mxu0 %v697
    %736 = vmatprep.subr.bf16.mxu0 0
    %737 = vmatpush1.bf16.xpose.msra.mxu0 %v698
    %738 = vmatprep.subr.bf16.mxu0 0
    %739 = vmatpush1.bf16.xpose.msra.mxu0 %v699
    %740 = vmatprep.subr.bf16.mxu0 0
    %741 = vmatpush1.bf16.xpose.msra.mxu0 %v700
    %742 = vmatprep.subr.bf16.mxu0 0
    %743 = vmatpush1.bf16.xpose.msra.mxu0 %v701
    %744 = vmatprep.subr.bf16.mxu0 0
    %745 = vmatpush1.bf16.xpose.msra.mxu0 %v702
    %746 = vmatprep.subr.bf16.mxu0 0
    %747 = vmatpush1.bf16.xpose.msra.mxu0 %v703
    %748 = vmatprep.subr.bf16.mxu0 0
    %749 = vmatpush1.bf16.xpose.msra.mxu0 0
    %750 = vmatprep.subr.bf16.mxu0 0
    %751 = vmatpush1.bf16.xpose.msra.mxu0 0
    %752 = vmatprep.subr.bf16.mxu0 0
    %753 = vmatpush1.bf16.xpose.msra.mxu0 0
    %754 = vmatprep.subr.bf16.mxu0 0
    %755 = vmatpush1.bf16.xpose.msra.mxu0 0
    %756 = vmatprep.subr.bf16.mxu0 0
    %757 = vmatpush1.bf16.xpose.msra.mxu0 0
    %758 = vmatprep.subr.bf16.mxu0 0
    %759 = vmatpush1.bf16.xpose.msra.mxu0 0
    %760 = vmatprep.subr.bf16.mxu0 0
    %761 = vmatpush1.bf16.xpose.msra.mxu0 0
    %762 = vmatprep.subr.bf16.mxu0 0
    %763 = vmatpush1.bf16.xpose.msra.mxu0 0
    %764 = vmatprep.mubr.bf16.mxu0 0
    %765 = vmatmul.mubr.bf16.gmra.mrb[0].mxu0 %v694
    %v766 = vpop.f32.mrb[0].mxu0
    %v767 = vadd.f32 0.0, %v766
    %v768 = vpop.f32.mrb[0].mxu0
    %v769 = vpop.f32.mrb[0].mxu0
    %v770 = vpop.f32.mrb[0].mxu0
    %771 = vdwg.mxu0
    %772 = vmatprep.subr.bf16.mxu0 0
    %773 = vmatpush1.bf16.xpose.msra.mxu0 %v704
    %774 = vmatprep.subr.bf16.mxu0 0
    %775 = vmatpush1.bf16.xpose.msra.mxu0 %v705
    %776 = vmatprep.subr.bf16.mxu0 0
    %777 = vmatpush1.bf16.xpose.msra.mxu0 %v706
    %778 = vmatprep.subr.bf16.mxu0 0
    %779 = vmatpush1.bf16.xpose.msra.mxu0 %v707
    %780 = vmatprep.subr.bf16.mxu0 0
    %781 = vmatpush1.bf16.xpose.msra.mxu0 %v708
    %782 = vmatprep.subr.bf16.mxu0 0
    %783 = vmatpush1.bf16.xpose.msra.mxu0 %v709
    %784 = vmatprep.subr.bf16.mxu0 0
    %785 = vmatpush1.bf16.xpose.msra.mxu0 %v710
    %786 = vmatprep.subr.bf16.mxu0 0
    %787 = vmatpush1.bf16.xpose.msra.mxu0 %v711
    %788 = vmatprep.subr.bf16.mxu0 0
    %789 = vmatpush1.bf16.xpose.msra.mxu0 0
    %790 = vmatprep.subr.bf16.mxu0 0
    %791 = vmatpush1.bf16.xpose.msra.mxu0 0
    %792 = vmatprep.subr.bf16.mxu0 0
    %793 = vmatpush1.bf16.xpose.msra.mxu0 0
    %794 = vmatprep.subr.bf16.mxu0 0
    %795 = vmatpush1.bf16.xpose.msra.mxu0 0
    %796 = vmatprep.subr.bf16.mxu0 0
    %797 = vmatpush1.bf16.xpose.msra.mxu0 0
    %798 = vmatprep.subr.bf16.mxu0 0
    %799 = vmatpush1.bf16.xpose.msra.mxu0 0
    %800 = vmatprep.subr.bf16.mxu0 0
    %801 = vmatpush1.bf16.xpose.msra.mxu0 0
    %802 = vmatprep.subr.bf16.mxu0 0
    %803 = vmatpush1.bf16.xpose.msra.mxu0 0
    %804 = vmatprep.mubr.bf16.mxu0 0
    %805 = vmatmul.mubr.bf16.gmra.mrb[0].mxu0 %v695
    %v806 = vpop.f32.mrb[0].mxu0
    %v807 = vadd.f32 0.0, %v806
    %v808 = vpop.f32.mrb[0].mxu0
    %v809 = vpop.f32.mrb[0].mxu0
    %v810 = vpop.f32.mrb[0].mxu0
    %811 = vdwg.mxu0
    %v812 = vmul.f32 %v767, 0.17677669
    %v813 = vmul.f32 %v807, 0.17677669
    %v814 = vadd.f32 %v812, %v731
    %v815 = vadd.f32 %v813, %v731
    %816 = vmax.xlane.f32.xlu0 %v814
    %v817 = vpop.xlane.xlu0 %816
    %818 = vmax.xlane.f32.xlu0 %v815
    %v819 = vpop.xlane.xlu0 %818
    %v820 = vsub.f32 %v814, %v817
    %v821 = vsub.f32 %v815, %v819
    %v822 = vmul.f32 %v820, 1.442695
    %v823 = vpow.pop %v822
    %v824 = vmul.f32 %v821, 1.442695
    %v825 = vpow.pop %v824
    %826 = vadd.xlane.f32.xlu0 %v823
    %v827 = vpop.xlane.xlu0 %826
    %828 = vadd.xlane.f32.xlu0 %v825
    %v829 = vpop.xlane.xlu0 %828
    %v830 = vrcp.pop %v827
    %v831 = vrcp.pop %v829
    %v832 = vmul.f32 %v823, %v830
    %v833 = vmul.f32 %v825, %v831
    %v834 = vpack.c.bf16 %v832, %v832
    %v835 = vpack.c.bf16 %v833, %v833
    %836 = vmatprep.subr.bf16.mxu0 0
    %837 = vmatpush1.bf16.msra.mxu0 %v712
    %838 = vmatprep.subr.bf16.mxu0 0
    %839 = vmatpush1.bf16.msra.mxu0 %v713
    %840 = vmatprep.subr.bf16.mxu0 0
    %841 = vmatpush1.bf16.msra.mxu0 %v714
    %842 = vmatprep.subr.bf16.mxu0 0
    %843 = vmatpush1.bf16.msra.mxu0 %v715
    %844 = vmatprep.subr.bf16.mxu0 0
    %845 = vmatpush1.bf16.msra.mxu0 %v716
    %846 = vmatprep.subr.bf16.mxu0 0
    %847 = vmatpush1.bf16.msra.mxu0 %v717
    %848 = vmatprep.subr.bf16.mxu0 0
    %849 = vmatpush1.bf16.msra.mxu0 %v718
    %850 = vmatprep.subr.bf16.mxu0 0
    %851 = vmatpush1.bf16.msra.mxu0 %v719
    %852 = vmatprep.subr.bf16.mxu0 0
    %853 = vmatpush1.bf16.msra.mxu0 0
    %854 = vmatprep.subr.bf16.mxu0 0
    %855 = vmatpush1.bf16.msra.mxu0 0
    %856 = vmatprep.subr.bf16.mxu0 0
    %857 = vmatpush1.bf16.msra.mxu0 0
    %858 = vmatprep.subr.bf16.mxu0 0
    %859 = vmatpush1.bf16.msra.mxu0 0
    %860 = vmatprep.subr.bf16.mxu0 0
    %861 = vmatpush1.bf16.msra.mxu0 0
    %862 = vmatprep.subr.bf16.mxu0 0
    %863 = vmatpush1.bf16.msra.mxu0 0
    %864 = vmatprep.subr.bf16.mxu0 0
    %865 = vmatpush1.bf16.msra.mxu0 0
    %866 = vmatprep.subr.bf16.mxu0 0
    %867 = vmatpush1.bf16.msra.mxu0 0
    %868 = vmatprep.mubr.bf16.mxu0 0
    %869 = vmatmul.mubr.bf16.gmra.mrb[0].mxu0 %v834
    %v870 = vpop.f32.mrb[0].mxu0
    %v871 = vadd.f32 0.0, %v870
    %v872 = vpop.f32.mrb[0].mxu0
    %v873 = vpop.f32.mrb[0].mxu0
    %v874 = vpop.f32.mrb[0].mxu0
    %875 = vdwg.mxu0
    %876 = vmatprep.subr.bf16.mxu0 0
    %877 = vmatpush1.bf16.msra.mxu0 %v720
    %878 = vmatprep.subr.bf16.mxu0 0
    %879 = vmatpush1.bf16.msra.mxu0 %v721
    %880 = vmatprep.subr.bf16.mxu0 0
    %881 = vmatpush1.bf16.msra.mxu0 %v722
    %882 = vmatprep.subr.bf16.mxu0 0
    %883 = vmatpush1.bf16.msra.mxu0 %v723
    %884 = vmatprep.subr.bf16.mxu0 0
    %885 = vmatpush1.bf16.msra.mxu0 %v724
    %886 = vmatprep.subr.bf16.mxu0 0
    %887 = vmatpush1.bf16.msra.mxu0 %v725
    %888 = vmatprep.subr.bf16.mxu0 0
    %889 = vmatpush1.bf16.msra.mxu0 %v726
    %890 = vmatprep.subr.bf16.mxu0 0
    %891 = vmatpush1.bf16.msra.mxu0 %v727
    %892 = vmatprep.subr.bf16.mxu0 0
    %893 = vmatpush1.bf16.msra.mxu0 0
    %894 = vmatprep.subr.bf16.mxu0 0
    %895 = vmatpush1.bf16.msra.mxu0 0
    %896 = vmatprep.subr.bf16.mxu0 0
    %897 = vmatpush1.bf16.msra.mxu0 0
    %898 = vmatprep.subr.bf16.mxu0 0
    %899 = vmatpush1.bf16.msra.mxu0 0
    %900 = vmatprep.subr.bf16.mxu0 0
    %901 = vmatpush1.bf16.msra.mxu0 0
    %902 = vmatprep.subr.bf16.mxu0 0
    %903 = vmatpush1.bf16.msra.mxu0 0
    %904 = vmatprep.subr.bf16.mxu0 0
    %905 = vmatpush1.bf16.msra.mxu0 0
    %906 = vmatprep.subr.bf16.mxu0 0
    %907 = vmatpush1.bf16.msra.mxu0 0
    %908 = vmatprep.mubr.bf16.mxu0 0
    %909 = vmatmul.mubr.bf16.gmra.mrb[0].mxu0 %v835
    %v910 = vpop.f32.mrb[0].mxu0
    %v911 = vadd.f32 0.0, %v910
    %v912 = vpop.f32.mrb[0].mxu0
    %v913 = vpop.f32.mrb[0].mxu0
    %v914 = vpop.f32.mrb[0].mxu0
    %915 = vdwg.mxu0
    %v916 = vpack.c.bf16 %v911, %v871
    %v917 = vld [vmem:[#allocation10] sm:$0xf]
    %v918 = vld [vmem:[#allocation10 + $0x4] sm:$0xf]
    %v919 = vld [vmem:[#allocation10 + $0x8] sm:$0xf]
    %v920 = vld [vmem:[#allocation10 + $0xc] sm:$0xf]
    %v921 = vld [vmem:[#allocation10 + $0x10] sm:$0xf]
    %v922 = vld [vmem:[#allocation10 + $0x14] sm:$0xf]
    %v923 = vld [vmem:[#allocation10 + $0x18] sm:$0xf]
    %v924 = vld [vmem:[#allocation10 + $0x1c] sm:$0xf]
    %v925 = vld [vmem:[#allocation10 + $0x20] sm:$0xf]
    %v926 = vld [vmem:[#allocation10 + $0x24] sm:$0xf]
    %v927 = vld [vmem:[#allocation10 + $0x28] sm:$0xf]
    %v928 = vld [vmem:[#allocation10 + $0x2c] sm:$0xf]
    %v929 = vld [vmem:[#allocation10 + $0x30] sm:$0xf]
    %v930 = vld [vmem:[#allocation10 + $0x34] sm:$0xf]
    %v931 = vld [vmem:[#allocation10 + $0x38] sm:$0xf]
    %v932 = vld [vmem:[#allocation10 + $0x3c] sm:$0xf]
    %v933 = vld [vmem:[%s7] sm:$0x1]
    %v935 = vlaneseq
    %v936 = vshrl.u32 %v935, 7
    %v937 = vsub.s32 0, %v936
    %v938 = vrot.slane %v933, %v937
    %v956 = vunpack.c.l.b16 %v917
    %v957 = vunpack.c.l.b16 %v918
    %v958 = vunpack.c.l.b16 %v919
    %v959 = vunpack.c.l.b16 %v920
    %v960 = vunpack.c.l.b16 %v921
    %v961 = vunpack.c.l.b16 %v922
    %v962 = vunpack.c.l.b16 %v923
    %v963 = vunpack.c.l.b16 %v924
    %v964 = vunpack.c.l.b16 %v925
    %v965 = vunpack.c.l.b16 %v926
    %v966 = vunpack.c.l.b16 %v927
    %v967 = vunpack.c.l.b16 %v928
    %v968 = vunpack.c.l.b16 %v929
    %v969 = vunpack.c.l.b16 %v930
    %v970 = vunpack.c.l.b16 %v931
    %v971 = vunpack.c.l.b16 %v932
    %v972 = vpack.c.b16 %v957, %v956
    %v973 = vpack.c.b16 %v959, %v958
    %v974 = vpack.c.b16 %v961, %v960
    %v975 = vpack.c.b16 %v963, %v962
    %v976 = vpack.c.b16 %v965, %v964
    %v977 = vpack.c.b16 %v967, %v966
    %v978 = vpack.c.b16 %v969, %v968
    %v979 = vpack.c.b16 %v971, %v970
    %988 = vmatprep.subr.bf16.mxu0 0
    %989 = vmatpush1.bf16.msra.mxu0 %v972
    %990 = vmatprep.subr.bf16.mxu0 0
    %991 = vmatpush1.bf16.msra.mxu0 %v973
    %992 = vmatprep.subr.bf16.mxu0 0
    %993 = vmatpush1.bf16.msra.mxu0 %v974
    %994 = vmatprep.subr.bf16.mxu0 0
    %995 = vmatpush1.bf16.msra.mxu0 %v975
    %996 = vmatprep.subr.bf16.mxu0 0
    %997 = vmatpush1.bf16.msra.mxu0 %v976
    %998 = vmatprep.subr.bf16.mxu0 0
    %999 = vmatpush1.bf16.msra.mxu0 %v977
    %1000 = vmatprep.subr.bf16.mxu0 0
    %1001 = vmatpush1.bf16.msra.mxu0 %v978
    %1002 = vmatprep.subr.bf16.mxu0 0
    %1003 = vmatpush1.bf16.msra.mxu0 %v979
    %1004 = vmatprep.subr.bf16.mxu0 0
    %1005 = vmatpush1.bf16.msra.mxu0 0
    %1006 = vmatprep.subr.bf16.mxu0 0
    %1007 = vmatpush1.bf16.msra.mxu0 0
    %1008 = vmatprep.subr.bf16.mxu0 0
    %1009 = vmatpush1.bf16.msra.mxu0 0
    %1010 = vmatprep.subr.bf16.mxu0 0
    %1011 = vmatpush1.bf16.msra.mxu0 0
    %1012 = vmatprep.subr.bf16.mxu0 0
    %1013 = vmatpush1.bf16.msra.mxu0 0
    %1014 = vmatprep.subr.bf16.mxu0 0
    %1015 = vmatpush1.bf16.msra.mxu0 0
    %1016 = vmatprep.subr.bf16.mxu0 0
    %1017 = vmatpush1.bf16.msra.mxu0 0
    %1018 = vmatprep.subr.bf16.mxu0 0
    %1019 = vmatpush1.bf16.msra.mxu0 0
    %1020 = vmatprep.mubr.bf16.mxu0 0
    %1021 = vmatmul.mubr.bf16.gmra.mrb[0].mxu0 %v916
    %v1022 = vpop.f32.mrb[0].mxu0
    %v1023 = vadd.f32 %v938, %v1022
    %v1024 = vpop.f32.mrb[0].mxu0
    %v1025 = vpop.f32.mrb[0].mxu0
    %v1026 = vadd.f32 %v938, %v1025
    %v1027 = vpop.f32.mrb[0].mxu0
    %1028 = vdwg.mxu0
    %vm1029 = vcmp.lt.s32.totalorder %v729, 32
    %v1030 = vsel %vm1029, 1, 0
    %v1031 = vcvt.s32.f32 %v1030
    %v1032 = vadd.f32 %v1023, %v150
    %v1033 = vadd.f32 %v1026, %v151
    %v1034 = vld [vmem:[%s8] sm:$0x1]
    %v1035 = vld [vmem:[%s9] sm:$0x1]
    %1036 = vadd.xlane.f32.xlu0 %v1032
    %v1037 = vpop.xlane.xlu0 %1036
    %1038 = vadd.xlane.f32.xlu0 %v1033
    %v1039 = vpop.xlane.xlu0 %1038
    %v1040 = vmul.f32 %v1037, 0.03125
    %v1041 = vmul.f32 %v1039, 0.03125
    %v1042 = vsub.f32 %v1032, %v1040
    %v1043 = vsub.f32 %v1033, %v1041
    %v1044 = vmul.f32 %v1042, %v1031
    %v1045 = vmul.f32 %v1043, %v1031
    %v1046 = vmul.f32 %v1044, %v1044
    %v1047 = vmul.f32 %v1045, %v1045
    %1048 = vadd.xlane.f32.xlu0 %v1046
    %v1049 = vpop.xlane.xlu0 %1048
    %1050 = vadd.xlane.f32.xlu0 %v1047
    %v1051 = vpop.xlane.xlu0 %1050
    %v1052 = vmul.f32 %v1049, 0.03125
    %v1053 = vmul.f32 %v1051, 0.03125
    %v1054 = vadd.f32 %v1052, 1e-05
    %v1055 = vadd.f32 %v1053, 1e-05
    %v1056 = vrsqrt.pop %v1054
    %v1057 = vrsqrt.pop %v1055
    %v1058 = vmul.f32 %v1044, %v1056
    %v1059 = vmul.f32 %v1045, %v1057
    %v1061 = vlaneseq
    %v1062 = vshrl.u32 %v1061, 7
    %v1063 = vsub.s32 0, %v1062
    %v1064 = vrot.slane %v1034, %v1063
    %v1066 = vmul.f32 %v1058, %v1064
    %v1067 = vmul.f32 %v1059, %v1064
    %v1069 = vlaneseq
    %v1070 = vshrl.u32 %v1069, 7
    %v1071 = vsub.s32 0, %v1070
    %v1072 = vrot.slane %v1035, %v1071
    %v1074 = vadd.f32 %v1066, %v1072
    %v1075 = vadd.f32 %v1067, %v1072
    %v1076 = vpack.c.bf16 %v1075, %v1074
    %v1077 = vld [vmem:[#allocation11] sm:$0xf]
    %v1078 = vld [vmem:[#allocation11 + $0x4] sm:$0xf]
    %v1079 = vld [vmem:[#allocation11 + $0x8] sm:$0xf]
    %v1080 = vld [vmem:[#allocation11 + $0xc] sm:$0xf]
    %v1081 = vld [vmem:[#allocation11 + $0x10] sm:$0xf]
    %v1082 = vld [vmem:[#allocation11 + $0x14] sm:$0xf]
    %v1083 = vld [vmem:[#allocation11 + $0x18] sm:$0xf]
    %v1084 = vld [vmem:[#allocation11 + $0x1c] sm:$0xf]
    %v1085 = vld [vmem:[#allocation11 + $0x20] sm:$0xf]
    %v1086 = vld [vmem:[#allocation11 + $0x24] sm:$0xf]
    %v1087 = vld [vmem:[#allocation11 + $0x28] sm:$0xf]
    %v1088 = vld [vmem:[#allocation11 + $0x2c] sm:$0xf]
    %v1089 = vld [vmem:[#allocation11 + $0x30] sm:$0xf]
    %v1090 = vld [vmem:[#allocation11 + $0x34] sm:$0xf]
    %v1091 = vld [vmem:[#allocation11 + $0x38] sm:$0xf]
    %v1092 = vld [vmem:[#allocation11 + $0x3c] sm:$0xf]
    %v1093 = vld [vmem:[%s11] sm:$0x1]
    %v1095 = vlaneseq
    %v1096 = vshrl.u32 %v1095, 7
    %v1097 = vsub.s32 0, %v1096
    %v1098 = vrot.slane %v1093, %v1097
    %v1116 = vunpack.c.l.b16 %v1077
    %v1117 = vunpack.c.l.b16 %v1078
    %v1118 = vunpack.c.l.b16 %v1079
    %v1119 = vunpack.c.l.b16 %v1080
    %v1120 = vunpack.c.l.b16 %v1081
    %v1121 = vunpack.c.l.b16 %v1082
    %v1122 = vunpack.c.l.b16 %v1083
    %v1123 = vunpack.c.l.b16 %v1084
    %v1124 = vunpack.c.l.b16 %v1085
    %v1125 = vunpack.c.l.b16 %v1086
    %v1126 = vunpack.c.l.b16 %v1087
    %v1127 = vunpack.c.l.b16 %v1088
    %v1128 = vunpack.c.l.b16 %v1089
    %v1129 = vunpack.c.l.b16 %v1090
    %v1130 = vunpack.c.l.b16 %v1091
    %v1131 = vunpack.c.l.b16 %v1092
    %v1132 = vpack.c.b16 %v1117, %v1116
    %v1133 = vpack.c.b16 %v1119, %v1118
    %v1134 = vpack.c.b16 %v1121, %v1120
    %v1135 = vpack.c.b16 %v1123, %v1122
    %v1136 = vpack.c.b16 %v1125, %v1124
    %v1137 = vpack.c.b16 %v1127, %v1126
    %v1138 = vpack.c.b16 %v1129, %v1128
    %v1139 = vpack.c.b16 %v1131, %v1130
    %1148 = vmatprep.subr.bf16.mxu0 0
    %1149 = vmatpush1.bf16.msra.mxu0 %v1132
    %1150 = vmatprep.subr.bf16.mxu0 0
    %1151 = vmatpush1.bf16.msra.mxu0 %v1133
    %1152 = vmatprep.subr.bf16.mxu0 0
    %1153 = vmatpush1.bf16.msra.mxu0 %v1134
    %1154 = vmatprep.subr.bf16.mxu0 0
    %1155 = vmatpush1.bf16.msra.mxu0 %v1135
    %1156 = vmatprep.subr.bf16.mxu0 0
    %1157 = vmatpush1.bf16.msra.mxu0 %v1136
    %1158 = vmatprep.subr.bf16.mxu0 0
    %1159 = vmatpush1.bf16.msra.mxu0 %v1137
    %1160 = vmatprep.subr.bf16.mxu0 0
    %1161 = vmatpush1.bf16.msra.mxu0 %v1138
    %1162 = vmatprep.subr.bf16.mxu0 0
    %1163 = vmatpush1.bf16.msra.mxu0 %v1139
    %1164 = vmatprep.subr.bf16.mxu0 0
    %1165 = vmatpush1.bf16.msra.mxu0 0
    %1166 = vmatprep.subr.bf16.mxu0 0
    %1167 = vmatpush1.bf16.msra.mxu0 0
    %1168 = vmatprep.subr.bf16.mxu0 0
    %1169 = vmatpush1.bf16.msra.mxu0 0
    %1170 = vmatprep.subr.bf16.mxu0 0
    %1171 = vmatpush1.bf16.msra.mxu0 0
    %1172 = vmatprep.subr.bf16.mxu0 0
    %1173 = vmatpush1.bf16.msra.mxu0 0
    %1174 = vmatprep.subr.bf16.mxu0 0
    %1175 = vmatpush1.bf16.msra.mxu0 0
    %1176 = vmatprep.subr.bf16.mxu0 0
    %1177 = vmatpush1.bf16.msra.mxu0 0
    %1178 = vmatprep.subr.bf16.mxu0 0
    %1179 = vmatpush1.bf16.msra.mxu0 0
    %1180 = vmatprep.mubr.bf16.mxu0 0
    %1181 = vmatmul.mubr.bf16.gmra.mrb[0].mxu0 %v1076
    %v1182 = vpop.f32.mrb[0].mxu0
    %v1183 = vadd.f32 %v1098, %v1182
    %v1184 = vpop.f32.mrb[0].mxu0
    %v1185 = vpop.f32.mrb[0].mxu0
    %v1186 = vadd.f32 %v1098, %v1185
    %v1187 = vpop.f32.mrb[0].mxu0
    %1188 = vdwg.mxu0
    %v1189 = vmax.f32 %v1183, 0.0
    %v1190 = vmax.f32 %v1186, 0.0
    %v1191 = vpack.c.bf16 %v1190, %v1189
    %v1192 = vld [vmem:[#allocation13] sm:$0xf]
    %v1193 = vld [vmem:[#allocation13 + $0x4] sm:$0xf]
    %v1194 = vld [vmem:[#allocation13 + $0x8] sm:$0xf]
    %v1195 = vld [vmem:[#allocation13 + $0xc] sm:$0xf]
    %v1196 = vld [vmem:[#allocation13 + $0x10] sm:$0xf]
    %v1197 = vld [vmem:[#allocation13 + $0x14] sm:$0xf]
    %v1198 = vld [vmem:[#allocation13 + $0x18] sm:$0xf]
    %v1199 = vld [vmem:[#allocation13 + $0x1c] sm:$0xf]
    %v1200 = vld [vmem:[#allocation13 + $0x20] sm:$0xf]
    %v1201 = vld [vmem:[#allocation13 + $0x24] sm:$0xf]
    %v1202 = vld [vmem:[#allocation13 + $0x28] sm:$0xf]
    %v1203 = vld [vmem:[#allocation13 + $0x2c] sm:$0xf]
    %v1204 = vld [vmem:[#allocation13 + $0x30] sm:$0xf]
    %v1205 = vld [vmem:[#allocation13 + $0x34] sm:$0xf]
    %v1206 = vld [vmem:[#allocation13 + $0x38] sm:$0xf]
    %v1207 = vld [vmem:[#allocation13 + $0x3c] sm:$0xf]
    %v1208 = vld [vmem:[%s13] sm:$0x1]
    %v1210 = vlaneseq
    %v1211 = vshrl.u32 %v1210, 7
    %v1212 = vsub.s32 0, %v1211
    %v1213 = vrot.slane %v1208, %v1212
    %v1231 = vunpack.c.l.b16 %v1192
    %v1232 = vunpack.c.l.b16 %v1193
    %v1233 = vunpack.c.l.b16 %v1194
    %v1234 = vunpack.c.l.b16 %v1195
    %v1235 = vunpack.c.l.b16 %v1196
    %v1236 = vunpack.c.l.b16 %v1197
    %v1237 = vunpack.c.l.b16 %v1198
    %v1238 = vunpack.c.l.b16 %v1199
    %v1239 = vunpack.c.l.b16 %v1200
    %v1240 = vunpack.c.l.b16 %v1201
    %v1241 = vunpack.c.l.b16 %v1202
    %v1242 = vunpack.c.l.b16 %v1203
    %v1243 = vunpack.c.l.b16 %v1204
    %v1244 = vunpack.c.l.b16 %v1205
    %v1245 = vunpack.c.l.b16 %v1206
    %v1246 = vunpack.c.l.b16 %v1207
    %v1247 = vpack.c.b16 %v1232, %v1231
    %v1248 = vpack.c.b16 %v1234, %v1233
    %v1249 = vpack.c.b16 %v1236, %v1235
    %v1250 = vpack.c.b16 %v1238, %v1237
    %v1251 = vpack.c.b16 %v1240, %v1239
    %v1252 = vpack.c.b16 %v1242, %v1241
    %v1253 = vpack.c.b16 %v1244, %v1243
    %v1254 = vpack.c.b16 %v1246, %v1245
    %1263 = vmatprep.subr.bf16.mxu0 0
    %1264 = vmatpush1.bf16.msra.mxu0 %v1247
    %1265 = vmatprep.subr.bf16.mxu0 0
    %1266 = vmatpush1.bf16.msra.mxu0 %v1248
    %1267 = vmatprep.subr.bf16.mxu0 0
    %1268 = vmatpush1.bf16.msra.mxu0 %v1249
    %1269 = vmatprep.subr.bf16.mxu0 0
    %1270 = vmatpush1.bf16.msra.mxu0 %v1250
    %1271 = vmatprep.subr.bf16.mxu0 0
    %1272 = vmatpush1.bf16.msra.mxu0 %v1251
    %1273 = vmatprep.subr.bf16.mxu0 0
    %1274 = vmatpush1.bf16.msra.mxu0 %v1252
    %1275 = vmatprep.subr.bf16.mxu0 0
    %1276 = vmatpush1.bf16.msra.mxu0 %v1253
    %1277 = vmatprep.subr.bf16.mxu0 0
    %1278 = vmatpush1.bf16.msra.mxu0 %v1254
    %1279 = vmatprep.subr.bf16.mxu0 0
    %1280 = vmatpush1.bf16.msra.mxu0 0
    %1281 = vmatprep.subr.bf16.mxu0 0
    %1282 = vmatpush1.bf16.msra.mxu0 0
    %1283 = vmatprep.subr.bf16.mxu0 0
    %1284 = vmatpush1.bf16.msra.mxu0 0
    %1285 = vmatprep.subr.bf16.mxu0 0
    %1286 = vmatpush1.bf16.msra.mxu0 0
    %1287 = vmatprep.subr.bf16.mxu0 0
    %1288 = vmatpush1.bf16.msra.mxu0 0
    %1289 = vmatprep.subr.bf16.mxu0 0
    %1290 = vmatpush1.bf16.msra.mxu0 0
    %1291 = vmatprep.subr.bf16.mxu0 0
    %1292 = vmatpush1.bf16.msra.mxu0 0
    %1293 = vmatprep.subr.bf16.mxu0 0
    %1294 = vmatpush1.bf16.msra.mxu0 0
    %1295 = vmatprep.mubr.bf16.mxu0 0
    %1296 = vmatmul.mubr.bf16.gmra.mrb[0].mxu0 %v1191
    %v1297 = vpop.f32.mrb[0].mxu0
    %v1298 = vadd.f32 %v1213, %v1297
    %v1299 = vpop.f32.mrb[0].mxu0
    %v1300 = vpop.f32.mrb[0].mxu0
    %v1301 = vadd.f32 %v1213, %v1300
    %v1302 = vpop.f32.mrb[0].mxu0
    %1303 = vdwg.mxu0
    %v1304 = vadd.f32 %v1298, %v1074
    %v1305 = vadd.f32 %v1301, %v1075
    %v1306 = vld [vmem:[%s14] sm:$0x1]
    %v1307 = vld [vmem:[%s15] sm:$0x1]
    %1308 = vadd.xlane.f32.xlu0 %v1304
    %v1309 = vpop.xlane.xlu0 %1308
    %1310 = vadd.xlane.f32.xlu0 %v1305
    %v1311 = vpop.xlane.xlu0 %1310
    %v1312 = vmul.f32 %v1309, 0.03125
    %v1313 = vmul.f32 %v1311, 0.03125
    %v1314 = vsub.f32 %v1304, %v1312
    %v1315 = vsub.f32 %v1305, %v1313
    %v1316 = vmul.f32 %v1314, %v1031
    %v1317 = vmul.f32 %v1315, %v1031
    %v1318 = vmul.f32 %v1316, %v1316
    %v1319 = vmul.f32 %v1317, %v1317
    %1320 = vadd.xlane.f32.xlu0 %v1318
    %v1321 = vpop.xlane.xlu0 %1320
    %1322 = vadd.xlane.f32.xlu0 %v1319
    %v1323 = vpop.xlane.xlu0 %1322
    %v1324 = vmul.f32 %v1321, 0.03125
    %v1325 = vmul.f32 %v1323, 0.03125
    %v1326 = vadd.f32 %v1324, 1e-05
    %v1327 = vadd.f32 %v1325, 1e-05
    %v1328 = vrsqrt.pop %v1326
    %v1329 = vrsqrt.pop %v1327
    %v1330 = vmul.f32 %v1316, %v1328
    %v1331 = vmul.f32 %v1317, %v1329
    %v1333 = vlaneseq
    %v1334 = vshrl.u32 %v1333, 7
    %v1335 = vsub.s32 0, %v1334
    %v1336 = vrot.slane %v1306, %v1335
    %v1338 = vmul.f32 %v1330, %v1336
    %v1339 = vmul.f32 %v1331, %v1336
    %v1341 = vlaneseq
    %v1342 = vshrl.u32 %v1341, 7
    %v1343 = vsub.s32 0, %v1342
    %v1344 = vrot.slane %v1307, %v1343
    %v1346 = vadd.f32 %v1338, %v1344
    %v1347 = vadd.f32 %v1339, %v1344
    %1348 = vst [vmem:[#allocation14] sm:$0xff] %v1346
    %1349 = vst [vmem:[#allocation14 + $0x8] sm:$0xff] %v1347
    // Predicated region
    $region94: #{tpu_custom_call.1} parent=1 // pred_check
      _
    $region95: #{tpu_custom_call.1} parent=1 // pred_check_branch
      %1351 = sbr.rel (0) target = $region97
    $region96: #{tpu_custom_call.1} parent=1 // pred_region
      %s1353 = ssub.s32 256, 256
      %1354 = vsyncadd [#allocation4], %s1353
      %s1355 = sshll.u32 [#allocation14], 4
      %s1356 = int_to_ptr.vmem [resolvable:$true] %s1355
      %1361 = dma.vmem_to_hbm [thread:$0]  %s1356, 256, %s16, [#allocation4], 128, 128, 8
    $region97: #{tpu_custom_call.1} parent=1 // pred_fallthru
      _
    // Predicated region
    $region98: #{tpu_custom_call.1} parent=1 // pred_check
      _
    $region99: #{tpu_custom_call.1} parent=1 // pred_check_branch
      %1363 = sbr.rel (0) target = $region101
    $region100: #{tpu_custom_call.1} parent=1 // pred_region
      %1364 = dma.done [#allocation4], 256
    $region101: #{tpu_custom_call.1} parent=1 // pred_fallthru
      _
    %1365 = vsyncpa [#allocation3], 1
    %1366 = vsyncpa [#allocation6], 1
    %1367 = vsyncpa [#allocation9], 1
    %1368 = vsyncpa [#allocation12], 1
    %1369 = vsyncpa [#allocation4], 1

</llo_original>
